<compile_context>
chip_gen: v5e
topology: v5e:2x2
jax: 0.10.0
libtpu: 0.0.40
codegen_flags: <defaults>
</compile_context>

<pallas_src>
import jax
import jax.numpy as jnp
from jax.experimental import pallas as pl
from jax.experimental.pallas import tpu as pltpu


# ----------------------------------------------------------------------------
# Per-generation sizing
# ----------------------------------------------------------------------------
def _vmem_budget():
    """Returns (vmem_limit_bytes, max_output_rows_per_tile)."""
    try:
        cap = getattr(pltpu.get_tpu_info(), "vmem_capacity_bytes", 64 << 20)
    except Exception:
        cap = 64 << 20
    if cap >= (100 << 20):          # v5e / v6e: 128 MiB physical VMEM
        return 80 << 20, 4096
    return 32 << 20, 2048           # v7x: 64 MiB per TensorCore -> conservative


def _pick_tile_h(h, w, max_rows, require_even=False):
    """Output rows per grid step: biggest divisor of h with th*w <= max_rows,
    preferring >= 2 tiles per image so the pipeline / megacore axis has work."""
    cap = max(1, max_rows // max(w, 1))

    def _divs(limit):
        return [d for d in range(1, h + 1)
                if h % d == 0 and d <= limit and (not require_even or d % 2 == 0)]

    divs = _divs(cap)
    if not divs:
        divs = _divs(h)
    if not divs:
        return h
    th = max(divs)
    if th == h and h >= 8:
        smaller = [d for d in divs if d <= h // 2]
        if smaller:
            th = max(smaller)
    return th


# ----------------------------------------------------------------------------
# Pallas kernels
# ----------------------------------------------------------------------------
def _conv3x3_compute(x_ref, top_ref, bot_ref, w_ref, b_ref):
    """x_ref:  (1, TH, W, Cin)  bf16  body rows of the tile
       top_ref/bot_ref: (1, 1, W, Cin) bf16 halo rows (clamped; zeroed at edges)
       w_ref:  (9*Cin, Cout)    bf16  taps flattened (ky, kx, cin) along K
       b_ref:  (1, Cout)        f32
       returns y: (TH, W, Cout) f32 after bias + ReLU."""
    _, th, ow, cin = x_ref.shape
    cout = w_ref.shape[-1]
    t = pl.program_id(1)
    nt = pl.num_programs(1)

    top = top_ref[0]                                            # (1, W, Cin)
    bot = bot_ref[0]
    top = jnp.where(t == 0, jnp.zeros_like(top), top)           # zero pad rows
    bot = jnp.where(t == nt - 1, jnp.zeros_like(bot), bot)

    xh = jnp.concatenate([top, x_ref[0], bot], axis=0)          # (TH+2, W, Cin)
    zc = jnp.zeros((th + 2, 1, cin), xh.dtype)
    xp = jnp.concatenate([zc, xh, zc], axis=1)                  # (TH+2, W+2, Cin)

    # Merge all 9 taps along K -> one MXU dot, no accumulator RMW passes.
    taps = [xp[dy:dy + th, dx:dx + ow, :].reshape(th * ow, cin)
            for dy in range(3) for dx in range(3)]
    cat = jnp.concatenate(taps, axis=-1)                        # (TH*W, 9*Cin)

    y = jnp.dot(cat, w_ref[...], preferred_element_type=jnp.float32)
    y = jnp.maximum(y + b_ref[...], 0.0)                        # f32 epilogue
    return y.reshape(th, ow, cout)


def _conv3x3_kernel(x_ref, top_ref, bot_ref, w_ref, b_ref, o_ref):
    y = _conv3x3_compute(x_ref, top_ref, bot_ref, w_ref, b_ref)
    # TODO(synk): Cout=64 layers store at half lane width; a lane-dense
    # (W*Cout) output layout would further cut vst cost.
    o_ref[0] = y.astype(o_ref.dtype)


def _conv3x3_pool_kernel(x_ref, top_ref, bot_ref, w_ref, b_ref, o_ref, po_ref):
    """Same as above, plus a fused 2x2 maxpool emitted as a second output."""
    y = _conv3x3_compute(x_ref, top_ref, bot_ref, w_ref, b_ref)
    o_ref[0] = y.astype(o_ref.dtype)
    th, ow, c = y.shape
    y4 = y.reshape(th // 2, 2, ow, c)
    a = jnp.maximum(y4[:, 0], y4[:, 1])                         # max over rows
    a2 = a.reshape(th // 2, ow // 2, 2, c)
    pooled = jnp.maximum(a2[:, :, 0], a2[:, :, 1])              # max over cols
    po_ref[0] = pooled.astype(po_ref.dtype)


def _matmul_bias_relu_kernel(x_ref, w_ref, b_ref, o_ref):
    """Pointwise (already-im2col'd) conv: x_ref (1, TH, W, K) bf16,
       w_ref (K, Cout) bf16, b_ref (1, Cout) f32, o_ref (1, TH, W, Cout)."""
    _, th, ow, k = x_ref.shape
    cout = w_ref.shape[-1]
    y = jnp.dot(x_ref[0].reshape(th * ow, k), w_ref[...],
                preferred_element_type=jnp.float32)
    y = jnp.maximum(y + b_ref[...], 0.0)
    o_ref[0] = y.reshape(th, ow, cout).astype(o_ref.dtype)


# ----------------------------------------------------------------------------
# Wrappers
# ----------------------------------------------------------------------------
def conv3x3_relu(x_nhwc, w_oihw, b, *, out_dtype=jnp.bfloat16, fuse_pool=False):
    """3x3 conv, stride 1, pad 1, + bias + ReLU (optionally + fused 2x2 pool).

    Consumes the activation straight from HBM (expects/accepts bf16) — no
    wrapper-side pad / stack / cast passes.  Halo rows come from two extra
    1-row BlockSpecs on the same array with clamped element-row index_maps.
    """
    N, H, W, Cin = x_nhwc.shape
    Cout = w_oihw.shape[0]
    vmem_limit, max_rows = _vmem_budget()
    th = _pick_tile_h(H, W, max_rows, require_even=fuse_pool)
    num_t = H // th

    x = x_nhwc.astype(jnp.bfloat16)          # no-op for bf16 producers
    # torch (Cout, Cin, ky, kx) -> (ky, kx, Cin, Cout) -> (9*Cin, Cout)
    wk = jnp.transpose(w_oihw, (2, 3, 1, 0)).reshape(9 * Cin, Cout)
    wk = wk.astype(jnp.bfloat16)
    b2 = b.reshape(1, Cout).astype(jnp.float32)

    in_specs = [
        pl.BlockSpec((1, th, W, Cin), lambda n, t: (n, t, 0, 0)),
        pl.BlockSpec((1, 1, W, Cin),                       # top halo row
                     lambda n, t: (n, jnp.maximum(t * th - 1, 0), 0, 0)),
        pl.BlockSpec((1, 1, W, Cin),                       # bottom halo row
                     lambda n, t: (n, jnp.minimum(t * th + th, H - 1), 0, 0)),
        pl.BlockSpec((9 * Cin, Cout), lambda n, t: (0, 0)),    # resident
        pl.BlockSpec((1, Cout), lambda n, t: (0, 0)),          # resident
    ]
    cparams = pltpu.CompilerParams(
        dimension_semantics=("parallel", "parallel"),
        vmem_limit_bytes=vmem_limit)

    if fuse_pool:
        assert H % 2 == 0 and W % 2 == 0 and th % 2 == 0, (H, W, th)
        out_shape = (jax.ShapeDtypeStruct((N, H, W, Cout), out_dtype),
                     jax.ShapeDtypeStruct((N, H // 2, W // 2, Cout),
                                          jnp.bfloat16))
        out_specs = (
            pl.BlockSpec((1, th, W, Cout), lambda n, t: (n, t, 0, 0)),
            pl.BlockSpec((1, th // 2, W // 2, Cout), lambda n, t: (n, t, 0, 0)))
        kernel = _conv3x3_pool_kernel
    else:
        out_shape = jax.ShapeDtypeStruct((N, H, W, Cout), out_dtype)
        out_specs = pl.BlockSpec((1, th, W, Cout), lambda n, t: (n, t, 0, 0))
        kernel = _conv3x3_kernel

    return pl.pallas_call(
        kernel,
        out_shape=out_shape,
        grid=(N, num_t),
        in_specs=in_specs,
        out_specs=out_specs,
        compiler_params=cparams,
    )(x, x, x, wk, b2)


def conv3x3_relu_small_cin(x_nhwc, w_oihw, b, *, out_dtype=jnp.bfloat16):
    """First VGG conv (Cin=3): im2col to K=27 (tiny tensor) so each tile is a
    single dense MXU matmul instead of 9 K=3 dots on 3-lane operands."""
    N, H, W, Cin = x_nhwc.shape
    Cout = w_oihw.shape[0]
    K = 9 * Cin
    vmem_limit, max_rows = _vmem_budget()
    th = _pick_tile_h(H, W, max_rows)
    num_t = H // th

    xp = jnp.pad(x_nhwc, ((0, 0), (1, 1), (1, 1), (0, 0)))
    cols = jnp.concatenate(
        [xp[:, dy:dy + H, dx:dx + W, :] for dy in range(3) for dx in range(3)],
        axis=-1).astype(jnp.bfloat16)                       # (N, H, W, 27)

    wk = jnp.transpose(w_oihw, (2, 3, 1, 0)).reshape(K, Cout).astype(jnp.bfloat16)
    b2 = b.reshape(1, Cout).astype(jnp.float32)

    return pl.pallas_call(
        _matmul_bias_relu_kernel,
        out_shape=jax.ShapeDtypeStruct((N, H, W, Cout), out_dtype),
        grid=(N, num_t),
        in_specs=[pl.BlockSpec((1, th, W, K), lambda n, t: (n, t, 0, 0)),
                  pl.BlockSpec((K, Cout), lambda n, t: (0, 0)),
                  pl.BlockSpec((1, Cout), lambda n, t: (0, 0))],
        out_specs=pl.BlockSpec((1, th, W, Cout), lambda n, t: (n, t, 0, 0)),
        compiler_params=pltpu.CompilerParams(
            dimension_semantics=("parallel", "parallel"),
            vmem_limit_bytes=vmem_limit),
    )(cols, wk, b2)


# ----------------------------------------------------------------------------
# Parameters (VGG16 features[0..15] conv shapes), deterministic synthetic init
# ----------------------------------------------------------------------------
_VGG_CONV_CFG = [
    (3, 64), (64, 64),                    # to_relu_1_2 : features 0..3
    (64, 128), (128, 128),                # to_relu_2_2 : features 4..8
    (128, 256), (256, 256), (256, 256),   # to_relu_3_3 : features 9..15
]


def init_vgg16_params(key):
    # TODO(synk): reference loads torchvision pretrained weights; here we use
    # deterministic random weights of the same shapes (no checkpoint I/O).
    params = []
    for i, (cin, cout) in enumerate(_VGG_CONV_CFG):
        kw, kb = jax.random.split(jax.random.fold_in(key, i))
        scale = 0.5 * (2.0 / (cin * 9)) ** 0.5
        w = jax.random.normal(kw, (cout, cin, 3, 3), jnp.float32) * scale
        b = jax.random.normal(kb, (cout,), jnp.float32) * 0.01
        params.append((w, b))
    return params


# ----------------------------------------------------------------------------
# Vgg16.forward
# ----------------------------------------------------------------------------
def vgg16_forward(x_nchw, params):
    """Mirrors Vgg16.forward: returns (h_relu_1_2, h_relu_2_2) in NCHW."""
    x = jnp.transpose(x_nchw, (0, 2, 3, 1)).astype(jnp.float32)  # NCHW -> NHWC

    # to_relu_1_2: conv1_1 + ReLU, conv1_2 + ReLU
    h = conv3x3_relu_small_cin(x, *params[0], out_dtype=jnp.bfloat16)
    h_relu_1_2, h_pool = conv3x3_relu(h, *params[1],
                                      out_dtype=jnp.float32, fuse_pool=True)

    # to_relu_2_2: maxpool (fused into conv1_2 above), conv2_1, conv2_2
    h = conv3x3_relu(h_pool, *params[2], out_dtype=jnp.bfloat16)
    h_relu_2_2 = conv3x3_relu(h, *params[3], out_dtype=jnp.float32)

    # TODO(synk): the reference also runs to_relu_3_3 (features[9:16]) and
    # discards the result; omitted here (does not affect the returned outputs,
    # and XLA would DCE it under jit anyway).

    return (jnp.transpose(h_relu_1_2, (0, 3, 1, 2)),   # NHWC -> NCHW
            jnp.transpose(h_relu_2_2, (0, 3, 1, 2)))


# ----------------------------------------------------------------------------
# Pure-JAX reference (same bf16-operand / f32-accum arithmetic & same bf16
# intermediate-activation rounding points as the kernels)
# ----------------------------------------------------------------------------
def _conv_ref(x_nhwc, w_oihw, b):
    y = jax.lax.conv_general_dilated(
        x_nhwc.astype(jnp.bfloat16),
        jnp.transpose(w_oihw, (2, 3, 1, 0)).astype(jnp.bfloat16),
        window_strides=(1, 1),
        padding=((1, 1), (1, 1)),
        dimension_numbers=("NHWC", "HWIO", "NHWC"),
        preferred_element_type=jnp.float32)
    return jnp.maximum(y + b, 0.0)


def _pool_ref(x_nhwc):
    return jax.lax.reduce_window(
        x_nhwc, -jnp.inf, jax.lax.max, (1, 2, 2, 1), (1, 2, 2, 1), "VALID")


def vgg16_forward_ref(x_nchw, params):
    x = jnp.transpose(x_nchw, (0, 2, 3, 1)).astype(jnp.float32)
    h = _conv_ref(x, *params[0]).astype(jnp.bfloat16)      # conv1_1 (bf16 out)
    r12 = _conv_ref(h, *params[1])                         # conv1_2 (f32, returned)
    hp = _pool_ref(r12).astype(jnp.bfloat16)               # fused pool path
    h = _conv_ref(hp, *params[2]).astype(jnp.bfloat16)     # conv2_1 (bf16 out)
    r22 = _conv_ref(h, *params[3])                         # conv2_2 (f32, returned)
    return (jnp.transpose(r12, (0, 3, 1, 2)), jnp.transpose(r22, (0, 3, 1, 2)))


# ----------------------------------------------------------------------------
if __name__ == "__main__":
    key = jax.random.PRNGKey(0)
    k_x, k_p = jax.random.split(key)

    # Small input consistent with the module: NCHW, 3 input channels.
    x = jax.random.normal(k_x, (2, 3, 16, 16), jnp.float32)
    params = init_vgg16_params(k_p)

    fwd = jax.jit(vgg16_forward)
    h12, h22 = fwd(x, params)
    h12 = jax.block_until_ready(h12)
    h22 = jax.block_until_ready(h22)

    assert h12.shape == (2, 64, 16, 16), h12.shape
    assert h22.shape == (2, 128, 8, 8), h22.shape
    assert bool(jnp.all(jnp.isfinite(h12))) and bool(jnp.all(jnp.isfinite(h22)))

    # Numerical check against an XLA reference using the same bf16-operand /
    # f32-accumulation arithmetic and the same bf16 intermediate rounding
    # points; remaining differences are accumulation-order noise.
    r12, r22 = jax.jit(vgg16_forward_ref)(x, params)
    for got, ref in ((h12, r12), (h22, r22)):
        err = float(jnp.max(jnp.abs(got - ref)))
        scale = float(jnp.max(jnp.abs(ref))) + 1e-6
        assert err / scale < 2e-2, (err, scale)

    print("KERNEL_OK")
</pallas_src>

<mosaic_0001>
module attributes {stable_mosaic.version = 11 : i64} {
  func.func @_conv3x3_pool_kernel(%arg0: i32, %arg1: i32, %arg2: memref<1x8x16x64xbf16, #tpu.memory_space<vmem>>, %arg3: memref<1x1x16x64xbf16, #tpu.memory_space<vmem>>, %arg4: memref<1x1x16x64xbf16, #tpu.memory_space<vmem>>, %arg5: memref<576x64xbf16, #tpu.memory_space<vmem>>, %arg6: memref<1x64xf32, #tpu.memory_space<vmem>>, %arg7: memref<1x8x16x64xf32, #tpu.memory_space<vmem>>, %arg8: memref<1x4x8x64xbf16, #tpu.memory_space<vmem>>) attributes {dimension_semantics = [#tpu.dimension_semantics<parallel>, #tpu.dimension_semantics<parallel>], iteration_bounds = array<i64: 2, 2>, scalar_prefetch = 0 : i64, scratch_operands = 0 : i64, tpu.core_type = #tpu.core_type<tc>, window_params = [{transform_indices = @transform_0, window_bounds = array<i64: 1, 8, 16, 64>}, {transform_indices = @transform_1, window_bounds = array<i64: 1, 1, 16, 64>}, {transform_indices = @transform_2, window_bounds = array<i64: 1, 1, 16, 64>}, {pipeline_mode = #tpu.pipeline_mode<synchronous>, transform_indices = @transform_3, window_bounds = array<i64: 576, 64>}, {pipeline_mode = #tpu.pipeline_mode<synchronous>, transform_indices = @transform_4, window_bounds = array<i64: 1, 64>}, {transform_indices = @transform_5, window_bounds = array<i64: 1, 8, 16, 64>}, {transform_indices = @transform_6, window_bounds = array<i64: 1, 4, 8, 64>}]} {
    %c0 = arith.constant 0 : index
    %c0_0 = arith.constant 0 : index
    %c0_1 = arith.constant 0 : index
    %c0_2 = arith.constant 0 : index
    %0 = vector.load %arg3[%c0, %c0_0, %c0_1, %c0_2] : memref<1x1x16x64xbf16, #tpu.memory_space<vmem>>, vector<1x1x16x64xbf16>
    %1 = vector.shape_cast %0 : vector<1x1x16x64xbf16> to vector<1x16x64xbf16>
    %c0_3 = arith.constant 0 : index
    %c0_4 = arith.constant 0 : index
    %c0_5 = arith.constant 0 : index
    %c0_6 = arith.constant 0 : index
    %2 = vector.load %arg4[%c0_3, %c0_4, %c0_5, %c0_6] : memref<1x1x16x64xbf16, #tpu.memory_space<vmem>>, vector<1x1x16x64xbf16>
    %3 = vector.shape_cast %2 : vector<1x1x16x64xbf16> to vector<1x16x64xbf16>
    %c0_i32 = arith.constant 0 : i32
    %4 = arith.cmpi eq, %arg1, %c0_i32 : i32
    %cst = arith.constant 0.000000e+00 : bf16
    %5 = vector.broadcast %cst : bf16 to vector<1x16x64xbf16>
    %6 = arith.select %4, %5, %1 : vector<1x16x64xbf16>
    %c1_i32 = arith.constant 1 : i32
    %7 = arith.cmpi eq, %arg1, %c1_i32 : i32
    %cst_7 = arith.constant 0.000000e+00 : bf16
    %8 = vector.broadcast %cst_7 : bf16 to vector<1x16x64xbf16>
    %9 = arith.select %7, %8, %3 : vector<1x16x64xbf16>
    %c0_8 = arith.constant 0 : index
    %c0_9 = arith.constant 0 : index
    %c0_10 = arith.constant 0 : index
    %c0_11 = arith.constant 0 : index
    %10 = vector.load %arg2[%c0_8, %c0_9, %c0_10, %c0_11] : memref<1x8x16x64xbf16, #tpu.memory_space<vmem>>, vector<1x8x16x64xbf16>
    %11 = vector.shape_cast %10 : vector<1x8x16x64xbf16> to vector<8x16x64xbf16>
    %12 = tpu.concatenate %6, %11, %9 in 0 : vector<1x16x64xbf16>, vector<8x16x64xbf16>, vector<1x16x64xbf16> -> vector<10x16x64xbf16>
    %cst_12 = arith.constant 0.000000e+00 : bf16
    %13 = vector.broadcast %cst_12 : bf16 to vector<10x1x64xbf16>
    %14 = tpu.concatenate %13, %12, %13 in 1 : vector<10x1x64xbf16>, vector<10x16x64xbf16>, vector<10x1x64xbf16> -> vector<10x18x64xbf16>
    %15 = vector.extract_strided_slice %14 {offsets = [0, 0, 0], sizes = [8, 16, 64], strides = [1, 1, 1]} : vector<10x18x64xbf16> to vector<8x16x64xbf16>
    %16 = vector.shape_cast %15 : vector<8x16x64xbf16> to vector<128x64xbf16>
    %17 = vector.extract_strided_slice %14 {offsets = [0, 1, 0], sizes = [8, 16, 64], strides = [1, 1, 1]} : vector<10x18x64xbf16> to vector<8x16x64xbf16>
    %18 = vector.shape_cast %17 : vector<8x16x64xbf16> to vector<128x64xbf16>
    %19 = vector.extract_strided_slice %14 {offsets = [0, 2, 0], sizes = [8, 16, 64], strides = [1, 1, 1]} : vector<10x18x64xbf16> to vector<8x16x64xbf16>
    %20 = vector.shape_cast %19 : vector<8x16x64xbf16> to vector<128x64xbf16>
    %21 = vector.extract_strided_slice %14 {offsets = [1, 0, 0], sizes = [8, 16, 64], strides = [1, 1, 1]} : vector<10x18x64xbf16> to vector<8x16x64xbf16>
    %22 = vector.shape_cast %21 : vector<8x16x64xbf16> to vector<128x64xbf16>
    %23 = vector.extract_strided_slice %14 {offsets = [1, 1, 0], sizes = [8, 16, 64], strides = [1, 1, 1]} : vector<10x18x64xbf16> to vector<8x16x64xbf16>
    %24 = vector.shape_cast %23 : vector<8x16x64xbf16> to vector<128x64xbf16>
    %25 = vector.extract_strided_slice %14 {offsets = [1, 2, 0], sizes = [8, 16, 64], strides = [1, 1, 1]} : vector<10x18x64xbf16> to vector<8x16x64xbf16>
    %26 = vector.shape_cast %25 : vector<8x16x64xbf16> to vector<128x64xbf16>
    %27 = vector.extract_strided_slice %14 {offsets = [2, 0, 0], sizes = [8, 16, 64], strides = [1, 1, 1]} : vector<10x18x64xbf16> to vector<8x16x64xbf16>
    %28 = vector.shape_cast %27 : vector<8x16x64xbf16> to vector<128x64xbf16>
    %29 = vector.extract_strided_slice %14 {offsets = [2, 1, 0], sizes = [8, 16, 64], strides = [1, 1, 1]} : vector<10x18x64xbf16> to vector<8x16x64xbf16>
    %30 = vector.shape_cast %29 : vector<8x16x64xbf16> to vector<128x64xbf16>
    %31 = vector.extract_strided_slice %14 {offsets = [2, 2, 0], sizes = [8, 16, 64], strides = [1, 1, 1]} : vector<10x18x64xbf16> to vector<8x16x64xbf16>
    %32 = vector.shape_cast %31 : vector<8x16x64xbf16> to vector<128x64xbf16>
    %33 = tpu.concatenate %16, %18, %20, %22, %24, %26, %28, %30, %32 in 1 : vector<128x64xbf16>, vector<128x64xbf16>, vector<128x64xbf16>, vector<128x64xbf16>, vector<128x64xbf16>, vector<128x64xbf16>, vector<128x64xbf16>, vector<128x64xbf16>, vector<128x64xbf16> -> vector<128x576xbf16>
    %c0_13 = arith.constant 0 : index
    %c0_14 = arith.constant 0 : index
    %34 = vector.load %arg5[%c0_13, %c0_14] : memref<576x64xbf16, #tpu.memory_space<vmem>>, vector<576x64xbf16>
    %cst_15 = arith.constant dense<0.000000e+00> : vector<128x64xf32>
    %35 = tpu.matmul %33, %34, %cst_15 {dimension_numbers = #tpu.dot_dimension_numbers<[1], [0], [0], [1], [0, 0, 1, 1], [], []>} : vector<128x576xbf16>, vector<576x64xbf16>, vector<128x64xf32> -> vector<128x64xf32>
    %c0_16 = arith.constant 0 : index
    %c0_17 = arith.constant 0 : index
    %36 = vector.load %arg6[%c0_16, %c0_17] : memref<1x64xf32, #tpu.memory_space<vmem>>, vector<1x64xf32>
    %37 = vector.broadcast %36 : vector<1x64xf32> to vector<128x64xf32>
    %38 = arith.addf %35, %37 : vector<128x64xf32>
    %cst_18 = arith.constant 0.000000e+00 : f32
    %39 = vector.broadcast %cst_18 : f32 to vector<128x64xf32>
    %40 = arith.maximumf %38, %39 : vector<128x64xf32>
    %41 = vector.shape_cast %40 : vector<128x64xf32> to vector<8x16x64xf32>
    %c0_19 = arith.constant 0 : index
    %c0_20 = arith.constant 0 : index
    %c0_21 = arith.constant 0 : index
    %c0_22 = arith.constant 0 : index
    %42 = vector.load %arg7[%c0_19, %c0_20, %c0_21, %c0_22] : memref<1x8x16x64xf32, #tpu.memory_space<vmem>>, vector<1x8x16x64xf32>
    %43 = vector.shape_cast %42 : vector<1x8x16x64xf32> to vector<8x16x64xf32>
    %44 = vector.shape_cast %41 : vector<8x16x64xf32> to vector<1x8x16x64xf32>
    tpu.vector_store %arg7[%c0_19, %c0_20, %c0_21, %c0_22], %44 {strides = array<i32>} : memref<1x8x16x64xf32, #tpu.memory_space<vmem>>, vector<1x8x16x64xf32>,
    %45 = vector.shape_cast %41 : vector<8x16x64xf32> to vector<4x2x16x64xf32>
    %46 = vector.extract_strided_slice %45 {offsets = [0, 0, 0, 0], sizes = [4, 1, 16, 64], strides = [1, 1, 1, 1]} : vector<4x2x16x64xf32> to vector<4x1x16x64xf32>
    %47 = vector.shape_cast %46 : vector<4x1x16x64xf32> to vector<4x16x64xf32>
    %48 = vector.extract_strided_slice %45 {offsets = [0, 1, 0, 0], sizes = [4, 1, 16, 64], strides = [1, 1, 1, 1]} : vector<4x2x16x64xf32> to vector<4x1x16x64xf32>
    %49 = vector.shape_cast %48 : vector<4x1x16x64xf32> to vector<4x16x64xf32>
    %50 = arith.maximumf %47, %49 : vector<4x16x64xf32>
    %51 = vector.shape_cast %50 : vector<4x16x64xf32> to vector<4x8x2x64xf32>
    %52 = vector.extract_strided_slice %51 {offsets = [0, 0, 0, 0], sizes = [4, 8, 1, 64], strides = [1, 1, 1, 1]} : vector<4x8x2x64xf32> to vector<4x8x1x64xf32>
    %53 = vector.shape_cast %52 : vector<4x8x1x64xf32> to vector<4x8x64xf32>
    %54 = vector.extract_strided_slice %51 {offsets = [0, 0, 1, 0], sizes = [4, 8, 1, 64], strides = [1, 1, 1, 1]} : vector<4x8x2x64xf32> to vector<4x8x1x64xf32>
    %55 = vector.shape_cast %54 : vector<4x8x1x64xf32> to vector<4x8x64xf32>
    %56 = arith.maximumf %53, %55 : vector<4x8x64xf32>
    %57 = arith.truncf %56 : vector<4x8x64xf32> to vector<4x8x64xbf16>
    %c0_23 = arith.constant 0 : index
    %c0_24 = arith.constant 0 : index
    %c0_25 = arith.constant 0 : index
    %c0_26 = arith.constant 0 : index
    %58 = vector.load %arg8[%c0_23, %c0_24, %c0_25, %c0_26] : memref<1x4x8x64xbf16, #tpu.memory_space<vmem>>, vector<1x4x8x64xbf16>
    %59 = vector.shape_cast %58 : vector<1x4x8x64xbf16> to vector<4x8x64xbf16>
    %60 = vector.shape_cast %57 : vector<4x8x64xbf16> to vector<1x4x8x64xbf16>
    tpu.vector_store %arg8[%c0_23, %c0_24, %c0_25, %c0_26], %60 {strides = array<i32>} : memref<1x4x8x64xbf16, #tpu.memory_space<vmem>>, vector<1x4x8x64xbf16>,
    return
  }
  func.func @transform_0(%arg0: i32, %arg1: i32) -> (i32, i32, i32, i32) {
    %c0_i32 = arith.constant 0 : i32
    %c0_i32_0 = arith.constant 0 : i32
    %c0_i32_1 = arith.constant 0 : i32
    return %arg0, %arg1, %c0_i32, %c0_i32_0 : i32, i32, i32, i32
  }
  func.func @transform_1(%arg0: i32, %arg1: i32) -> (i32, i32, i32, i32) {
    %c8_i32 = arith.constant 8 : i32
    %0 = arith.muli %arg1, %c8_i32 : i32
    %c1_i32 = arith.constant 1 : i32
    %1 = arith.subi %0, %c1_i32 : i32
    %c0_i32 = arith.constant 0 : i32
    %2 = arith.maxsi %1, %c0_i32 : i32
    %c0_i32_0 = arith.constant 0 : i32
    %c0_i32_1 = arith.constant 0 : i32
    %c0_i32_2 = arith.constant 0 : i32
    return %arg0, %2, %c0_i32_0, %c0_i32_1 : i32, i32, i32, i32
  }
  func.func @transform_2(%arg0: i32, %arg1: i32) -> (i32, i32, i32, i32) {
    %c8_i32 = arith.constant 8 : i32
    %0 = arith.muli %arg1, %c8_i32 : i32
    %c8_i32_0 = arith.constant 8 : i32
    %1 = arith.addi %0, %c8_i32_0 : i32
    %c15_i32 = arith.constant 15 : i32
    %2 = arith.minsi %1, %c15_i32 : i32
    %c0_i32 = arith.constant 0 : i32
    %c0_i32_1 = arith.constant 0 : i32
    %c0_i32_2 = arith.constant 0 : i32
    return %arg0, %2, %c0_i32, %c0_i32_1 : i32, i32, i32, i32
  }
  func.func @transform_3(%arg0: i32, %arg1: i32) -> (i32, i32) {
    %c0_i32 = arith.constant 0 : i32
    %c0_i32_0 = arith.constant 0 : i32
    %c0_i32_1 = arith.constant 0 : i32
    return %c0_i32, %c0_i32_0 : i32, i32
  }
  func.func @transform_4(%arg0: i32, %arg1: i32) -> (i32, i32) {
    %c0_i32 = arith.constant 0 : i32
    %c0_i32_0 = arith.constant 0 : i32
    %c0_i32_1 = arith.constant 0 : i32
    return %c0_i32, %c0_i32_0 : i32, i32
  }
  func.func @transform_5(%arg0: i32, %arg1: i32) -> (i32, i32, i32, i32) {
    %c0_i32 = arith.constant 0 : i32
    %c0_i32_0 = arith.constant 0 : i32
    %c0_i32_1 = arith.constant 0 : i32
    return %arg0, %arg1, %c0_i32, %c0_i32_0 : i32, i32, i32, i32
  }
  func.func @transform_6(%arg0: i32, %arg1: i32) -> (i32, i32, i32, i32) {
    %c0_i32 = arith.constant 0 : i32
    %c0_i32_0 = arith.constant 0 : i32
    %c0_i32_1 = arith.constant 0 : i32
    return %arg0, %arg1, %c0_i32, %c0_i32_0 : i32, i32, i32, i32
  }
}

module attributes {stable_mosaic.version = 11 : i64} {
  func.func @_matmul_bias_relu_kernel(%arg0: i32, %arg1: i32, %arg2: memref<1x8x16x27xbf16, #tpu.memory_space<vmem>>, %arg3: memref<27x64xbf16, #tpu.memory_space<vmem>>, %arg4: memref<1x64xf32, #tpu.memory_space<vmem>>, %arg5: memref<1x8x16x64xbf16, #tpu.memory_space<vmem>>) attributes {dimension_semantics = [#tpu.dimension_semantics<parallel>, #tpu.dimension_semantics<parallel>], iteration_bounds = array<i64: 2, 2>, scalar_prefetch = 0 : i64, scratch_operands = 0 : i64, tpu.core_type = #tpu.core_type<tc>, window_params = [{transform_indices = @transform_0, window_bounds = array<i64: 1, 8, 16, 27>}, {pipeline_mode = #tpu.pipeline_mode<synchronous>, transform_indices = @transform_1, window_bounds = array<i64: 27, 64>}, {pipeline_mode = #tpu.pipeline_mode<synchronous>, transform_indices = @transform_2, window_bounds = array<i64: 1, 64>}, {transform_indices = @transform_3, window_bounds = array<i64: 1, 8, 16, 64>}]} {
    %c0 = arith.constant 0 : index
    %c0_0 = arith.constant 0 : index
    %c0_1 = arith.constant 0 : index
    %c0_2 = arith.constant 0 : index
    %0 = vector.load %arg2[%c0, %c0_0, %c0_1, %c0_2] : memref<1x8x16x27xbf16, #tpu.memory_space<vmem>>, vector<1x8x16x27xbf16>
    %1 = vector.shape_cast %0 : vector<1x8x16x27xbf16> to vector<8x16x27xbf16>
    %2 = vector.shape_cast %1 : vector<8x16x27xbf16> to vector<128x27xbf16>
    %c0_3 = arith.constant 0 : index
    %c0_4 = arith.constant 0 : index
    %3 = vector.load %arg3[%c0_3, %c0_4] : memref<27x64xbf16, #tpu.memory_space<vmem>>, vector<27x64xbf16>
    %cst = arith.constant dense<0.000000e+00> : vector<128x64xf32>
    %4 = tpu.matmul %2, %3, %cst {dimension_numbers = #tpu.dot_dimension_numbers<[1], [0], [0], [1], [0, 0, 1, 1], [], []>} : vector<128x27xbf16>, vector<27x64xbf16>, vector<128x64xf32> -> vector<128x64xf32>
    %c0_5 = arith.constant 0 : index
    %c0_6 = arith.constant 0 : index
    %5 = vector.load %arg4[%c0_5, %c0_6] : memref<1x64xf32, #tpu.memory_space<vmem>>, vector<1x64xf32>
    %6 = vector.broadcast %5 : vector<1x64xf32> to vector<128x64xf32>
    %7 = arith.addf %4, %6 : vector<128x64xf32>
    %cst_7 = arith.constant 0.000000e+00 : f32
    %8 = vector.broadcast %cst_7 : f32 to vector<128x64xf32>
    %9 = arith.maximumf %7, %8 : vector<128x64xf32>
    %10 = vector.shape_cast %9 : vector<128x64xf32> to vector<8x16x64xf32>
    %11 = arith.truncf %10 : vector<8x16x64xf32> to vector<8x16x64xbf16>
    %c0_8 = arith.constant 0 : index
    %c0_9 = arith.constant 0 : index
    %c0_10 = arith.constant 0 : index
    %c0_11 = arith.constant 0 : index
    %12 = vector.load %arg5[%c0_8, %c0_9, %c0_10, %c0_11] : memref<1x8x16x64xbf16, #tpu.memory_space<vmem>>, vector<1x8x16x64xbf16>
    %13 = vector.shape_cast %12 : vector<1x8x16x64xbf16> to vector<8x16x64xbf16>
    %14 = vector.shape_cast %11 : vector<8x16x64xbf16> to vector<1x8x16x64xbf16>
    tpu.vector_store %arg5[%c0_8, %c0_9, %c0_10, %c0_11], %14 {strides = array<i32>} : memref<1x8x16x64xbf16, #tpu.memory_space<vmem>>, vector<1x8x16x64xbf16>,
    return
  }
  func.func @transform_0(%arg0: i32, %arg1: i32) -> (i32, i32, i32, i32) {
    %c0_i32 = arith.constant 0 : i32
    %c0_i32_0 = arith.constant 0 : i32
    %c0_i32_1 = arith.constant 0 : i32
    return %arg0, %arg1, %c0_i32, %c0_i32_0 : i32, i32, i32, i32
  }
  func.func @transform_1(%arg0: i32, %arg1: i32) -> (i32, i32) {
    %c0_i32 = arith.constant 0 : i32
    %c0_i32_0 = arith.constant 0 : i32
    %c0_i32_1 = arith.constant 0 : i32
    return %c0_i32, %c0_i32_0 : i32, i32
  }
  func.func @transform_2(%arg0: i32, %arg1: i32) -> (i32, i32) {
    %c0_i32 = arith.constant 0 : i32
    %c0_i32_0 = arith.constant 0 : i32
    %c0_i32_1 = arith.constant 0 : i32
    return %c0_i32, %c0_i32_0 : i32, i32
  }
  func.func @transform_3(%arg0: i32, %arg1: i32) -> (i32, i32, i32, i32) {
    %c0_i32 = arith.constant 0 : i32
    %c0_i32_0 = arith.constant 0 : i32
    %c0_i32_1 = arith.constant 0 : i32
    return %arg0, %arg1, %c0_i32, %c0_i32_0 : i32, i32, i32, i32
  }
}

module attributes {stable_mosaic.version = 11 : i64} {
  func.func @_conv3x3_kernel(%arg0: i32, %arg1: i32, %arg2: memref<1x4x8x64xbf16, #tpu.memory_space<vmem>>, %arg3: memref<1x1x8x64xbf16, #tpu.memory_space<vmem>>, %arg4: memref<1x1x8x64xbf16, #tpu.memory_space<vmem>>, %arg5: memref<576x128xbf16, #tpu.memory_space<vmem>>, %arg6: memref<1x128xf32, #tpu.memory_space<vmem>>, %arg7: memref<1x4x8x128xbf16, #tpu.memory_space<vmem>>) attributes {dimension_semantics = [#tpu.dimension_semantics<parallel>, #tpu.dimension_semantics<parallel>], iteration_bounds = array<i64: 2, 2>, scalar_prefetch = 0 : i64, scratch_operands = 0 : i64, tpu.core_type = #tpu.core_type<tc>, window_params = [{transform_indices = @transform_0, window_bounds = array<i64: 1, 4, 8, 64>}, {transform_indices = @transform_1, window_bounds = array<i64: 1, 1, 8, 64>}, {transform_indices = @transform_2, window_bounds = array<i64: 1, 1, 8, 64>}, {pipeline_mode = #tpu.pipeline_mode<synchronous>, transform_indices = @transform_3, window_bounds = array<i64: 576, 128>}, {pipeline_mode = #tpu.pipeline_mode<synchronous>, transform_indices = @transform_4, window_bounds = array<i64: 1, 128>}, {transform_indices = @transform_5, window_bounds = array<i64: 1, 4, 8, 128>}]} {
    %c0 = arith.constant 0 : index
    %c0_0 = arith.constant 0 : index
    %c0_1 = arith.constant 0 : index
    %c0_2 = arith.constant 0 : index
    %0 = vector.load %arg3[%c0, %c0_0, %c0_1, %c0_2] : memref<1x1x8x64xbf16, #tpu.memory_space<vmem>>, vector<1x1x8x64xbf16>
    %1 = vector.shape_cast %0 : vector<1x1x8x64xbf16> to vector<1x8x64xbf16>
    %c0_3 = arith.constant 0 : index
    %c0_4 = arith.constant 0 : index
    %c0_5 = arith.constant 0 : index
    %c0_6 = arith.constant 0 : index
    %2 = vector.load %arg4[%c0_3, %c0_4, %c0_5, %c0_6] : memref<1x1x8x64xbf16, #tpu.memory_space<vmem>>, vector<1x1x8x64xbf16>
    %3 = vector.shape_cast %2 : vector<1x1x8x64xbf16> to vector<1x8x64xbf16>
    %c0_i32 = arith.constant 0 : i32
    %4 = arith.cmpi eq, %arg1, %c0_i32 : i32
    %cst = arith.constant 0.000000e+00 : bf16
    %5 = vector.broadcast %cst : bf16 to vector<1x8x64xbf16>
    %6 = arith.select %4, %5, %1 : vector<1x8x64xbf16>
    %c1_i32 = arith.constant 1 : i32
    %7 = arith.cmpi eq, %arg1, %c1_i32 : i32
    %cst_7 = arith.constant 0.000000e+00 : bf16
    %8 = vector.broadcast %cst_7 : bf16 to vector<1x8x64xbf16>
    %9 = arith.select %7, %8, %3 : vector<1x8x64xbf16>
    %c0_8 = arith.constant 0 : index
    %c0_9 = arith.constant 0 : index
    %c0_10 = arith.constant 0 : index
    %c0_11 = arith.constant 0 : index
    %10 = vector.load %arg2[%c0_8, %c0_9, %c0_10, %c0_11] : memref<1x4x8x64xbf16, #tpu.memory_space<vmem>>, vector<1x4x8x64xbf16>
    %11 = vector.shape_cast %10 : vector<1x4x8x64xbf16> to vector<4x8x64xbf16>
    %12 = tpu.concatenate %6, %11, %9 in 0 : vector<1x8x64xbf16>, vector<4x8x64xbf16>, vector<1x8x64xbf16> -> vector<6x8x64xbf16>
    %cst_12 = arith.constant 0.000000e+00 : bf16
    %13 = vector.broadcast %cst_12 : bf16 to vector<6x1x64xbf16>
    %14 = tpu.concatenate %13, %12, %13 in 1 : vector<6x1x64xbf16>, vector<6x8x64xbf16>, vector<6x1x64xbf16> -> vector<6x10x64xbf16>
    %15 = vector.extract_strided_slice %14 {offsets = [0, 0, 0], sizes = [4, 8, 64], strides = [1, 1, 1]} : vector<6x10x64xbf16> to vector<4x8x64xbf16>
    %16 = vector.shape_cast %15 : vector<4x8x64xbf16> to vector<32x64xbf16>
    %17 = vector.extract_strided_slice %14 {offsets = [0, 1, 0], sizes = [4, 8, 64], strides = [1, 1, 1]} : vector<6x10x64xbf16> to vector<4x8x64xbf16>
    %18 = vector.shape_cast %17 : vector<4x8x64xbf16> to vector<32x64xbf16>
    %19 = vector.extract_strided_slice %14 {offsets = [0, 2, 0], sizes = [4, 8, 64], strides = [1, 1, 1]} : vector<6x10x64xbf16> to vector<4x8x64xbf16>
    %20 = vector.shape_cast %19 : vector<4x8x64xbf16> to vector<32x64xbf16>
    %21 = vector.extract_strided_slice %14 {offsets = [1, 0, 0], sizes = [4, 8, 64], strides = [1, 1, 1]} : vector<6x10x64xbf16> to vector<4x8x64xbf16>
    %22 = vector.shape_cast %21 : vector<4x8x64xbf16> to vector<32x64xbf16>
    %23 = vector.extract_strided_slice %14 {offsets = [1, 1, 0], sizes = [4, 8, 64], strides = [1, 1, 1]} : vector<6x10x64xbf16> to vector<4x8x64xbf16>
    %24 = vector.shape_cast %23 : vector<4x8x64xbf16> to vector<32x64xbf16>
    %25 = vector.extract_strided_slice %14 {offsets = [1, 2, 0], sizes = [4, 8, 64], strides = [1, 1, 1]} : vector<6x10x64xbf16> to vector<4x8x64xbf16>
    %26 = vector.shape_cast %25 : vector<4x8x64xbf16> to vector<32x64xbf16>
    %27 = vector.extract_strided_slice %14 {offsets = [2, 0, 0], sizes = [4, 8, 64], strides = [1, 1, 1]} : vector<6x10x64xbf16> to vector<4x8x64xbf16>
    %28 = vector.shape_cast %27 : vector<4x8x64xbf16> to vector<32x64xbf16>
    %29 = vector.extract_strided_slice %14 {offsets = [2, 1, 0], sizes = [4, 8, 64], strides = [1, 1, 1]} : vector<6x10x64xbf16> to vector<4x8x64xbf16>
    %30 = vector.shape_cast %29 : vector<4x8x64xbf16> to vector<32x64xbf16>
    %31 = vector.extract_strided_slice %14 {offsets = [2, 2, 0], sizes = [4, 8, 64], strides = [1, 1, 1]} : vector<6x10x64xbf16> to vector<4x8x64xbf16>
    %32 = vector.shape_cast %31 : vector<4x8x64xbf16> to vector<32x64xbf16>
    %33 = tpu.concatenate %16, %18, %20, %22, %24, %26, %28, %30, %32 in 1 : vector<32x64xbf16>, vector<32x64xbf16>, vector<32x64xbf16>, vector<32x64xbf16>, vector<32x64xbf16>, vector<32x64xbf16>, vector<32x64xbf16>, vector<32x64xbf16>, vector<32x64xbf16> -> vector<32x576xbf16>
    %c0_13 = arith.constant 0 : index
    %c0_14 = arith.constant 0 : index
    %34 = vector.load %arg5[%c0_13, %c0_14] : memref<576x128xbf16, #tpu.memory_space<vmem>>, vector<576x128xbf16>
    %cst_15 = arith.constant dense<0.000000e+00> : vector<32x128xf32>
    %35 = tpu.matmul %33, %34, %cst_15 {dimension_numbers = #tpu.dot_dimension_numbers<[1], [0], [0], [1], [0, 0, 1, 1], [], []>} : vector<32x576xbf16>, vector<576x128xbf16>, vector<32x128xf32> -> vector<32x128xf32>
    %c0_16 = arith.constant 0 : index
    %c0_17 = arith.constant 0 : index
    %36 = vector.load %arg6[%c0_16, %c0_17] : memref<1x128xf32, #tpu.memory_space<vmem>>, vector<1x128xf32>
    %37 = vector.broadcast %36 : vector<1x128xf32> to vector<32x128xf32>
    %38 = arith.addf %35, %37 : vector<32x128xf32>
    %cst_18 = arith.constant 0.000000e+00 : f32
    %39 = vector.broadcast %cst_18 : f32 to vector<32x128xf32>
    %40 = arith.maximumf %38, %39 : vector<32x128xf32>
    %41 = vector.shape_cast %40 : vector<32x128xf32> to vector<4x8x128xf32>
    %42 = arith.truncf %41 : vector<4x8x128xf32> to vector<4x8x128xbf16>
    %c0_19 = arith.constant 0 : index
    %c0_20 = arith.constant 0 : index
    %c0_21 = arith.constant 0 : index
    %c0_22 = arith.constant 0 : index
    %43 = vector.load %arg7[%c0_19, %c0_20, %c0_21, %c0_22] : memref<1x4x8x128xbf16, #tpu.memory_space<vmem>>, vector<1x4x8x128xbf16>
    %44 = vector.shape_cast %43 : vector<1x4x8x128xbf16> to vector<4x8x128xbf16>
    %45 = vector.shape_cast %42 : vector<4x8x128xbf16> to vector<1x4x8x128xbf16>
    tpu.vector_store %arg7[%c0_19, %c0_20, %c0_21, %c0_22], %45 {strides = array<i32>} : memref<1x4x8x128xbf16, #tpu.memory_space<vmem>>, vector<1x4x8x128xbf16>,
    return
  }
  func.func @transform_0(%arg0: i32, %arg1: i32) -> (i32, i32, i32, i32) {
    %c0_i32 = arith.constant 0 : i32
    %c0_i32_0 = arith.constant 0 : i32
    %c0_i32_1 = arith.constant 0 : i32
    return %arg0, %arg1, %c0_i32, %c0_i32_0 : i32, i32, i32, i32
  }
  func.func @transform_1(%arg0: i32, %arg1: i32) -> (i32, i32, i32, i32) {
    %c4_i32 = arith.constant 4 : i32
    %0 = arith.muli %arg1, %c4_i32 : i32
    %c1_i32 = arith.constant 1 : i32
    %1 = arith.subi %0, %c1_i32 : i32
    %c0_i32 = arith.constant 0 : i32
    %2 = arith.maxsi %1, %c0_i32 : i32
    %c0_i32_0 = arith.constant 0 : i32
    %c0_i32_1 = arith.constant 0 : i32
    %c0_i32_2 = arith.constant 0 : i32
    return %arg0, %2, %c0_i32_0, %c0_i32_1 : i32, i32, i32, i32
  }
  func.func @transform_2(%arg0: i32, %arg1: i32) -> (i32, i32, i32, i32) {
    %c4_i32 = arith.constant 4 : i32
    %0 = arith.muli %arg1, %c4_i32 : i32
    %c4_i32_0 = arith.constant 4 : i32
    %1 = arith.addi %0, %c4_i32_0 : i32
    %c7_i32 = arith.constant 7 : i32
    %2 = arith.minsi %1, %c7_i32 : i32
    %c0_i32 = arith.constant 0 : i32
    %c0_i32_1 = arith.constant 0 : i32
    %c0_i32_2 = arith.constant 0 : i32
    return %arg0, %2, %c0_i32, %c0_i32_1 : i32, i32, i32, i32
  }
  func.func @transform_3(%arg0: i32, %arg1: i32) -> (i32, i32) {
    %c0_i32 = arith.constant 0 : i32
    %c0_i32_0 = arith.constant 0 : i32
    %c0_i32_1 = arith.constant 0 : i32
    return %c0_i32, %c0_i32_0 : i32, i32
  }
  func.func @transform_4(%arg0: i32, %arg1: i32) -> (i32, i32) {
    %c0_i32 = arith.constant 0 : i32
    %c0_i32_0 = arith.constant 0 : i32
    %c0_i32_1 = arith.constant 0 : i32
    return %c0_i32, %c0_i32_0 : i32, i32
  }
  func.func @transform_5(%arg0: i32, %arg1: i32) -> (i32, i32, i32, i32) {
    %c0_i32 = arith.constant 0 : i32
    %c0_i32_0 = arith.constant 0 : i32
    %c0_i32_1 = arith.constant 0 : i32
    return %arg0, %arg1, %c0_i32, %c0_i32_0 : i32, i32, i32, i32
  }
}

module attributes {stable_mosaic.version = 11 : i64} {
  func.func @_conv3x3_kernel(%arg0: i32, %arg1: i32, %arg2: memref<1x4x8x128xbf16, #tpu.memory_space<vmem>>, %arg3: memref<1x1x8x128xbf16, #tpu.memory_space<vmem>>, %arg4: memref<1x1x8x128xbf16, #tpu.memory_space<vmem>>, %arg5: memref<1152x128xbf16, #tpu.memory_space<vmem>>, %arg6: memref<1x128xf32, #tpu.memory_space<vmem>>, %arg7: memref<1x4x8x128xf32, #tpu.memory_space<vmem>>) attributes {dimension_semantics = [#tpu.dimension_semantics<parallel>, #tpu.dimension_semantics<parallel>], iteration_bounds = array<i64: 2, 2>, scalar_prefetch = 0 : i64, scratch_operands = 0 : i64, tpu.core_type = #tpu.core_type<tc>, window_params = [{transform_indices = @transform_0, window_bounds = array<i64: 1, 4, 8, 128>}, {transform_indices = @transform_1, window_bounds = array<i64: 1, 1, 8, 128>}, {transform_indices = @transform_2, window_bounds = array<i64: 1, 1, 8, 128>}, {pipeline_mode = #tpu.pipeline_mode<synchronous>, transform_indices = @transform_3, window_bounds = array<i64: 1152, 128>}, {pipeline_mode = #tpu.pipeline_mode<synchronous>, transform_indices = @transform_4, window_bounds = array<i64: 1, 128>}, {transform_indices = @transform_5, window_bounds = array<i64: 1, 4, 8, 128>}]} {
    %c0 = arith.constant 0 : index
    %c0_0 = arith.constant 0 : index
    %c0_1 = arith.constant 0 : index
    %c0_2 = arith.constant 0 : index
    %0 = vector.load %arg3[%c0, %c0_0, %c0_1, %c0_2] : memref<1x1x8x128xbf16, #tpu.memory_space<vmem>>, vector<1x1x8x128xbf16>
    %1 = vector.shape_cast %0 : vector<1x1x8x128xbf16> to vector<1x8x128xbf16>
    %c0_3 = arith.constant 0 : index
    %c0_4 = arith.constant 0 : index
    %c0_5 = arith.constant 0 : index
    %c0_6 = arith.constant 0 : index
    %2 = vector.load %arg4[%c0_3, %c0_4, %c0_5, %c0_6] : memref<1x1x8x128xbf16, #tpu.memory_space<vmem>>, vector<1x1x8x128xbf16>
    %3 = vector.shape_cast %2 : vector<1x1x8x128xbf16> to vector<1x8x128xbf16>
    %c0_i32 = arith.constant 0 : i32
    %4 = arith.cmpi eq, %arg1, %c0_i32 : i32
    %cst = arith.constant 0.000000e+00 : bf16
    %5 = vector.broadcast %cst : bf16 to vector<1x8x128xbf16>
    %6 = arith.select %4, %5, %1 : vector<1x8x128xbf16>
    %c1_i32 = arith.constant 1 : i32
    %7 = arith.cmpi eq, %arg1, %c1_i32 : i32
    %cst_7 = arith.constant 0.000000e+00 : bf16
    %8 = vector.broadcast %cst_7 : bf16 to vector<1x8x128xbf16>
    %9 = arith.select %7, %8, %3 : vector<1x8x128xbf16>
    %c0_8 = arith.constant 0 : index
    %c0_9 = arith.constant 0 : index
    %c0_10 = arith.constant 0 : index
    %c0_11 = arith.constant 0 : index
    %10 = vector.load %arg2[%c0_8, %c0_9, %c0_10, %c0_11] : memref<1x4x8x128xbf16, #tpu.memory_space<vmem>>, vector<1x4x8x128xbf16>
    %11 = vector.shape_cast %10 : vector<1x4x8x128xbf16> to vector<4x8x128xbf16>
    %12 = tpu.concatenate %6, %11, %9 in 0 : vector<1x8x128xbf16>, vector<4x8x128xbf16>, vector<1x8x128xbf16> -> vector<6x8x128xbf16>
    %cst_12 = arith.constant 0.000000e+00 : bf16
    %13 = vector.broadcast %cst_12 : bf16 to vector<6x1x128xbf16>
    %14 = tpu.concatenate %13, %12, %13 in 1 : vector<6x1x128xbf16>, vector<6x8x128xbf16>, vector<6x1x128xbf16> -> vector<6x10x128xbf16>
    %15 = vector.extract_strided_slice %14 {offsets = [0, 0, 0], sizes = [4, 8, 128], strides = [1, 1, 1]} : vector<6x10x128xbf16> to vector<4x8x128xbf16>
    %16 = vector.shape_cast %15 : vector<4x8x128xbf16> to vector<32x128xbf16>
    %17 = vector.extract_strided_slice %14 {offsets = [0, 1, 0], sizes = [4, 8, 128], strides = [1, 1, 1]} : vector<6x10x128xbf16> to vector<4x8x128xbf16>
    %18 = vector.shape_cast %17 : vector<4x8x128xbf16> to vector<32x128xbf16>
    %19 = vector.extract_strided_slice %14 {offsets = [0, 2, 0], sizes = [4, 8, 128], strides = [1, 1, 1]} : vector<6x10x128xbf16> to vector<4x8x128xbf16>
    %20 = vector.shape_cast %19 : vector<4x8x128xbf16> to vector<32x128xbf16>
    %21 = vector.extract_strided_slice %14 {offsets = [1, 0, 0], sizes = [4, 8, 128], strides = [1, 1, 1]} : vector<6x10x128xbf16> to vector<4x8x128xbf16>
    %22 = vector.shape_cast %21 : vector<4x8x128xbf16> to vector<32x128xbf16>
    %23 = vector.extract_strided_slice %14 {offsets = [1, 1, 0], sizes = [4, 8, 128], strides = [1, 1, 1]} : vector<6x10x128xbf16> to vector<4x8x128xbf16>
    %24 = vector.shape_cast %23 : vector<4x8x128xbf16> to vector<32x128xbf16>
    %25 = vector.extract_strided_slice %14 {offsets = [1, 2, 0], sizes = [4, 8, 128], strides = [1, 1, 1]} : vector<6x10x128xbf16> to vector<4x8x128xbf16>
    %26 = vector.shape_cast %25 : vector<4x8x128xbf16> to vector<32x128xbf16>
    %27 = vector.extract_strided_slice %14 {offsets = [2, 0, 0], sizes = [4, 8, 128], strides = [1, 1, 1]} : vector<6x10x128xbf16> to vector<4x8x128xbf16>
    %28 = vector.shape_cast %27 : vector<4x8x128xbf16> to vector<32x128xbf16>
    %29 = vector.extract_strided_slice %14 {offsets = [2, 1, 0], sizes = [4, 8, 128], strides = [1, 1, 1]} : vector<6x10x128xbf16> to vector<4x8x128xbf16>
    %30 = vector.shape_cast %29 : vector<4x8x128xbf16> to vector<32x128xbf16>
    %31 = vector.extract_strided_slice %14 {offsets = [2, 2, 0], sizes = [4, 8, 128], strides = [1, 1, 1]} : vector<6x10x128xbf16> to vector<4x8x128xbf16>
    %32 = vector.shape_cast %31 : vector<4x8x128xbf16> to vector<32x128xbf16>
    %33 = tpu.concatenate %16, %18, %20, %22, %24, %26, %28, %30, %32 in 1 : vector<32x128xbf16>, vector<32x128xbf16>, vector<32x128xbf16>, vector<32x128xbf16>, vector<32x128xbf16>, vector<32x128xbf16>, vector<32x128xbf16>, vector<32x128xbf16>, vector<32x128xbf16> -> vector<32x1152xbf16>
    %c0_13 = arith.constant 0 : index
    %c0_14 = arith.constant 0 : index
    %34 = vector.load %arg5[%c0_13, %c0_14] : memref<1152x128xbf16, #tpu.memory_space<vmem>>, vector<1152x128xbf16>
    %cst_15 = arith.constant dense<0.000000e+00> : vector<32x128xf32>
    %35 = tpu.matmul %33, %34, %cst_15 {dimension_numbers = #tpu.dot_dimension_numbers<[1], [0], [0], [1], [0, 0, 1, 1], [], []>} : vector<32x1152xbf16>, vector<1152x128xbf16>, vector<32x128xf32> -> vector<32x128xf32>
    %c0_16 = arith.constant 0 : index
    %c0_17 = arith.constant 0 : index
    %36 = vector.load %arg6[%c0_16, %c0_17] : memref<1x128xf32, #tpu.memory_space<vmem>>, vector<1x128xf32>
    %37 = vector.broadcast %36 : vector<1x128xf32> to vector<32x128xf32>
    %38 = arith.addf %35, %37 : vector<32x128xf32>
    %cst_18 = arith.constant 0.000000e+00 : f32
    %39 = vector.broadcast %cst_18 : f32 to vector<32x128xf32>
    %40 = arith.maximumf %38, %39 : vector<32x128xf32>
    %41 = vector.shape_cast %40 : vector<32x128xf32> to vector<4x8x128xf32>
    %c0_19 = arith.constant 0 : index
    %c0_20 = arith.constant 0 : index
    %c0_21 = arith.constant 0 : index
    %c0_22 = arith.constant 0 : index
    %42 = vector.load %arg7[%c0_19, %c0_20, %c0_21, %c0_22] : memref<1x4x8x128xf32, #tpu.memory_space<vmem>>, vector<1x4x8x128xf32>
    %43 = vector.shape_cast %42 : vector<1x4x8x128xf32> to vector<4x8x128xf32>
    %44 = vector.shape_cast %41 : vector<4x8x128xf32> to vector<1x4x8x128xf32>
    tpu.vector_store %arg7[%c0_19, %c0_20, %c0_21, %c0_22], %44 {strides = array<i32>} : memref<1x4x8x128xf32, #tpu.memory_space<vmem>>, vector<1x4x8x128xf32>,
    return
  }
  func.func @transform_0(%arg0: i32, %arg1: i32) -> (i32, i32, i32, i32) {
    %c0_i32 = arith.constant 0 : i32
    %c0_i32_0 = arith.constant 0 : i32
    %c0_i32_1 = arith.constant 0 : i32
    return %arg0, %arg1, %c0_i32, %c0_i32_0 : i32, i32, i32, i32
  }
  func.func @transform_1(%arg0: i32, %arg1: i32) -> (i32, i32, i32, i32) {
    %c4_i32 = arith.constant 4 : i32
    %0 = arith.muli %arg1, %c4_i32 : i32
    %c1_i32 = arith.constant 1 : i32
    %1 = arith.subi %0, %c1_i32 : i32
    %c0_i32 = arith.constant 0 : i32
    %2 = arith.maxsi %1, %c0_i32 : i32
    %c0_i32_0 = arith.constant 0 : i32
    %c0_i32_1 = arith.constant 0 : i32
    %c0_i32_2 = arith.constant 0 : i32
    return %arg0, %2, %c0_i32_0, %c0_i32_1 : i32, i32, i32, i32
  }
  func.func @transform_2(%arg0: i32, %arg1: i32) -> (i32, i32, i32, i32) {
    %c4_i32 = arith.constant 4 : i32
    %0 = arith.muli %arg1, %c4_i32 : i32
    %c4_i32_0 = arith.constant 4 : i32
    %1 = arith.addi %0, %c4_i32_0 : i32
    %c7_i32 = arith.constant 7 : i32
    %2 = arith.minsi %1, %c7_i32 : i32
    %c0_i32 = arith.constant 0 : i32
    %c0_i32_1 = arith.constant 0 : i32
    %c0_i32_2 = arith.constant 0 : i32
    return %arg0, %2, %c0_i32, %c0_i32_1 : i32, i32, i32, i32
  }
  func.func @transform_3(%arg0: i32, %arg1: i32) -> (i32, i32) {
    %c0_i32 = arith.constant 0 : i32
    %c0_i32_0 = arith.constant 0 : i32
    %c0_i32_1 = arith.constant 0 : i32
    return %c0_i32, %c0_i32_0 : i32, i32
  }
  func.func @transform_4(%arg0: i32, %arg1: i32) -> (i32, i32) {
    %c0_i32 = arith.constant 0 : i32
    %c0_i32_0 = arith.constant 0 : i32
    %c0_i32_1 = arith.constant 0 : i32
    return %c0_i32, %c0_i32_0 : i32, i32
  }
  func.func @transform_5(%arg0: i32, %arg1: i32) -> (i32, i32, i32, i32) {
    %c0_i32 = arith.constant 0 : i32
    %c0_i32_0 = arith.constant 0 : i32
    %c0_i32_1 = arith.constant 0 : i32
    return %arg0, %arg1, %c0_i32, %c0_i32_0 : i32, i32, i32, i32
  }
}

</mosaic_0001>

<llo_original>
// kernel: vgg16_forward.4
$region0: #{vgg16_forward.4}
  #allocation0 [shape = 'u32[]', space=smem, size = 0x4, offset = 0x4, fixed_abs, tag = 'smem constant byte address 0x4 - core index']
  #allocation1 [shape = 'u32[72,128]{1,0:T(1,128)}', space=vmem, size = 0x9000, scoped, tag = 'internal scratch']
  %s0 = inlined_call_operand.vmem [shape: bf16[2,16,16,27], index: 0, kind: input, shape index: {}]
  %s1 = inlined_call_operand.vmem [shape: bf16[27,64], index: 1, kind: input, shape index: {}]
  %s2 = inlined_call_operand.vmem [shape: f32[1,64], index: 2, kind: input, shape index: {}]
  %s3 = inlined_call_operand.vmem [shape: bf16[2,16,16,64], index: 3, kind: output, shape index: {}]
  %s4 = sld [smem:[#allocation0]]
  $region45: #{vgg16_forward.4} parent=0
    _
  %s6 = ssub.s32 1, %s4
  %s7 = scalar_select 0, %s6, %s4
  loop: start=0, step=1, limit=6
  $region2: #{vgg16_forward.4} parent=0 // loop_pre_header
    _
  $region3: #{vgg16_forward.4} parent=0 // loop_header
    %s9 = sphi 0, %s13
    %p10 = scmp.ge.s32.totalorder %s9, 6
    %s16 = sphi 0, %s28
    %s17 = sphi 0, %s24
    %s18 = sphi 0, %s16
    %s19 = sphi 0, %s17
    %s20 = sphi 0, %s18
    %s21 = sphi 0, %s19
    %s33 = sphi 0, %s35
    %s36 = sphi 0, %s33
    %s37 = sphi 0, %s36
    %s53 = sphi 0, %s37
    %s57 = sphi 0, %s57
    %s59 = sphi 0, %s57
    %s60 = sphi 0, %s59
    %s74 = sphi 0, %s60
    %s78 = sphi 0, %s78
    %s80 = sphi 0, %s78
    %s81 = sphi 0, %s80
    %s95 = sphi 0, %s81
    %s103 = sphi 0, %s105
    %s106 = sphi 0, %s103
    %s107 = sphi 0, %s106
    %s123 = sphi 0, %s107
  $region4: #{vgg16_forward.4} parent=0 // loop_header_branch
    %12 = sbr.rel (%p10) target = $region8
  $region5: #{vgg16_forward.4} parent=0 // loop_body
    %s14 = ssub.s32 %s9, 1
    %s15 = ssub.s32 %s9, 2
    %s22 = sadd.s32 1, %s17
    %p23 = scmp.ge.s32.totalorder %s22, 2
    %s24 = scalar_select %p23, 0, %s22
    %s25 = sadd.s32 1, %s16
    %s26 = scalar_select %p23, %s25, %s16
    %p27 = scmp.ge.s32.totalorder %s26, 2
    %s28 = scalar_select %p27, 0, %s26
    %s29 = ssub.s32 %s16, %s28
    %s30 = ssub.s32 %s17, %s24
    %s31 = sor.u32 %s29, %s30
    %p32 = scmp.eq.s32.totalorder %s31, 0
    %s34 = sadd.s32 %s33, 1
    %s35 = scalar_select %p32, %s33, %s34
    %p38 = pneg %p32
    %p39 = scmp.eq.s32.totalorder %s9, 3
    %p40 = por %p38, %p39
    %p41 = scmp.ne.s32.totalorder %s33, %s36
    %p42 = scmp.eq.s32.totalorder %s9, 0
    %p43 = por %p41, %p42
    %p44 = scmp.ne.s32.totalorder %s33, %s36
    %p45 = scmp.eq.s32.totalorder %s14, 3
    %p46 = por %p44, %p45
    %p47 = scmp.ne.s32.totalorder %s36, %s37
    %p48 = scmp.eq.s32.totalorder %s14, 0
    %p49 = por %p47, %p48
    %p50 = scmp.ne.s32.totalorder %s36, %s37
    %p51 = scmp.eq.s32.totalorder %s15, 3
    %p52 = por %p50, %p51
    %p54 = scmp.ne.s32.totalorder %s37, %s53
    %p55 = scmp.eq.s32.totalorder %s15, 0
    %p56 = por %p54, %p55
    %s58 = sadd.s32 %s57, 1
    %p61 = scmp.eq.s32.totalorder %s9, 3
    %p62 = scmp.ne.s32.totalorder %s57, %s59
    %p63 = scmp.eq.s32.totalorder %s9, 0
    %p64 = por %p62, %p63
    %p65 = scmp.ne.s32.totalorder %s57, %s59
    %p66 = scmp.eq.s32.totalorder %s14, 3
    %p67 = por %p65, %p66
    %p68 = scmp.ne.s32.totalorder %s59, %s60
    %p69 = scmp.eq.s32.totalorder %s14, 0
    %p70 = por %p68, %p69
    %p71 = scmp.ne.s32.totalorder %s59, %s60
    %p72 = scmp.eq.s32.totalorder %s15, 3
    %p73 = por %p71, %p72
    %p75 = scmp.ne.s32.totalorder %s60, %s74
    %p76 = scmp.eq.s32.totalorder %s15, 0
    %p77 = por %p75, %p76
    %s79 = sadd.s32 %s78, 1
    %p82 = scmp.eq.s32.totalorder %s9, 3
    %p83 = scmp.ne.s32.totalorder %s78, %s80
    %p84 = scmp.eq.s32.totalorder %s9, 0
    %p85 = por %p83, %p84
    %p86 = scmp.ne.s32.totalorder %s78, %s80
    %p87 = scmp.eq.s32.totalorder %s14, 3
    %p88 = por %p86, %p87
    %p89 = scmp.ne.s32.totalorder %s80, %s81
    %p90 = scmp.eq.s32.totalorder %s14, 0
    %p91 = por %p89, %p90
    %p92 = scmp.ne.s32.totalorder %s80, %s81
    %p93 = scmp.eq.s32.totalorder %s15, 3
    %p94 = por %p92, %p93
    %p96 = scmp.ne.s32.totalorder %s81, %s95
    %p97 = scmp.eq.s32.totalorder %s15, 0
    %p98 = por %p96, %p97
    %s99 = ssub.s32 %s16, %s28
    %s100 = ssub.s32 %s17, %s24
    %s101 = sor.u32 %s99, %s100
    %p102 = scmp.eq.s32.totalorder %s101, 0
    %s104 = sadd.s32 %s103, 1
    %s105 = scalar_select %p102, %s103, %s104
    %p108 = pneg %p102
    %p109 = scmp.eq.s32.totalorder %s9, 3
    %p110 = por %p108, %p109
    %p111 = scmp.ne.s32.totalorder %s103, %s106
    %p112 = scmp.eq.s32.totalorder %s9, 0
    %p113 = por %p111, %p112
    %p114 = scmp.ne.s32.totalorder %s103, %s106
    %p115 = scmp.eq.s32.totalorder %s14, 3
    %p116 = por %p114, %p115
    %p117 = scmp.ne.s32.totalorder %s106, %s107
    %p118 = scmp.eq.s32.totalorder %s14, 0
    %p119 = por %p117, %p118
    %p120 = scmp.ne.s32.totalorder %s106, %s107
    %p121 = scmp.eq.s32.totalorder %s15, 3
    %p122 = por %p120, %p121
    %p124 = scmp.ne.s32.totalorder %s107, %s123
    %p125 = scmp.eq.s32.totalorder %s15, 0
    %p126 = por %p124, %p125
    %p127 = scmp.le.s32.totalorder 1, %s9
    %p128 = scmp.lt.s32.totalorder %s9, 5
    %p129 = pnand %p127, %p128
    %p130 = pneg %p129
    // Predicated region
    $region9: #{vgg16_forward.4} parent=5 // pred_check
      _
    $region10: #{vgg16_forward.4} parent=5 // pred_check_branch
      %132 = sbr.rel (%p129) target = $region12
    $region11: #{vgg16_forward.4} parent=5 // pred_region
      %s133 = ssub.s32 %s9, 1
      // Predicated region
      $region13: #{vgg16_forward.4} parent=11 // pred_check
        %p134 = pneg %p70
      $region14: #{vgg16_forward.4} parent=11 // pred_check_branch
        %136 = sbr.rel (%p134) target = $region16
      $region15: #{vgg16_forward.4} parent=11 // pred_region
        _
      $region16: #{vgg16_forward.4} parent=11 // pred_fallthru
        _
      // Predicated region
      $region17: #{vgg16_forward.4} parent=11 // pred_check
        %p137 = pneg %p91
      $region18: #{vgg16_forward.4} parent=11 // pred_check_branch
        %139 = sbr.rel (%p137) target = $region20
      $region19: #{vgg16_forward.4} parent=11 // pred_region
        _
      $region20: #{vgg16_forward.4} parent=11 // pred_fallthru
        _
    $region12: #{vgg16_forward.4} parent=5 // pred_fallthru
      _
    %p140 = scmp.lt.s32.totalorder %s9, 4
    // Predicated region
    $region21: #{vgg16_forward.4} parent=5 // pred_check
      %p141 = pneg %p140
    $region22: #{vgg16_forward.4} parent=5 // pred_check_branch
      %143 = sbr.rel (%p141) target = $region24
    $region23: #{vgg16_forward.4} parent=5 // pred_region
      // Predicated region
      $region25: #{vgg16_forward.4} parent=23 // pred_check
        %p144 = pneg %p43
      $region26: #{vgg16_forward.4} parent=23 // pred_check_branch
        %146 = sbr.rel (%p144) target = $region28
      $region27: #{vgg16_forward.4} parent=23 // pred_region
        %s147 = smul.u32 8, %s17
        %p148 = scmp.lt.s32.totalorder %s16, 1
        %s149 = scalar_select %p148, %s16, 1
        %p150 = scmp.lt.s32.totalorder %s147, 15
        %s151 = scalar_select %p150, %s147, 15
        %s152 = smul.addr %s151, 2
        %s153 = smul.addr %s149, 32
        %s154 = sadd.s32 %s152, %s153
        %s155 = smul.addr %s154, 4
        %s156 = scalar_lea.vmem %s0, %s155
        %s157 = smul.u32 8, %s17
      $region28: #{vgg16_forward.4} parent=23 // pred_fallthru
        _
    $region24: #{vgg16_forward.4} parent=5 // pred_fallthru
      _
    %p158 = scmp.le.s32.totalorder 1, %s9
    %p159 = scmp.lt.s32.totalorder %s9, 5
    %p160 = pnand %p158, %p159
    %p161 = pneg %p160
    // Predicated region
    $region29: #{vgg16_forward.4} parent=5 // pred_check
      _
    $region30: #{vgg16_forward.4} parent=5 // pred_check_branch
      %163 = sbr.rel (%p160) target = $region32
    $region31: #{vgg16_forward.4} parent=5 // pred_region
      %s164 = ssub.s32 %s9, 1
      %s165 = smul.u32 8, %s19
      %p166 = scmp.lt.s32.totalorder %s18, 1
      %s167 = scalar_select %p166, %s18, 1
      %p168 = scmp.lt.s32.totalorder %s165, 15
      %s169 = scalar_select %p168, %s165, 15
      %s170 = smul.addr %s169, 2
      %s171 = smul.addr %s167, 32
      %s172 = sadd.s32 %s170, %s171
      %s173 = smul.addr %s172, 4
      %s174 = scalar_lea.vmem %s0, %s173
      %p175 = pneg %p49
      %p176 = pneg %p46
      %p177 = pneg %p70
      %p178 = pneg %p67
      %p179 = pneg %p91
      %p180 = pneg %p88
      %p181 = pneg %p119
      %p182 = pneg %p116
      %s183 = smul.u32 8, %s19
      %p184 = scmp.lt.s32.totalorder %s18, 1
      %s185 = scalar_select %p184, %s18, 1
      %p186 = scmp.lt.s32.totalorder %s183, 15
      %s187 = scalar_select %p186, %s183, 15
      %s188 = smul.addr %s187, 2
      %s189 = smul.addr %s185, 32
      %s190 = sadd.s32 %s188, %s189
      %s191 = smul.addr %s190, 4
      %s192 = scalar_lea.vmem %s3, %s191
      %s193 = smul.u32 8, %s19
      %p194 = scmp.lt.s32.totalorder %s18, 1
      %s195 = scalar_select %p194, %s18, 1
      %p196 = scmp.lt.s32.totalorder %s193, 15
      %s197 = scalar_select %p196, %s193, 15
      %s198 = smul.addr %s197, 2
      %s199 = smul.addr %s195, 32
      %s200 = sadd.s32 %s198, %s199
      %s201 = smul.addr %s200, 4
      %s202 = scalar_lea.vmem %s0, %s201
      %s203 = smul.u32 8, %s19
      %s204 = smul.u32 8, %s19
      %p205 = scmp.lt.s32.totalorder %s18, 1
      %s206 = scalar_select %p205, %s18, 1
      %p207 = scmp.lt.s32.totalorder %s204, 15
      %s208 = scalar_select %p207, %s204, 15
      %s209 = smul.addr %s208, 2
      %s210 = smul.addr %s206, 32
      %s211 = sadd.s32 %s209, %s210
      %s212 = smul.addr %s211, 4
      %s213 = scalar_lea.vmem %s3, %s212
      %s214 = smul.u32 8, %s19
      %v216 = vld [vmem:[%s202] sm:$0xf]
      %v217 = vld [vmem:[%s202 + $0x4] sm:$0xf]
      %v218 = vld [vmem:[%s202 + $0x8] sm:$0xf]
      %v219 = vld [vmem:[%s202 + $0xc] sm:$0xf]
      %v220 = vld [vmem:[%s202 + $0x10] sm:$0xf]
      %v221 = vld [vmem:[%s202 + $0x14] sm:$0xf]
      %v222 = vld [vmem:[%s202 + $0x18] sm:$0xf]
      %v223 = vld [vmem:[%s202 + $0x1c] sm:$0xf]
      %v224 = vld [vmem:[%s202 + $0x20] sm:$0xf]
      %v225 = vld [vmem:[%s202 + $0x24] sm:$0xf]
      %v226 = vld [vmem:[%s202 + $0x28] sm:$0xf]
      %v227 = vld [vmem:[%s202 + $0x2c] sm:$0xf]
      %v228 = vld [vmem:[%s202 + $0x30] sm:$0xf]
      %v229 = vld [vmem:[%s202 + $0x34] sm:$0xf]
      %v230 = vld [vmem:[%s202 + $0x38] sm:$0xf]
      %v231 = vld [vmem:[%s202 + $0x3c] sm:$0xf]
      %v232 = vld [vmem:[%s1] sm:$0xf]
      %v233 = vld [vmem:[%s1 + $0x4] sm:$0xf]
      %v234 = vld [vmem:[%s1 + $0x8] sm:$0xf]
      %v235 = vld [vmem:[%s1 + $0xc] sm:$0x3]
      %v236 = vld [vmem:[%s2] sm:$0x1]
      %v238 = vperm.slane %v236, 0
      %v256 = vunpack.c.l.b16 %v216
      %v257 = vunpack.c.l.b16 %v217
      %v258 = vunpack.c.l.b16 %v218
      %v259 = vunpack.c.l.b16 %v219
      %v260 = vunpack.c.l.b16 %v220
      %v261 = vunpack.c.l.b16 %v221
      %v262 = vunpack.c.l.b16 %v222
      %v263 = vunpack.c.l.b16 %v223
      %v264 = vunpack.c.l.b16 %v224
      %v265 = vunpack.c.l.b16 %v225
      %v266 = vunpack.c.l.b16 %v226
      %v267 = vunpack.c.l.b16 %v227
      %v268 = vunpack.c.l.b16 %v228
      %v269 = vunpack.c.l.b16 %v229
      %v270 = vunpack.c.l.b16 %v230
      %v271 = vunpack.c.l.b16 %v231
      %v272 = vpack.c.b16 %v257, %v256
      %v273 = vpack.c.b16 %v259, %v258
      %v274 = vpack.c.b16 %v261, %v260
      %v275 = vpack.c.b16 %v263, %v262
      %v276 = vpack.c.b16 %v265, %v264
      %v277 = vpack.c.b16 %v267, %v266
      %v278 = vpack.c.b16 %v269, %v268
      %v279 = vpack.c.b16 %v271, %v270
      %v284 = vunpack.c.l.b16 %v232
      %v285 = vunpack.c.l.b16 %v233
      %v286 = vunpack.c.l.b16 %v234
      %v287 = vunpack.c.l.b16 %v235
      %v288 = vpack.c.b16 %v285, %v284
      %v289 = vpack.c.b16 %v287, %v286
      %vm291 = vcmask 220160
      %v293 = vsel %vm291, %v272, 0
      %v296 = vsel %vm291, %v273, 0
      %v299 = vsel %vm291, %v274, 0
      %v302 = vsel %vm291, %v275, 0
      %v305 = vsel %vm291, %v276, 0
      %v308 = vsel %vm291, %v277, 0
      %v311 = vsel %vm291, %v278, 0
      %v314 = vsel %vm291, %v279, 0
      %vm316 = vcmask 1044480
      %vm317 = vcmask 1045504
      %v318 = vsel %vm316, 4294967295, 65535
      %v319 = vsel %vm317, %v318, 0
      %v321 = vand.u32 %v289, %v319
      %323 = vmatpush.bf16.msra.mxu0 0
      %324 = vmatpush.bf16.msra.mxu0 0
      %325 = vmatpush.bf16.msra.mxu0 0
      %326 = vmatpush.bf16.msra.mxu0 0
      %327 = vmatpush.bf16.msra.mxu0 0
      %328 = vmatpush.bf16.msra.mxu0 0
      %329 = vmatpush.bf16.msra.mxu0 %v321
      %330 = vmatpush.bf16.msra.mxu0 %v288
      %331 = vmatmul.bf16.gmra.mxu0 %v293
      %v332 = vpop.f32.mrf.mxu0
      %v333 = vadd.f32 %v238, %v332
      %v334 = vpop.f32.mrf.mxu0
      %v335 = vadd.f32 %v238, %v334
      %336 = vmatmul.bf16.gmra.mxu0 %v296
      %v337 = vpop.f32.mrf.mxu0
      %v338 = vadd.f32 %v238, %v337
      %v339 = vpop.f32.mrf.mxu0
      %v340 = vadd.f32 %v238, %v339
      %341 = vmatmul.bf16.gmra.mxu0 %v299
      %v342 = vpop.f32.mrf.mxu0
      %v343 = vadd.f32 %v238, %v342
      %v344 = vpop.f32.mrf.mxu0
      %v345 = vadd.f32 %v238, %v344
      %346 = vmatmul.bf16.gmra.mxu0 %v302
      %v347 = vpop.f32.mrf.mxu0
      %v348 = vadd.f32 %v238, %v347
      %v349 = vpop.f32.mrf.mxu0
      %v350 = vadd.f32 %v238, %v349
      %351 = vmatmul.bf16.gmra.mxu0 %v305
      %v352 = vpop.f32.mrf.mxu0
      %v353 = vadd.f32 %v238, %v352
      %v354 = vpop.f32.mrf.mxu0
      %v355 = vadd.f32 %v238, %v354
      %356 = vmatmul.bf16.gmra.mxu0 %v308
      %v357 = vpop.f32.mrf.mxu0
      %v358 = vadd.f32 %v238, %v357
      %v359 = vpop.f32.mrf.mxu0
      %v360 = vadd.f32 %v238, %v359
      %361 = vmatmul.bf16.gmra.mxu0 %v311
      %v362 = vpop.f32.mrf.mxu0
      %v363 = vadd.f32 %v238, %v362
      %v364 = vpop.f32.mrf.mxu0
      %v365 = vadd.f32 %v238, %v364
      %366 = vmatmul.bf16.gmra.mxu0 %v314
      %v367 = vpop.f32.mrf.mxu0
      %v368 = vadd.f32 %v238, %v367
      %v369 = vpop.f32.mrf.mxu0
      %v370 = vadd.f32 %v238, %v369
      %371 = vdwg.mxu0
      %v372 = vmax.f32 %v333, 0.0
      %v373 = vmax.f32 %v335, 0.0
      %v374 = vmax.f32 %v338, 0.0
      %v375 = vmax.f32 %v340, 0.0
      %v376 = vmax.f32 %v343, 0.0
      %v377 = vmax.f32 %v345, 0.0
      %v378 = vmax.f32 %v348, 0.0
      %v379 = vmax.f32 %v350, 0.0
      %v380 = vmax.f32 %v353, 0.0
      %v381 = vmax.f32 %v355, 0.0
      %v382 = vmax.f32 %v358, 0.0
      %v383 = vmax.f32 %v360, 0.0
      %v384 = vmax.f32 %v363, 0.0
      %v385 = vmax.f32 %v365, 0.0
      %v386 = vmax.f32 %v368, 0.0
      %v387 = vmax.f32 %v370, 0.0
      %v388 = vpack.c.bf16 %v372, %v372
      %v389 = vpack.c.bf16 %v373, %v373
      %v390 = vpack.c.bf16 %v374, %v374
      %v391 = vpack.c.bf16 %v375, %v375
      %v392 = vpack.c.bf16 %v376, %v376
      %v393 = vpack.c.bf16 %v377, %v377
      %v394 = vpack.c.bf16 %v378, %v378
      %v395 = vpack.c.bf16 %v379, %v379
      %v396 = vpack.c.bf16 %v380, %v380
      %v397 = vpack.c.bf16 %v381, %v381
      %v398 = vpack.c.bf16 %v382, %v382
      %v399 = vpack.c.bf16 %v383, %v383
      %v400 = vpack.c.bf16 %v384, %v384
      %v401 = vpack.c.bf16 %v385, %v385
      %v402 = vpack.c.bf16 %v386, %v386
      %v403 = vpack.c.bf16 %v387, %v387
      %vm404 = vcmask 519168
      %405 = vst.msk [vmem:[%s213] sm:$0xf] %vm404, %v388
      %406 = vst.msk [vmem:[%s213 + $0x4] sm:$0xf] %vm404, %v389
      %407 = vst.msk [vmem:[%s213 + $0x8] sm:$0xf] %vm404, %v390
      %408 = vst.msk [vmem:[%s213 + $0xc] sm:$0xf] %vm404, %v391
      %409 = vst.msk [vmem:[%s213 + $0x10] sm:$0xf] %vm404, %v392
      %410 = vst.msk [vmem:[%s213 + $0x14] sm:$0xf] %vm404, %v393
      %411 = vst.msk [vmem:[%s213 + $0x18] sm:$0xf] %vm404, %v394
      %412 = vst.msk [vmem:[%s213 + $0x1c] sm:$0xf] %vm404, %v395
      %413 = vst.msk [vmem:[%s213 + $0x20] sm:$0xf] %vm404, %v396
      %414 = vst.msk [vmem:[%s213 + $0x24] sm:$0xf] %vm404, %v397
      %415 = vst.msk [vmem:[%s213 + $0x28] sm:$0xf] %vm404, %v398
      %416 = vst.msk [vmem:[%s213 + $0x2c] sm:$0xf] %vm404, %v399
      %417 = vst.msk [vmem:[%s213 + $0x30] sm:$0xf] %vm404, %v400
      %418 = vst.msk [vmem:[%s213 + $0x34] sm:$0xf] %vm404, %v401
      %419 = vst.msk [vmem:[%s213 + $0x38] sm:$0xf] %vm404, %v402
      %420 = vst.msk [vmem:[%s213 + $0x3c] sm:$0xf] %vm404, %v403
      %s421 = smul.u32 8, %s19
      %p422 = scmp.lt.s32.totalorder %s18, 1
      %s423 = scalar_select %p422, %s18, 1
      %p424 = scmp.lt.s32.totalorder %s421, 15
      %s425 = scalar_select %p424, %s421, 15
      %s426 = smul.addr %s425, 2
      %s427 = smul.addr %s423, 32
      %s428 = sadd.s32 %s426, %s427
      %s429 = smul.addr %s428, 4
      %s430 = scalar_lea.vmem %s3, %s429
      // Predicated region
      $region33: #{vgg16_forward.4} parent=31 // pred_check
        %p431 = pneg %p116
      $region34: #{vgg16_forward.4} parent=31 // pred_check_branch
        %433 = sbr.rel (%p431) target = $region36
      $region35: #{vgg16_forward.4} parent=31 // pred_region
        %s434 = smul.u32 8, %s19
      $region36: #{vgg16_forward.4} parent=31 // pred_fallthru
        _
    $region32: #{vgg16_forward.4} parent=5 // pred_fallthru
      _
    %p435 = scmp.le.s32.totalorder 2, %s9
    // Predicated region
    $region37: #{vgg16_forward.4} parent=5 // pred_check
      %p436 = pneg %p435
    $region38: #{vgg16_forward.4} parent=5 // pred_check_branch
      %438 = sbr.rel (%p436) target = $region40
    $region39: #{vgg16_forward.4} parent=5 // pred_region
      %s439 = ssub.s32 %s9, 2
      // Predicated region
      $region41: #{vgg16_forward.4} parent=39 // pred_check
        %p440 = pneg %p122
      $region42: #{vgg16_forward.4} parent=39 // pred_check_branch
        %442 = sbr.rel (%p440) target = $region44
      $region43: #{vgg16_forward.4} parent=39 // pred_region
        %s443 = smul.u32 8, %s21
        %p444 = scmp.lt.s32.totalorder %s20, 1
        %s445 = scalar_select %p444, %s20, 1
        %p446 = scmp.lt.s32.totalorder %s443, 15
        %s447 = scalar_select %p446, %s443, 15
        %s448 = smul.addr %s447, 2
        %s449 = smul.addr %s445, 32
        %s450 = sadd.s32 %s448, %s449
        %s451 = smul.addr %s450, 4
        %s452 = scalar_lea.vmem %s3, %s451
      $region44: #{vgg16_forward.4} parent=39 // pred_fallthru
        _
    $region40: #{vgg16_forward.4} parent=5 // pred_fallthru
      _
  $region6: #{vgg16_forward.4} parent=0 // loop_footer
    %s13 = sadd.s32 1, %s9
  $region7: #{vgg16_forward.4} parent=0 // loop_footer_branch
    %8 = sbr.rel target = $region3
  $region8: #{vgg16_forward.4} parent=0 // loop_exit
    _

// kernel: vgg16_forward.6
$region0: #{vgg16_forward.6}
  #allocation0 [shape = 'u32[]', space=smem, size = 0x4, offset = 0x4, fixed_abs, tag = 'smem constant byte address 0x4 - core index']
  #allocation1 [shape = 'u32[72,128]{1,0:T(1,128)}', space=vmem, size = 0x9000, scoped, tag = 'internal scratch']
  %s0 = inlined_call_operand.vmem [shape: bf16[2,8,8,64], index: 0, kind: input, shape index: {}, may-alias: {0,1,2}]
  %s1 = inlined_call_operand.vmem [shape: bf16[2,8,8,64], index: 1, kind: input, shape index: {}, may-alias: {0,1,2}]
  %s2 = inlined_call_operand.vmem [shape: bf16[2,8,8,64], index: 2, kind: input, shape index: {}, may-alias: {0,1,2}]
  %s3 = inlined_call_operand.vmem [shape: bf16[576,128], index: 3, kind: input, shape index: {}]
  %s4 = inlined_call_operand.vmem [shape: f32[1,128], index: 4, kind: input, shape index: {}]
  %s5 = inlined_call_operand.vmem [shape: bf16[2,8,8,128], index: 5, kind: output, shape index: {}]
  %s6 = sld [smem:[#allocation0]]
  $region53: #{vgg16_forward.6} parent=0
    _
  %s8 = ssub.s32 1, %s6
  %s9 = scalar_select 0, %s8, %s6
  loop: start=0, step=1, limit=6
  $region2: #{vgg16_forward.6} parent=0 // loop_pre_header
    _
  $region3: #{vgg16_forward.6} parent=0 // loop_header
    %s11 = sphi 0, %s15
    %p12 = scmp.ge.s32.totalorder %s11, 6
    %s18 = sphi 0, %s30
    %s19 = sphi 0, %s26
    %s20 = sphi 0, %s18
    %s21 = sphi 0, %s19
    %s22 = sphi 0, %s20
    %s23 = sphi 0, %s21
    %s35 = sphi 0, %s37
    %s38 = sphi 0, %s35
    %s39 = sphi 0, %s38
    %s55 = sphi 0, %s39
    %s71 = sphi 0, %s73
    %s74 = sphi 0, %s71
    %s75 = sphi 0, %s74
    %s91 = sphi 0, %s75
    %s107 = sphi 0, %s109
    %s110 = sphi 0, %s107
    %s111 = sphi 0, %s110
    %s127 = sphi 0, %s111
    %s131 = sphi 0, %s131
    %s133 = sphi 0, %s131
    %s134 = sphi 0, %s133
    %s148 = sphi 0, %s134
    %s152 = sphi 0, %s152
    %s154 = sphi 0, %s152
    %s155 = sphi 0, %s154
    %s169 = sphi 0, %s155
    %s177 = sphi 0, %s179
    %s180 = sphi 0, %s177
    %s181 = sphi 0, %s180
    %s197 = sphi 0, %s181
  $region4: #{vgg16_forward.6} parent=0 // loop_header_branch
    %14 = sbr.rel (%p12) target = $region8
  $region5: #{vgg16_forward.6} parent=0 // loop_body
    %s16 = ssub.s32 %s11, 1
    %s17 = ssub.s32 %s11, 2
    %s24 = sadd.s32 1, %s19
    %p25 = scmp.ge.s32.totalorder %s24, 2
    %s26 = scalar_select %p25, 0, %s24
    %s27 = sadd.s32 1, %s18
    %s28 = scalar_select %p25, %s27, %s18
    %p29 = scmp.ge.s32.totalorder %s28, 2
    %s30 = scalar_select %p29, 0, %s28
    %s31 = ssub.s32 %s18, %s30
    %s32 = ssub.s32 %s19, %s26
    %s33 = sor.u32 %s31, %s32
    %p34 = scmp.eq.s32.totalorder %s33, 0
    %s36 = sadd.s32 %s35, 1
    %s37 = scalar_select %p34, %s35, %s36
    %p40 = pneg %p34
    %p41 = scmp.eq.s32.totalorder %s11, 3
    %p42 = por %p40, %p41
    %p43 = scmp.ne.s32.totalorder %s35, %s38
    %p44 = scmp.eq.s32.totalorder %s11, 0
    %p45 = por %p43, %p44
    %p46 = scmp.ne.s32.totalorder %s35, %s38
    %p47 = scmp.eq.s32.totalorder %s16, 3
    %p48 = por %p46, %p47
    %p49 = scmp.ne.s32.totalorder %s38, %s39
    %p50 = scmp.eq.s32.totalorder %s16, 0
    %p51 = por %p49, %p50
    %p52 = scmp.ne.s32.totalorder %s38, %s39
    %p53 = scmp.eq.s32.totalorder %s17, 3
    %p54 = por %p52, %p53
    %p56 = scmp.ne.s32.totalorder %s39, %s55
    %p57 = scmp.eq.s32.totalorder %s17, 0
    %p58 = por %p56, %p57
    %s59 = smul.u32 %s19, 4
    %s60 = ssub.s32 %s59, 1
    %p61 = scmp.gt.s32.totalorder %s60, 0
    %s62 = scalar_select %p61, %s60, 0
    %s63 = smul.u32 %s26, 4
    %s64 = ssub.s32 %s63, 1
    %p65 = scmp.gt.s32.totalorder %s64, 0
    %s66 = scalar_select %p65, %s64, 0
    %s67 = ssub.s32 %s18, %s30
    %s68 = ssub.s32 %s62, %s66
    %s69 = sor.u32 %s67, %s68
    %p70 = scmp.eq.s32.totalorder %s69, 0
    %s72 = sadd.s32 %s71, 1
    %s73 = scalar_select %p70, %s71, %s72
    %p76 = pneg %p70
    %p77 = scmp.eq.s32.totalorder %s11, 3
    %p78 = por %p76, %p77
    %p79 = scmp.ne.s32.totalorder %s71, %s74
    %p80 = scmp.eq.s32.totalorder %s11, 0
    %p81 = por %p79, %p80
    %p82 = scmp.ne.s32.totalorder %s71, %s74
    %p83 = scmp.eq.s32.totalorder %s16, 3
    %p84 = por %p82, %p83
    %p85 = scmp.ne.s32.totalorder %s74, %s75
    %p86 = scmp.eq.s32.totalorder %s16, 0
    %p87 = por %p85, %p86
    %p88 = scmp.ne.s32.totalorder %s74, %s75
    %p89 = scmp.eq.s32.totalorder %s17, 3
    %p90 = por %p88, %p89
    %p92 = scmp.ne.s32.totalorder %s75, %s91
    %p93 = scmp.eq.s32.totalorder %s17, 0
    %p94 = por %p92, %p93
    %s95 = smul.u32 %s19, 4
    %s96 = sadd.s32 %s95, 4
    %p97 = scmp.lt.s32.totalorder %s96, 7
    %s98 = scalar_select %p97, %s96, 7
    %s99 = smul.u32 %s26, 4
    %s100 = sadd.s32 %s99, 4
    %p101 = scmp.lt.s32.totalorder %s100, 7
    %s102 = scalar_select %p101, %s100, 7
    %s103 = ssub.s32 %s18, %s30
    %s104 = ssub.s32 %s98, %s102
    %s105 = sor.u32 %s103, %s104
    %p106 = scmp.eq.s32.totalorder %s105, 0
    %s108 = sadd.s32 %s107, 1
    %s109 = scalar_select %p106, %s107, %s108
    %p112 = pneg %p106
    %p113 = scmp.eq.s32.totalorder %s11, 3
    %p114 = por %p112, %p113
    %p115 = scmp.ne.s32.totalorder %s107, %s110
    %p116 = scmp.eq.s32.totalorder %s11, 0
    %p117 = por %p115, %p116
    %p118 = scmp.ne.s32.totalorder %s107, %s110
    %p119 = scmp.eq.s32.totalorder %s16, 3
    %p120 = por %p118, %p119
    %p121 = scmp.ne.s32.totalorder %s110, %s111
    %p122 = scmp.eq.s32.totalorder %s16, 0
    %p123 = por %p121, %p122
    %p124 = scmp.ne.s32.totalorder %s110, %s111
    %p125 = scmp.eq.s32.totalorder %s17, 3
    %p126 = por %p124, %p125
    %p128 = scmp.ne.s32.totalorder %s111, %s127
    %p129 = scmp.eq.s32.totalorder %s17, 0
    %p130 = por %p128, %p129
    %s132 = sadd.s32 %s131, 1
    %p135 = scmp.eq.s32.totalorder %s11, 3
    %p136 = scmp.ne.s32.totalorder %s131, %s133
    %p137 = scmp.eq.s32.totalorder %s11, 0
    %p138 = por %p136, %p137
    %p139 = scmp.ne.s32.totalorder %s131, %s133
    %p140 = scmp.eq.s32.totalorder %s16, 3
    %p141 = por %p139, %p140
    %p142 = scmp.ne.s32.totalorder %s133, %s134
    %p143 = scmp.eq.s32.totalorder %s16, 0
    %p144 = por %p142, %p143
    %p145 = scmp.ne.s32.totalorder %s133, %s134
    %p146 = scmp.eq.s32.totalorder %s17, 3
    %p147 = por %p145, %p146
    %p149 = scmp.ne.s32.totalorder %s134, %s148
    %p150 = scmp.eq.s32.totalorder %s17, 0
    %p151 = por %p149, %p150
    %s153 = sadd.s32 %s152, 1
    %p156 = scmp.eq.s32.totalorder %s11, 3
    %p157 = scmp.ne.s32.totalorder %s152, %s154
    %p158 = scmp.eq.s32.totalorder %s11, 0
    %p159 = por %p157, %p158
    %p160 = scmp.ne.s32.totalorder %s152, %s154
    %p161 = scmp.eq.s32.totalorder %s16, 3
    %p162 = por %p160, %p161
    %p163 = scmp.ne.s32.totalorder %s154, %s155
    %p164 = scmp.eq.s32.totalorder %s16, 0
    %p165 = por %p163, %p164
    %p166 = scmp.ne.s32.totalorder %s154, %s155
    %p167 = scmp.eq.s32.totalorder %s17, 3
    %p168 = por %p166, %p167
    %p170 = scmp.ne.s32.totalorder %s155, %s169
    %p171 = scmp.eq.s32.totalorder %s17, 0
    %p172 = por %p170, %p171
    %s173 = ssub.s32 %s18, %s30
    %s174 = ssub.s32 %s19, %s26
    %s175 = sor.u32 %s173, %s174
    %p176 = scmp.eq.s32.totalorder %s175, 0
    %s178 = sadd.s32 %s177, 1
    %s179 = scalar_select %p176, %s177, %s178
    %p182 = pneg %p176
    %p183 = scmp.eq.s32.totalorder %s11, 3
    %p184 = por %p182, %p183
    %p185 = scmp.ne.s32.totalorder %s177, %s180
    %p186 = scmp.eq.s32.totalorder %s11, 0
    %p187 = por %p185, %p186
    %p188 = scmp.ne.s32.totalorder %s177, %s180
    %p189 = scmp.eq.s32.totalorder %s16, 3
    %p190 = por %p188, %p189
    %p191 = scmp.ne.s32.totalorder %s180, %s181
    %p192 = scmp.eq.s32.totalorder %s16, 0
    %p193 = por %p191, %p192
    %p194 = scmp.ne.s32.totalorder %s180, %s181
    %p195 = scmp.eq.s32.totalorder %s17, 3
    %p196 = por %p194, %p195
    %p198 = scmp.ne.s32.totalorder %s181, %s197
    %p199 = scmp.eq.s32.totalorder %s17, 0
    %p200 = por %p198, %p199
    %p201 = scmp.le.s32.totalorder 1, %s11
    %p202 = scmp.lt.s32.totalorder %s11, 5
    %p203 = pnand %p201, %p202
    %p204 = pneg %p203
    // Predicated region
    $region9: #{vgg16_forward.6} parent=5 // pred_check
      _
    $region10: #{vgg16_forward.6} parent=5 // pred_check_branch
      %206 = sbr.rel (%p203) target = $region12
    $region11: #{vgg16_forward.6} parent=5 // pred_region
      %s207 = ssub.s32 %s11, 1
      // Predicated region
      $region13: #{vgg16_forward.6} parent=11 // pred_check
        %p208 = pneg %p144
      $region14: #{vgg16_forward.6} parent=11 // pred_check_branch
        %210 = sbr.rel (%p208) target = $region16
      $region15: #{vgg16_forward.6} parent=11 // pred_region
        _
      $region16: #{vgg16_forward.6} parent=11 // pred_fallthru
        _
      // Predicated region
      $region17: #{vgg16_forward.6} parent=11 // pred_check
        %p211 = pneg %p165
      $region18: #{vgg16_forward.6} parent=11 // pred_check_branch
        %213 = sbr.rel (%p211) target = $region20
      $region19: #{vgg16_forward.6} parent=11 // pred_region
        _
      $region20: #{vgg16_forward.6} parent=11 // pred_fallthru
        _
    $region12: #{vgg16_forward.6} parent=5 // pred_fallthru
      _
    %p214 = scmp.lt.s32.totalorder %s11, 4
    // Predicated region
    $region21: #{vgg16_forward.6} parent=5 // pred_check
      %p215 = pneg %p214
    $region22: #{vgg16_forward.6} parent=5 // pred_check_branch
      %217 = sbr.rel (%p215) target = $region24
    $region23: #{vgg16_forward.6} parent=5 // pred_region
      // Predicated region
      $region25: #{vgg16_forward.6} parent=23 // pred_check
        %p218 = pneg %p45
      $region26: #{vgg16_forward.6} parent=23 // pred_check_branch
        %220 = sbr.rel (%p218) target = $region28
      $region27: #{vgg16_forward.6} parent=23 // pred_region
        %s221 = smul.u32 4, %s19
        %p222 = scmp.lt.s32.totalorder %s18, 1
        %s223 = scalar_select %p222, %s18, 1
        %p224 = scmp.lt.s32.totalorder %s221, 7
        %s225 = scalar_select %p224, %s221, 7
        %s226 = smul.addr %s223, 8
        %s227 = sadd.s32 %s225, %s226
        %s228 = smul.addr %s227, 4
        %s229 = scalar_lea.vmem %s0, %s228
        %s230 = smul.u32 4, %s19
      $region28: #{vgg16_forward.6} parent=23 // pred_fallthru
        _
      // Predicated region
      $region29: #{vgg16_forward.6} parent=23 // pred_check
        %p231 = pneg %p81
      $region30: #{vgg16_forward.6} parent=23 // pred_check_branch
        %233 = sbr.rel (%p231) target = $region32
      $region31: #{vgg16_forward.6} parent=23 // pred_region
        %s234 = smul.u32 %s19, 4
        %s235 = ssub.s32 %s234, 1
        %p236 = scmp.gt.s32.totalorder %s235, 0
        %s237 = scalar_select %p236, %s235, 0
        %p238 = scmp.lt.s32.totalorder %s18, 1
        %s239 = scalar_select %p238, %s18, 1
        %p240 = scmp.lt.s32.totalorder %s237, 7
        %s241 = scalar_select %p240, %s237, 7
        %s242 = smul.addr %s239, 8
        %s243 = sadd.s32 %s241, %s242
        %s244 = smul.addr %s243, 4
        %s245 = scalar_lea.vmem %s1, %s244
        %s246 = smul.u32 %s19, 4
        %s247 = ssub.s32 %s246, 1
        %p248 = scmp.gt.s32.totalorder %s247, 0
        %s249 = scalar_select %p248, %s247, 0
      $region32: #{vgg16_forward.6} parent=23 // pred_fallthru
        _
      // Predicated region
      $region33: #{vgg16_forward.6} parent=23 // pred_check
        %p250 = pneg %p117
      $region34: #{vgg16_forward.6} parent=23 // pred_check_branch
        %252 = sbr.rel (%p250) target = $region36
      $region35: #{vgg16_forward.6} parent=23 // pred_region
        %s253 = smul.u32 %s19, 4
        %s254 = sadd.s32 %s253, 4
        %p255 = scmp.lt.s32.totalorder %s254, 7
        %s256 = scalar_select %p255, %s254, 7
        %p257 = scmp.lt.s32.totalorder %s18, 1
        %s258 = scalar_select %p257, %s18, 1
        %p259 = scmp.lt.s32.totalorder %s256, 7
        %s260 = scalar_select %p259, %s256, 7
        %s261 = smul.addr %s258, 8
        %s262 = sadd.s32 %s260, %s261
        %s263 = smul.addr %s262, 4
        %s264 = scalar_lea.vmem %s2, %s263
        %s265 = smul.u32 %s19, 4
        %s266 = sadd.s32 %s265, 4
        %p267 = scmp.lt.s32.totalorder %s266, 7
        %s268 = scalar_select %p267, %s266, 7
      $region36: #{vgg16_forward.6} parent=23 // pred_fallthru
        _
    $region24: #{vgg16_forward.6} parent=5 // pred_fallthru
      _
    %p269 = scmp.le.s32.totalorder 1, %s11
    %p270 = scmp.lt.s32.totalorder %s11, 5
    %p271 = pnand %p269, %p270
    %p272 = pneg %p271
    // Predicated region
    $region37: #{vgg16_forward.6} parent=5 // pred_check
      _
    $region38: #{vgg16_forward.6} parent=5 // pred_check_branch
      %274 = sbr.rel (%p271) target = $region40
    $region39: #{vgg16_forward.6} parent=5 // pred_region
      %s275 = ssub.s32 %s11, 1
      %s276 = smul.u32 4, %s21
      %p277 = scmp.lt.s32.totalorder %s20, 1
      %s278 = scalar_select %p277, %s20, 1
      %p279 = scmp.lt.s32.totalorder %s276, 7
      %s280 = scalar_select %p279, %s276, 7
      %s281 = smul.addr %s278, 8
      %s282 = sadd.s32 %s280, %s281
      %s283 = smul.addr %s282, 4
      %s284 = scalar_lea.vmem %s0, %s283
      %p285 = pneg %p51
      %p286 = pneg %p48
      %s287 = smul.u32 %s21, 4
      %s288 = ssub.s32 %s287, 1
      %p289 = scmp.gt.s32.totalorder %s288, 0
      %s290 = scalar_select %p289, %s288, 0
      %p291 = scmp.lt.s32.totalorder %s20, 1
      %s292 = scalar_select %p291, %s20, 1
      %p293 = scmp.lt.s32.totalorder %s290, 7
      %s294 = scalar_select %p293, %s290, 7
      %s295 = smul.addr %s292, 8
      %s296 = sadd.s32 %s294, %s295
      %s297 = smul.addr %s296, 4
      %s298 = scalar_lea.vmem %s1, %s297
      %p299 = pneg %p87
      %p300 = pneg %p84
      %s301 = smul.u32 %s21, 4
      %s302 = sadd.s32 %s301, 4
      %p303 = scmp.lt.s32.totalorder %s302, 7
      %s304 = scalar_select %p303, %s302, 7
      %p305 = scmp.lt.s32.totalorder %s20, 1
      %s306 = scalar_select %p305, %s20, 1
      %p307 = scmp.lt.s32.totalorder %s304, 7
      %s308 = scalar_select %p307, %s304, 7
      %s309 = smul.addr %s306, 8
      %s310 = sadd.s32 %s308, %s309
      %s311 = smul.addr %s310, 4
      %s312 = scalar_lea.vmem %s2, %s311
      %p313 = pneg %p123
      %p314 = pneg %p120
      %p315 = pneg %p144
      %p316 = pneg %p141
      %p317 = pneg %p165
      %p318 = pneg %p162
      %p319 = pneg %p193
      %p320 = pneg %p190
      %s321 = smul.u32 4, %s21
      %p322 = scmp.lt.s32.totalorder %s20, 1
      %s323 = scalar_select %p322, %s20, 1
      %p324 = scmp.lt.s32.totalorder %s321, 7
      %s325 = scalar_select %p324, %s321, 7
      %s326 = smul.addr %s323, 8
      %s327 = sadd.s32 %s325, %s326
      %s328 = smul.addr %s327, 4
      %s329 = scalar_lea.vmem %s5, %s328
      %s330 = smul.u32 4, %s21
      %p331 = scmp.lt.s32.totalorder %s20, 1
      %s332 = scalar_select %p331, %s20, 1
      %p333 = scmp.lt.s32.totalorder %s330, 7
      %s334 = scalar_select %p333, %s330, 7
      %s335 = smul.addr %s332, 8
      %s336 = sadd.s32 %s334, %s335
      %s337 = smul.addr %s336, 4
      %s338 = scalar_lea.vmem %s0, %s337
      %s339 = smul.u32 4, %s21
      %s340 = smul.u32 %s21, 4
      %s341 = ssub.s32 %s340, 1
      %p342 = scmp.gt.s32.totalorder %s341, 0
      %s343 = scalar_select %p342, %s341, 0
      %p344 = scmp.lt.s32.totalorder %s20, 1
      %s345 = scalar_select %p344, %s20, 1
      %p346 = scmp.lt.s32.totalorder %s343, 7
      %s347 = scalar_select %p346, %s343, 7
      %s348 = smul.addr %s345, 8
      %s349 = sadd.s32 %s347, %s348
      %s350 = smul.addr %s349, 4
      %s351 = scalar_lea.vmem %s1, %s350
      %s352 = smul.u32 %s21, 4
      %s353 = ssub.s32 %s352, 1
      %p354 = scmp.gt.s32.totalorder %s353, 0
      %s355 = scalar_select %p354, %s353, 0
      %s356 = smul.u32 %s21, 4
      %s357 = sadd.s32 %s356, 4
      %p358 = scmp.lt.s32.totalorder %s357, 7
      %s359 = scalar_select %p358, %s357, 7
      %p360 = scmp.lt.s32.totalorder %s20, 1
      %s361 = scalar_select %p360, %s20, 1
      %p362 = scmp.lt.s32.totalorder %s359, 7
      %s363 = scalar_select %p362, %s359, 7
      %s364 = smul.addr %s361, 8
      %s365 = sadd.s32 %s363, %s364
      %s366 = smul.addr %s365, 4
      %s367 = scalar_lea.vmem %s2, %s366
      %s368 = smul.u32 %s21, 4
      %s369 = sadd.s32 %s368, 4
      %p370 = scmp.lt.s32.totalorder %s369, 7
      %s371 = scalar_select %p370, %s369, 7
      %s372 = smul.u32 4, %s21
      %p373 = scmp.lt.s32.totalorder %s20, 1
      %s374 = scalar_select %p373, %s20, 1
      %p375 = scmp.lt.s32.totalorder %s372, 7
      %s376 = scalar_select %p375, %s372, 7
      %s377 = smul.addr %s374, 8
      %s378 = sadd.s32 %s376, %s377
      %s379 = smul.addr %s378, 4
      %s380 = scalar_lea.vmem %s5, %s379
      %s381 = smul.u32 4, %s21
      %v383 = vld [vmem:[%s351] sm:$0xf]
      %v384 = vld [vmem:[%s367] sm:$0xf]
      %p385 = scmp.eq.s32.totalorder %s21, 0
      %s386 = scalar_select %p385, 1, 0
      %v387 = vstv %s386
      %vm388 = vcmp.eq.s32.totalorder %v387, 1
      %v389 = vsel %vm388, 0, %v383
      %p390 = scmp.eq.s32.totalorder %s21, 1
      %s391 = scalar_select %p390, 1, 0
      %v392 = vstv %s391
      %vm393 = vcmp.eq.s32.totalorder %v392, 1
      %v394 = vsel %vm393, 0, %v384
      %v395 = vld [vmem:[%s338] sm:$0xf]
      %v396 = vld [vmem:[%s338 + $0x4] sm:$0xf]
      %v397 = vld [vmem:[%s338 + $0x8] sm:$0xf]
      %v398 = vld [vmem:[%s338 + $0xc] sm:$0xf]
      %v405 = vunpack.c.l.b16 %v389
      %v406 = vunpack.c.l.b16 %v395
      %v407 = vunpack.c.l.b16 %v396
      %v408 = vunpack.c.l.b16 %v397
      %v409 = vunpack.c.l.b16 %v398
      %v410 = vunpack.c.l.b16 %v394
      %v411 = vpack.c.b16 %v405, %v405
      %v412 = vpack.c.b16 %v406, %v406
      %v413 = vpack.c.b16 %v407, %v407
      %v414 = vpack.c.b16 %v408, %v408
      %v415 = vpack.c.b16 %v409, %v409
      %v416 = vpack.c.b16 %v410, %v410
      %v418 = vshrl.u32 %v411, 16
      %v420 = vrot.slane %v418, 7
      %v421 = vshll.u32 %v411, 16
      %v423 = vor.u32 %v420, %v421
      %v425 = vshrl.u32 %v412, 16
      %v427 = vrot.slane %v425, 7
      %v428 = vshll.u32 %v412, 16
      %v430 = vor.u32 %v427, %v428
      %v432 = vshrl.u32 %v413, 16
      %v434 = vrot.slane %v432, 7
      %v435 = vshll.u32 %v413, 16
      %v437 = vor.u32 %v434, %v435
      %v439 = vshrl.u32 %v414, 16
      %v441 = vrot.slane %v439, 7
      %v442 = vshll.u32 %v414, 16
      %v444 = vor.u32 %v441, %v442
      %v446 = vshrl.u32 %v415, 16
      %v448 = vrot.slane %v446, 7
      %v449 = vshll.u32 %v415, 16
      %v451 = vor.u32 %v448, %v449
      %v453 = vshrl.u32 %v416, 16
      %v455 = vrot.slane %v453, 7
      %v456 = vshll.u32 %v416, 16
      %v458 = vor.u32 %v455, %v456
      %vm465 = vcmask 1040384
      %vm466 = vsmask.f32 256
      %vm467 = vmand %vm465, %vm466
      %v468 = vsel %vm467, 0, %v423
      %v469 = vsel %vm467, 0, %v430
      %v470 = vsel %vm467, 0, %v437
      %v471 = vsel %vm467, 0, %v444
      %v472 = vsel %vm467, 0, %v451
      %v473 = vsel %vm467, 0, %v458
      %vm474 = vcmask 1044480
      %vm475 = vsmask.f32 4352
      %vm476 = vmand %vm474, %vm475
      %v477 = vsel %vm476, %v468, 0
      %v478 = vsel %vm476, %v469, 0
      %v479 = vsel %vm476, %v470, 0
      %v480 = vsel %vm476, %v471, 0
      %v481 = vsel %vm476, %v472, 0
      %v482 = vsel %vm476, %v473, 0
      %v487 = vunpack.c.l.b16 %v477
      %v488 = vunpack.c.h.b16 %v477
      %v489 = vunpack.c.l.b16 %v478
      %v490 = vunpack.c.h.b16 %v478
      %v491 = vunpack.c.l.b16 %v479
      %v492 = vunpack.c.h.b16 %v479
      %v493 = vunpack.c.l.b16 %v480
      %v494 = vunpack.c.h.b16 %v480
      %v495 = vpack.c.b16 %v487, %v487
      %v496 = vpack.c.b16 %v488, %v488
      %v497 = vpack.c.b16 %v489, %v489
      %v498 = vpack.c.b16 %v490, %v490
      %v499 = vpack.c.b16 %v491, %v491
      %v500 = vpack.c.b16 %v492, %v492
      %v501 = vpack.c.b16 %v493, %v493
      %v502 = vpack.c.b16 %v494, %v494
      %vm503 = vsmask.f32 3328
      %vm504 = vsmask.f32 7440
      %vm505 = vmor %vm503, %vm504
      %v507 = vshrl.u32 %v495, 16
      %v509 = vrot.slane %v507, 4
      %v510 = vshll.u32 %v495, 16
      %v512 = vrot.slane %v510, 5
      %v513 = vor.u32 %v509, %v512
      %v514 = vrot.slane %v513, 4
      %v516 = vshll.u32 %v496, 16
      %v518 = vrot.slane %v516, 5
      %v519 = vsel %vm505, %v514, %v518
      %v521 = vshrl.u32 %v497, 16
      %v523 = vrot.slane %v521, 4
      %v524 = vshll.u32 %v497, 16
      %v526 = vrot.slane %v524, 5
      %v527 = vor.u32 %v523, %v526
      %v528 = vrot.slane %v527, 4
      %v530 = vshll.u32 %v498, 16
      %v532 = vrot.slane %v530, 5
      %v533 = vsel %vm505, %v528, %v532
      %v535 = vshrl.u32 %v499, 16
      %v537 = vrot.slane %v535, 4
      %v538 = vshll.u32 %v499, 16
      %v540 = vrot.slane %v538, 5
      %v541 = vor.u32 %v537, %v540
      %v542 = vrot.slane %v541, 4
      %v544 = vshll.u32 %v500, 16
      %v546 = vrot.slane %v544, 5
      %v547 = vsel %vm505, %v542, %v546
      %v549 = vshrl.u32 %v501, 16
      %v551 = vrot.slane %v549, 4
      %v552 = vshll.u32 %v501, 16
      %v554 = vrot.slane %v552, 5
      %v555 = vor.u32 %v551, %v554
      %v556 = vrot.slane %v555, 4
      %v558 = vshll.u32 %v502, 16
      %v560 = vrot.slane %v558, 5
      %v561 = vsel %vm505, %v556, %v560
      %vm562 = vcmask 1042432
      %vm563 = vcmask 1046532
      %vm564 = vmor %vm562, %vm563
      %v565 = vrot.slane %v495, 5
      %v566 = vrot.slane %v565, 4
      %v567 = vrot.slane %v496, 5
      %v568 = vsel %vm564, %v566, %v567
      %v569 = vrot.slane %v497, 5
      %v570 = vrot.slane %v569, 4
      %v571 = vrot.slane %v498, 5
      %v572 = vsel %vm564, %v570, %v571
      %v573 = vrot.slane %v499, 5
      %v574 = vrot.slane %v573, 4
      %v575 = vrot.slane %v500, 5
      %v576 = vsel %vm564, %v574, %v575
      %v577 = vrot.slane %v501, 5
      %v578 = vrot.slane %v577, 4
      %v579 = vrot.slane %v502, 5
      %v580 = vsel %vm564, %v578, %v579
      %v582 = vunpack.c.l.b16 %v481
      %v583 = vunpack.c.h.b16 %v481
      %v584 = vpack.c.b16 %v582, %v582
      %v585 = vpack.c.b16 %v583, %v583
      %v587 = vshrl.u32 %v584, 16
      %v589 = vrot.slane %v587, 4
      %v590 = vshll.u32 %v584, 16
      %v592 = vrot.slane %v590, 5
      %v593 = vor.u32 %v589, %v592
      %v594 = vrot.slane %v593, 4
      %v596 = vshll.u32 %v585, 16
      %v598 = vrot.slane %v596, 5
      %v599 = vsel %vm505, %v594, %v598
      %v600 = vrot.slane %v584, 5
      %v601 = vrot.slane %v600, 4
      %v602 = vrot.slane %v585, 5
      %v603 = vsel %vm564, %v601, %v602
      %v605 = vunpack.c.l.b16 %v482
      %v606 = vunpack.c.h.b16 %v482
      %v607 = vpack.c.b16 %v605, %v605
      %v608 = vpack.c.b16 %v606, %v606
      %v610 = vshrl.u32 %v607, 16
      %v612 = vrot.slane %v610, 4
      %v613 = vshll.u32 %v607, 16
      %v615 = vrot.slane %v613, 5
      %v616 = vor.u32 %v612, %v615
      %v617 = vrot.slane %v616, 4
      %v619 = vshll.u32 %v608, 16
      %v621 = vrot.slane %v619, 5
      %v622 = vsel %vm505, %v617, %v621
      %v623 = vrot.slane %v607, 5
      %v624 = vrot.slane %v623, 4
      %v625 = vrot.slane %v608, 5
      %v626 = vsel %vm564, %v624, %v625
      %v627 = vpack.c.b16 %v489, %v487
      %v628 = vpack.c.b16 %v493, %v491
      %v629 = vunpack.c.l.b16 %v519
      %v630 = vunpack.c.l.b16 %v533
      %v631 = vunpack.c.l.b16 %v547
      %v632 = vunpack.c.l.b16 %v561
      %v633 = vpack.c.b16 %v630, %v629
      %v634 = vpack.c.b16 %v632, %v631
      %635 = vrot.lane.b32.xlu0 %v633, 64
      %v636 = vpop.permute.xlu0 %635
      %637 = vrot.lane.b32.xlu0 %v634, 64
      %v638 = vpop.permute.xlu0 %637
      %v639 = vunpack.c.l.b16 %v568
      %v640 = vunpack.c.l.b16 %v572
      %v641 = vunpack.c.l.b16 %v576
      %v642 = vunpack.c.l.b16 %v580
      %v643 = vpack.c.b16 %v640, %v639
      %v644 = vpack.c.b16 %v642, %v641
      %v645 = vpack.c.b16 %v491, %v489
      %v646 = vpack.c.b16 %v582, %v493
      %647 = vrot.lane.b32.xlu0 %v645, 64
      %v648 = vpop.permute.xlu0 %647
      %649 = vrot.lane.b32.xlu0 %v646, 64
      %v650 = vpop.permute.xlu0 %649
      %v651 = vunpack.c.l.b16 %v599
      %v652 = vpack.c.b16 %v631, %v630
      %v653 = vpack.c.b16 %v651, %v632
      %v654 = vunpack.c.l.b16 %v603
      %v655 = vpack.c.b16 %v641, %v640
      %v656 = vpack.c.b16 %v654, %v642
      %657 = vrot.lane.b32.xlu0 %v655, 64
      %v658 = vpop.permute.xlu0 %657
      %659 = vrot.lane.b32.xlu0 %v656, 64
      %v660 = vpop.permute.xlu0 %659
      %v661 = vpack.c.b16 %v605, %v582
      %v662 = vunpack.c.l.b16 %v622
      %v663 = vpack.c.b16 %v662, %v651
      %664 = vrot.lane.b32.xlu0 %v663, 64
      %v665 = vpop.permute.xlu0 %664
      %v666 = vunpack.c.l.b16 %v626
      %v667 = vpack.c.b16 %v666, %v654
      %vm668 = vcmask 523264
      %v671 = vsel %vm668, %v627, %v636
      %v675 = vsel %vm668, %v628, %v638
      %v679 = vsel %vm668, %v643, %v648
      %v683 = vsel %vm668, %v644, %v650
      %v687 = vsel %vm668, %v652, %v658
      %v691 = vsel %vm668, %v653, %v660
      %v695 = vsel %vm668, %v661, %v665
      %v697 = vld [vmem:[%s3] sm:$0xf]
      %v698 = vld [vmem:[%s3 + $0x4] sm:$0xf]
      %v699 = vld [vmem:[%s3 + $0x8] sm:$0xf]
      %v700 = vld [vmem:[%s3 + $0xc] sm:$0xf]
      %v701 = vld [vmem:[%s3 + $0x10] sm:$0xf]
      %v702 = vld [vmem:[%s3 + $0x14] sm:$0xf]
      %v703 = vld [vmem:[%s3 + $0x18] sm:$0xf]
      %v704 = vld [vmem:[%s3 + $0x1c] sm:$0xf]
      %v705 = vld [vmem:[%s3 + $0x20] sm:$0xf]
      %v706 = vld [vmem:[%s3 + $0x24] sm:$0xf]
      %v707 = vld [vmem:[%s3 + $0x28] sm:$0xf]
      %v708 = vld [vmem:[%s3 + $0x2c] sm:$0xf]
      %v709 = vld [vmem:[%s3 + $0x30] sm:$0xf]
      %v710 = vld [vmem:[%s3 + $0x34] sm:$0xf]
      %v711 = vld [vmem:[%s3 + $0x38] sm:$0xf]
      %v712 = vld [vmem:[%s3 + $0x3c] sm:$0xf]
      %v713 = vld [vmem:[%s3 + $0x40] sm:$0xf]
      %v714 = vld [vmem:[%s3 + $0x44] sm:$0xf]
      %v715 = vld [vmem:[%s3 + $0x48] sm:$0xf]
      %v716 = vld [vmem:[%s3 + $0x4c] sm:$0xf]
      %v717 = vld [vmem:[%s3 + $0x50] sm:$0xf]
      %v718 = vld [vmem:[%s3 + $0x54] sm:$0xf]
      %v719 = vld [vmem:[%s3 + $0x58] sm:$0xf]
      %v720 = vld [vmem:[%s3 + $0x5c] sm:$0xf]
      %v721 = vld [vmem:[%s3 + $0x60] sm:$0xf]
      %v722 = vld [vmem:[%s3 + $0x64] sm:$0xf]
      %v723 = vld [vmem:[%s3 + $0x68] sm:$0xf]
      %v724 = vld [vmem:[%s3 + $0x6c] sm:$0xf]
      %v725 = vld [vmem:[%s3 + $0x70] sm:$0xf]
      %v726 = vld [vmem:[%s3 + $0x74] sm:$0xf]
      %v727 = vld [vmem:[%s3 + $0x78] sm:$0xf]
      %v728 = vld [vmem:[%s3 + $0x7c] sm:$0xf]
      %v729 = vld [vmem:[%s3 + $0x80] sm:$0xf]
      %v730 = vld [vmem:[%s3 + $0x84] sm:$0xf]
      %v731 = vld [vmem:[%s3 + $0x88] sm:$0xf]
      %v732 = vld [vmem:[%s3 + $0x8c] sm:$0xf]
      %v733 = vld [vmem:[%s3 + $0x90] sm:$0xf]
      %v734 = vld [vmem:[%s3 + $0x94] sm:$0xf]
      %v735 = vld [vmem:[%s3 + $0x98] sm:$0xf]
      %v736 = vld [vmem:[%s3 + $0x9c] sm:$0xf]
      %v737 = vld [vmem:[%s3 + $0xa0] sm:$0xf]
      %v738 = vld [vmem:[%s3 + $0xa4] sm:$0xf]
      %v739 = vld [vmem:[%s3 + $0xa8] sm:$0xf]
      %v740 = vld [vmem:[%s3 + $0xac] sm:$0xf]
      %v741 = vld [vmem:[%s3 + $0xb0] sm:$0xf]
      %v742 = vld [vmem:[%s3 + $0xb4] sm:$0xf]
      %v743 = vld [vmem:[%s3 + $0xb8] sm:$0xf]
      %v744 = vld [vmem:[%s3 + $0xbc] sm:$0xf]
      %v745 = vld [vmem:[%s3 + $0xc0] sm:$0xf]
      %v746 = vld [vmem:[%s3 + $0xc4] sm:$0xf]
      %v747 = vld [vmem:[%s3 + $0xc8] sm:$0xf]
      %v748 = vld [vmem:[%s3 + $0xcc] sm:$0xf]
      %v749 = vld [vmem:[%s3 + $0xd0] sm:$0xf]
      %v750 = vld [vmem:[%s3 + $0xd4] sm:$0xf]
      %v751 = vld [vmem:[%s3 + $0xd8] sm:$0xf]
      %v752 = vld [vmem:[%s3 + $0xdc] sm:$0xf]
      %v753 = vld [vmem:[%s3 + $0xe0] sm:$0xf]
      %v754 = vld [vmem:[%s3 + $0xe4] sm:$0xf]
      %v755 = vld [vmem:[%s3 + $0xe8] sm:$0xf]
      %v756 = vld [vmem:[%s3 + $0xec] sm:$0xf]
      %v757 = vld [vmem:[%s3 + $0xf0] sm:$0xf]
      %v758 = vld [vmem:[%s3 + $0xf4] sm:$0xf]
      %v759 = vld [vmem:[%s3 + $0xf8] sm:$0xf]
      %v760 = vld [vmem:[%s3 + $0xfc] sm:$0xf]
      %v761 = vld [vmem:[%s3 + $0x100] sm:$0xf]
      %v762 = vld [vmem:[%s3 + $0x104] sm:$0xf]
      %v763 = vld [vmem:[%s3 + $0x108] sm:$0xf]
      %v764 = vld [vmem:[%s3 + $0x10c] sm:$0xf]
      %v765 = vld [vmem:[%s3 + $0x110] sm:$0xf]
      %v766 = vld [vmem:[%s3 + $0x114] sm:$0xf]
      %v767 = vld [vmem:[%s3 + $0x118] sm:$0xf]
      %v768 = vld [vmem:[%s3 + $0x11c] sm:$0xf]
      %v769 = vld [vmem:[%s4] sm:$0x1]
      %v771 = vperm.slane %v769, 0
      %v845 = vunpack.c.l.b16 %v697
      %v846 = vunpack.c.l.b16 %v698
      %v847 = vunpack.c.l.b16 %v699
      %v848 = vunpack.c.l.b16 %v700
      %v849 = vunpack.c.l.b16 %v701
      %v850 = vunpack.c.l.b16 %v702
      %v851 = vunpack.c.l.b16 %v703
      %v852 = vunpack.c.l.b16 %v704
      %v853 = vunpack.c.l.b16 %v705
      %v854 = vunpack.c.l.b16 %v706
      %v855 = vunpack.c.l.b16 %v707
      %v856 = vunpack.c.l.b16 %v708
      %v857 = vunpack.c.l.b16 %v709
      %v858 = vunpack.c.l.b16 %v710
      %v859 = vunpack.c.l.b16 %v711
      %v860 = vunpack.c.l.b16 %v712
      %v861 = vunpack.c.l.b16 %v713
      %v862 = vunpack.c.l.b16 %v714
      %v863 = vunpack.c.l.b16 %v715
      %v864 = vunpack.c.l.b16 %v716
      %v865 = vunpack.c.l.b16 %v717
      %v866 = vunpack.c.l.b16 %v718
      %v867 = vunpack.c.l.b16 %v719
      %v868 = vunpack.c.l.b16 %v720
      %v869 = vunpack.c.l.b16 %v721
      %v870 = vunpack.c.l.b16 %v722
      %v871 = vunpack.c.l.b16 %v723
      %v872 = vunpack.c.l.b16 %v724
      %v873 = vunpack.c.l.b16 %v725
      %v874 = vunpack.c.l.b16 %v726
      %v875 = vunpack.c.l.b16 %v727
      %v876 = vunpack.c.l.b16 %v728
      %v877 = vunpack.c.l.b16 %v729
      %v878 = vunpack.c.l.b16 %v730
      %v879 = vunpack.c.l.b16 %v731
      %v880 = vunpack.c.l.b16 %v732
      %v881 = vunpack.c.l.b16 %v733
      %v882 = vunpack.c.l.b16 %v734
      %v883 = vunpack.c.l.b16 %v735
      %v884 = vunpack.c.l.b16 %v736
      %v885 = vunpack.c.l.b16 %v737
      %v886 = vunpack.c.l.b16 %v738
      %v887 = vunpack.c.l.b16 %v739
      %v888 = vunpack.c.l.b16 %v740
      %v889 = vunpack.c.l.b16 %v741
      %v890 = vunpack.c.l.b16 %v742
      %v891 = vunpack.c.l.b16 %v743
      %v892 = vunpack.c.l.b16 %v744
      %v893 = vunpack.c.l.b16 %v745
      %v894 = vunpack.c.l.b16 %v746
      %v895 = vunpack.c.l.b16 %v747
      %v896 = vunpack.c.l.b16 %v748
      %v897 = vunpack.c.l.b16 %v749
      %v898 = vunpack.c.l.b16 %v750
      %v899 = vunpack.c.l.b16 %v751
      %v900 = vunpack.c.l.b16 %v752
      %v901 = vunpack.c.l.b16 %v753
      %v902 = vunpack.c.l.b16 %v754
      %v903 = vunpack.c.l.b16 %v755
      %v904 = vunpack.c.l.b16 %v756
      %v905 = vunpack.c.l.b16 %v757
      %v906 = vunpack.c.l.b16 %v758
      %v907 = vunpack.c.l.b16 %v759
      %v908 = vunpack.c.l.b16 %v760
      %v909 = vunpack.c.l.b16 %v761
      %v910 = vunpack.c.l.b16 %v762
      %v911 = vunpack.c.l.b16 %v763
      %v912 = vunpack.c.l.b16 %v764
      %v913 = vunpack.c.l.b16 %v765
      %v914 = vunpack.c.l.b16 %v766
      %v915 = vunpack.c.l.b16 %v767
      %v916 = vunpack.c.l.b16 %v768
      %v917 = vpack.c.b16 %v846, %v845
      %v918 = vpack.c.b16 %v848, %v847
      %v919 = vpack.c.b16 %v850, %v849
      %v920 = vpack.c.b16 %v852, %v851
      %v921 = vpack.c.b16 %v854, %v853
      %v922 = vpack.c.b16 %v856, %v855
      %v923 = vpack.c.b16 %v858, %v857
      %v924 = vpack.c.b16 %v860, %v859
      %v925 = vpack.c.b16 %v862, %v861
      %v926 = vpack.c.b16 %v864, %v863
      %v927 = vpack.c.b16 %v866, %v865
      %v928 = vpack.c.b16 %v868, %v867
      %v929 = vpack.c.b16 %v870, %v869
      %v930 = vpack.c.b16 %v872, %v871
      %v931 = vpack.c.b16 %v874, %v873
      %v932 = vpack.c.b16 %v876, %v875
      %v933 = vpack.c.b16 %v878, %v877
      %v934 = vpack.c.b16 %v880, %v879
      %v935 = vpack.c.b16 %v882, %v881
      %v936 = vpack.c.b16 %v884, %v883
      %v937 = vpack.c.b16 %v886, %v885
      %v938 = vpack.c.b16 %v888, %v887
      %v939 = vpack.c.b16 %v890, %v889
      %v940 = vpack.c.b16 %v892, %v891
      %v941 = vpack.c.b16 %v894, %v893
      %v942 = vpack.c.b16 %v896, %v895
      %v943 = vpack.c.b16 %v898, %v897
      %v944 = vpack.c.b16 %v900, %v899
      %v945 = vpack.c.b16 %v902, %v901
      %v946 = vpack.c.b16 %v904, %v903
      %v947 = vpack.c.b16 %v906, %v905
      %v948 = vpack.c.b16 %v908, %v907
      %v949 = vpack.c.b16 %v910, %v909
      %v950 = vpack.c.b16 %v912, %v911
      %v951 = vpack.c.b16 %v914, %v913
      %v952 = vpack.c.b16 %v916, %v915
      %v989 = vsel %vm668, %v644, 0
      %v992 = vsel %vm668, %v667, 0
      %994 = vmatpush.bf16.msra.mxu0 %v924
      %995 = vmatpush.bf16.msra.mxu0 %v923
      %996 = vmatpush.bf16.msra.mxu0 %v922
      %997 = vmatpush.bf16.msra.mxu0 %v921
      %998 = vmatpush.bf16.msra.mxu0 %v920
      %999 = vmatpush.bf16.msra.mxu0 %v919
      %1000 = vmatpush.bf16.msra.mxu0 %v918
      %1001 = vmatpush.bf16.msra.mxu0 %v917
      %1002 = vmatmul.bf16.gmra.mxu0 %v671
      %v1003 = vpop.f32.mrf.mxu0
      %v1004 = vadd.f32 %v771, %v1003
      %v1005 = vpop.f32.mrf.mxu0
      %v1006 = vadd.f32 %v771, %v1005
      %1007 = vmatmul.bf16.gmra.mxu0 %v675
      %v1008 = vpop.f32.mrf.mxu0
      %v1009 = vadd.f32 %v771, %v1008
      %v1010 = vpop.f32.mrf.mxu0
      %v1011 = vadd.f32 %v771, %v1010
      %1012 = vdwg.mxu0
      %1013 = vmatpush.bf16.msra.mxu0 %v932
      %1014 = vmatpush.bf16.msra.mxu0 %v931
      %1015 = vmatpush.bf16.msra.mxu0 %v930
      %1016 = vmatpush.bf16.msra.mxu0 %v929
      %1017 = vmatpush.bf16.msra.mxu0 %v928
      %1018 = vmatpush.bf16.msra.mxu0 %v927
      %1019 = vmatpush.bf16.msra.mxu0 %v926
      %1020 = vmatpush.bf16.msra.mxu0 %v925
      %1021 = vmatmul.bf16.gmra.mxu0 %v679
      %v1022 = vpop.f32.mrf.mxu0
      %v1023 = vadd.f32 %v1004, %v1022
      %v1024 = vpop.f32.mrf.mxu0
      %v1025 = vadd.f32 %v1006, %v1024
      %1026 = vmatmul.bf16.gmra.mxu0 %v683
      %v1027 = vpop.f32.mrf.mxu0
      %v1028 = vadd.f32 %v1009, %v1027
      %v1029 = vpop.f32.mrf.mxu0
      %v1030 = vadd.f32 %v1011, %v1029
      %1031 = vdwg.mxu0
      %1032 = vmatpush.bf16.msra.mxu0 %v940
      %1033 = vmatpush.bf16.msra.mxu0 %v939
      %1034 = vmatpush.bf16.msra.mxu0 %v938
      %1035 = vmatpush.bf16.msra.mxu0 %v937
      %1036 = vmatpush.bf16.msra.mxu0 %v936
      %1037 = vmatpush.bf16.msra.mxu0 %v935
      %1038 = vmatpush.bf16.msra.mxu0 %v934
      %1039 = vmatpush.bf16.msra.mxu0 %v933
      %1040 = vmatmul.bf16.gmra.mxu0 %v687
      %v1041 = vpop.f32.mrf.mxu0
      %v1042 = vadd.f32 %v1023, %v1041
      %v1043 = vpop.f32.mrf.mxu0
      %v1044 = vadd.f32 %v1025, %v1043
      %1045 = vmatmul.bf16.gmra.mxu0 %v691
      %v1046 = vpop.f32.mrf.mxu0
      %v1047 = vadd.f32 %v1028, %v1046
      %v1048 = vpop.f32.mrf.mxu0
      %v1049 = vadd.f32 %v1030, %v1048
      %1050 = vdwg.mxu0
      %1051 = vmatpush.bf16.msra.mxu0 %v948
      %1052 = vmatpush.bf16.msra.mxu0 %v947
      %1053 = vmatpush.bf16.msra.mxu0 %v946
      %1054 = vmatpush.bf16.msra.mxu0 %v945
      %1055 = vmatpush.bf16.msra.mxu0 %v944
      %1056 = vmatpush.bf16.msra.mxu0 %v943
      %1057 = vmatpush.bf16.msra.mxu0 %v942
      %1058 = vmatpush.bf16.msra.mxu0 %v941
      %1059 = vmatmul.bf16.gmra.mxu0 %v675
      %v1060 = vpop.f32.mrf.mxu0
      %v1061 = vadd.f32 %v1042, %v1060
      %v1062 = vpop.f32.mrf.mxu0
      %v1063 = vadd.f32 %v1044, %v1062
      %1064 = vmatmul.bf16.gmra.mxu0 %v695
      %v1065 = vpop.f32.mrf.mxu0
      %v1066 = vadd.f32 %v1047, %v1065
      %v1067 = vpop.f32.mrf.mxu0
      %v1068 = vadd.f32 %v1049, %v1067
      %1069 = vdwg.mxu0
      %1070 = vmatpush.bf16.msra.mxu0 0
      %1071 = vmatpush.bf16.msra.mxu0 0
      %1072 = vmatpush.bf16.msra.mxu0 0
      %1073 = vmatpush.bf16.msra.mxu0 0
      %1074 = vmatpush.bf16.msra.mxu0 %v952
      %1075 = vmatpush.bf16.msra.mxu0 %v951
      %1076 = vmatpush.bf16.msra.mxu0 %v950
      %1077 = vmatpush.bf16.msra.mxu0 %v949
      %1078 = vmatmul.bf16.gmra.mxu0 %v989
      %v1079 = vpop.f32.mrf.mxu0
      %v1080 = vadd.f32 %v1061, %v1079
      %v1081 = vpop.f32.mrf.mxu0
      %v1082 = vadd.f32 %v1063, %v1081
      %1083 = vmatmul.bf16.gmra.mxu0 %v992
      %v1084 = vpop.f32.mrf.mxu0
      %v1085 = vadd.f32 %v1066, %v1084
      %v1086 = vpop.f32.mrf.mxu0
      %v1087 = vadd.f32 %v1068, %v1086
      %1088 = vdwg.mxu0
      %v1089 = vmax.f32 %v1080, 0.0
      %v1090 = vmax.f32 %v1082, 0.0
      %v1091 = vmax.f32 %v1085, 0.0
      %v1092 = vmax.f32 %v1087, 0.0
      %v1093 = vpack.c.bf16 %v1089, %v1089
      %v1094 = vpack.c.bf16 %v1090, %v1090
      %v1095 = vpack.c.bf16 %v1091, %v1091
      %v1096 = vpack.c.bf16 %v1092, %v1092
      %1097 = vst [vmem:[%s380] sm:$0xf] %v1093
      %1098 = vst [vmem:[%s380 + $0x4] sm:$0xf] %v1094
      %1099 = vst [vmem:[%s380 + $0x8] sm:$0xf] %v1095
      %1100 = vst [vmem:[%s380 + $0xc] sm:$0xf] %v1096
      %s1101 = smul.u32 4, %s21
      %p1102 = scmp.lt.s32.totalorder %s20, 1
      %s1103 = scalar_select %p1102, %s20, 1
      %p1104 = scmp.lt.s32.totalorder %s1101, 7
      %s1105 = scalar_select %p1104, %s1101, 7
      %s1106 = smul.addr %s1103, 8
      %s1107 = sadd.s32 %s1105, %s1106
      %s1108 = smul.addr %s1107, 4
      %s1109 = scalar_lea.vmem %s5, %s1108
      // Predicated region
      $region41: #{vgg16_forward.6} parent=39 // pred_check
        %p1110 = pneg %p190
      $region42: #{vgg16_forward.6} parent=39 // pred_check_branch
        %1112 = sbr.rel (%p1110) target = $region44
      $region43: #{vgg16_forward.6} parent=39 // pred_region
        %s1113 = smul.u32 4, %s21
      $region44: #{vgg16_forward.6} parent=39 // pred_fallthru
        _
    $region40: #{vgg16_forward.6} parent=5 // pred_fallthru
      _
    %p1114 = scmp.le.s32.totalorder 2, %s11
    // Predicated region
    $region45: #{vgg16_forward.6} parent=5 // pred_check
      %p1115 = pneg %p1114
    $region46: #{vgg16_forward.6} parent=5 // pred_check_branch
      %1117 = sbr.rel (%p1115) target = $region48
    $region47: #{vgg16_forward.6} parent=5 // pred_region
      %s1118 = ssub.s32 %s11, 2
      // Predicated region
      $region49: #{vgg16_forward.6} parent=47 // pred_check
        %p1119 = pneg %p196
      $region50: #{vgg16_forward.6} parent=47 // pred_check_branch
        %1121 = sbr.rel (%p1119) target = $region52
      $region51: #{vgg16_forward.6} parent=47 // pred_region
        %s1122 = smul.u32 4, %s23
        %p1123 = scmp.lt.s32.totalorder %s22, 1
        %s1124 = scalar_select %p1123, %s22, 1
        %p1125 = scmp.lt.s32.totalorder %s1122, 7
        %s1126 = scalar_select %p1125, %s1122, 7
        %s1127 = smul.addr %s1124, 8
        %s1128 = sadd.s32 %s1126, %s1127
        %s1129 = smul.addr %s1128, 4
        %s1130 = scalar_lea.vmem %s5, %s1129
      $region52: #{vgg16_forward.6} parent=47 // pred_fallthru
        _
    $region48: #{vgg16_forward.6} parent=5 // pred_fallthru
      _
  $region6: #{vgg16_forward.6} parent=0 // loop_footer
    %s15 = sadd.s32 1, %s11
  $region7: #{vgg16_forward.6} parent=0 // loop_footer_branch
    %10 = sbr.rel target = $region3
  $region8: #{vgg16_forward.6} parent=0 // loop_exit
    _

// kernel: vgg16_forward.5
$region0: #{vgg16_forward.5}
  #allocation0 [shape = 'u32[]', space=smem, size = 0x4, offset = 0x4, fixed_abs, tag = 'smem constant byte address 0x4 - core index']
  #allocation1 [shape = 'u32[72,128]{1,0:T(1,128)}', space=vmem, size = 0x9000, scoped, tag = 'internal scratch']
  %s0 = inlined_call_operand.vmem [shape: bf16[2,16,16,64], index: 0, kind: input, shape index: {}, may-alias: {0,1,2}]
  %s1 = inlined_call_operand.vmem [shape: bf16[2,16,16,64], index: 1, kind: input, shape index: {}, may-alias: {0,1,2}]
  %s2 = inlined_call_operand.vmem [shape: bf16[2,16,16,64], index: 2, kind: input, shape index: {}, may-alias: {0,1,2}]
  %s3 = inlined_call_operand.vmem [shape: bf16[576,64], index: 3, kind: input, shape index: {}]
  %s4 = inlined_call_operand.vmem [shape: f32[1,64], index: 4, kind: input, shape index: {}]
  %s5 = inlined_call_operand.hbm [shape: f32[2,16,16,64], index: 5, kind: output, shape index: {0}]
  %s6 = inlined_call_operand.vmem [shape: bf16[2,8,8,64], index: 6, kind: output, shape index: {1}]
  %7 = xla_tuple %s5, %s6
  %s8 = sld [smem:[#allocation0]]
  $region61: #{vgg16_forward.5} parent=0
    _
  %s10 = ssub.s32 1, %s8
  %s11 = scalar_select 0, %s10, %s8
  $region1: #{vgg16_forward.5} parent=0
    #allocation2 [shape = 'u8[131072]{0}', space=vmem, size = 0x20000, scoped, tag = 'output window, operand 0']
    #allocation3 [shape = 's32[2]{0}', space=sflag, size = 0x8, scoped, tag = 'scoped memory for vgg16_forward.5']
    %12 = vsyncpa [#allocation3], 0
    %s13 = scalar_lea.sflag [#allocation3], 1
    %14 = vsyncpa %s13, 0
    loop: start=0, step=1, limit=6
    $region2: #{vgg16_forward.5} parent=1 // loop_pre_header
      _
    $region3: #{vgg16_forward.5} parent=1 // loop_header
      %s16 = sphi 0, %s20
      %p17 = scmp.ge.s32.totalorder %s16, 6
      %s23 = sphi 0, %s35
      %s24 = sphi 0, %s31
      %s25 = sphi 0, %s23
      %s26 = sphi 0, %s24
      %s27 = sphi 0, %s25
      %s28 = sphi 0, %s26
      %s40 = sphi 0, %s42
      %s43 = sphi 0, %s40
      %s44 = sphi 0, %s43
      %s60 = sphi 0, %s44
      %s76 = sphi 0, %s78
      %s79 = sphi 0, %s76
      %s80 = sphi 0, %s79
      %s96 = sphi 0, %s80
      %s112 = sphi 0, %s114
      %s115 = sphi 0, %s112
      %s116 = sphi 0, %s115
      %s132 = sphi 0, %s116
      %s136 = sphi 0, %s136
      %s138 = sphi 0, %s136
      %s139 = sphi 0, %s138
      %s153 = sphi 0, %s139
      %s157 = sphi 0, %s157
      %s159 = sphi 0, %s157
      %s160 = sphi 0, %s159
      %s174 = sphi 0, %s160
      %s182 = sphi 0, %s184
      %s185 = sphi 0, %s182
      %s186 = sphi 0, %s185
      %s202 = sphi 0, %s186
      %s210 = sphi 0, %s212
      %s213 = sphi 0, %s210
      %s214 = sphi 0, %s213
      %s230 = sphi 0, %s214
    $region4: #{vgg16_forward.5} parent=1 // loop_header_branch
      %19 = sbr.rel (%p17) target = $region8
    $region5: #{vgg16_forward.5} parent=1 // loop_body
      %s21 = ssub.s32 %s16, 1
      %s22 = ssub.s32 %s16, 2
      %s29 = sadd.s32 1, %s24
      %p30 = scmp.ge.s32.totalorder %s29, 2
      %s31 = scalar_select %p30, 0, %s29
      %s32 = sadd.s32 1, %s23
      %s33 = scalar_select %p30, %s32, %s23
      %p34 = scmp.ge.s32.totalorder %s33, 2
      %s35 = scalar_select %p34, 0, %s33
      %s36 = ssub.s32 %s23, %s35
      %s37 = ssub.s32 %s24, %s31
      %s38 = sor.u32 %s36, %s37
      %p39 = scmp.eq.s32.totalorder %s38, 0
      %s41 = sadd.s32 %s40, 1
      %s42 = scalar_select %p39, %s40, %s41
      %p45 = pneg %p39
      %p46 = scmp.eq.s32.totalorder %s16, 3
      %p47 = por %p45, %p46
      %p48 = scmp.ne.s32.totalorder %s40, %s43
      %p49 = scmp.eq.s32.totalorder %s16, 0
      %p50 = por %p48, %p49
      %p51 = scmp.ne.s32.totalorder %s40, %s43
      %p52 = scmp.eq.s32.totalorder %s21, 3
      %p53 = por %p51, %p52
      %p54 = scmp.ne.s32.totalorder %s43, %s44
      %p55 = scmp.eq.s32.totalorder %s21, 0
      %p56 = por %p54, %p55
      %p57 = scmp.ne.s32.totalorder %s43, %s44
      %p58 = scmp.eq.s32.totalorder %s22, 3
      %p59 = por %p57, %p58
      %p61 = scmp.ne.s32.totalorder %s44, %s60
      %p62 = scmp.eq.s32.totalorder %s22, 0
      %p63 = por %p61, %p62
      %s64 = smul.u32 %s24, 8
      %s65 = ssub.s32 %s64, 1
      %p66 = scmp.gt.s32.totalorder %s65, 0
      %s67 = scalar_select %p66, %s65, 0
      %s68 = smul.u32 %s31, 8
      %s69 = ssub.s32 %s68, 1
      %p70 = scmp.gt.s32.totalorder %s69, 0
      %s71 = scalar_select %p70, %s69, 0
      %s72 = ssub.s32 %s23, %s35
      %s73 = ssub.s32 %s67, %s71
      %s74 = sor.u32 %s72, %s73
      %p75 = scmp.eq.s32.totalorder %s74, 0
      %s77 = sadd.s32 %s76, 1
      %s78 = scalar_select %p75, %s76, %s77
      %p81 = pneg %p75
      %p82 = scmp.eq.s32.totalorder %s16, 3
      %p83 = por %p81, %p82
      %p84 = scmp.ne.s32.totalorder %s76, %s79
      %p85 = scmp.eq.s32.totalorder %s16, 0
      %p86 = por %p84, %p85
      %p87 = scmp.ne.s32.totalorder %s76, %s79
      %p88 = scmp.eq.s32.totalorder %s21, 3
      %p89 = por %p87, %p88
      %p90 = scmp.ne.s32.totalorder %s79, %s80
      %p91 = scmp.eq.s32.totalorder %s21, 0
      %p92 = por %p90, %p91
      %p93 = scmp.ne.s32.totalorder %s79, %s80
      %p94 = scmp.eq.s32.totalorder %s22, 3
      %p95 = por %p93, %p94
      %p97 = scmp.ne.s32.totalorder %s80, %s96
      %p98 = scmp.eq.s32.totalorder %s22, 0
      %p99 = por %p97, %p98
      %s100 = smul.u32 %s24, 8
      %s101 = sadd.s32 %s100, 8
      %p102 = scmp.lt.s32.totalorder %s101, 15
      %s103 = scalar_select %p102, %s101, 15
      %s104 = smul.u32 %s31, 8
      %s105 = sadd.s32 %s104, 8
      %p106 = scmp.lt.s32.totalorder %s105, 15
      %s107 = scalar_select %p106, %s105, 15
      %s108 = ssub.s32 %s23, %s35
      %s109 = ssub.s32 %s103, %s107
      %s110 = sor.u32 %s108, %s109
      %p111 = scmp.eq.s32.totalorder %s110, 0
      %s113 = sadd.s32 %s112, 1
      %s114 = scalar_select %p111, %s112, %s113
      %p117 = pneg %p111
      %p118 = scmp.eq.s32.totalorder %s16, 3
      %p119 = por %p117, %p118
      %p120 = scmp.ne.s32.totalorder %s112, %s115
      %p121 = scmp.eq.s32.totalorder %s16, 0
      %p122 = por %p120, %p121
      %p123 = scmp.ne.s32.totalorder %s112, %s115
      %p124 = scmp.eq.s32.totalorder %s21, 3
      %p125 = por %p123, %p124
      %p126 = scmp.ne.s32.totalorder %s115, %s116
      %p127 = scmp.eq.s32.totalorder %s21, 0
      %p128 = por %p126, %p127
      %p129 = scmp.ne.s32.totalorder %s115, %s116
      %p130 = scmp.eq.s32.totalorder %s22, 3
      %p131 = por %p129, %p130
      %p133 = scmp.ne.s32.totalorder %s116, %s132
      %p134 = scmp.eq.s32.totalorder %s22, 0
      %p135 = por %p133, %p134
      %s137 = sadd.s32 %s136, 1
      %p140 = scmp.eq.s32.totalorder %s16, 3
      %p141 = scmp.ne.s32.totalorder %s136, %s138
      %p142 = scmp.eq.s32.totalorder %s16, 0
      %p143 = por %p141, %p142
      %p144 = scmp.ne.s32.totalorder %s136, %s138
      %p145 = scmp.eq.s32.totalorder %s21, 3
      %p146 = por %p144, %p145
      %p147 = scmp.ne.s32.totalorder %s138, %s139
      %p148 = scmp.eq.s32.totalorder %s21, 0
      %p149 = por %p147, %p148
      %p150 = scmp.ne.s32.totalorder %s138, %s139
      %p151 = scmp.eq.s32.totalorder %s22, 3
      %p152 = por %p150, %p151
      %p154 = scmp.ne.s32.totalorder %s139, %s153
      %p155 = scmp.eq.s32.totalorder %s22, 0
      %p156 = por %p154, %p155
      %s158 = sadd.s32 %s157, 1
      %p161 = scmp.eq.s32.totalorder %s16, 3
      %p162 = scmp.ne.s32.totalorder %s157, %s159
      %p163 = scmp.eq.s32.totalorder %s16, 0
      %p164 = por %p162, %p163
      %p165 = scmp.ne.s32.totalorder %s157, %s159
      %p166 = scmp.eq.s32.totalorder %s21, 3
      %p167 = por %p165, %p166
      %p168 = scmp.ne.s32.totalorder %s159, %s160
      %p169 = scmp.eq.s32.totalorder %s21, 0
      %p170 = por %p168, %p169
      %p171 = scmp.ne.s32.totalorder %s159, %s160
      %p172 = scmp.eq.s32.totalorder %s22, 3
      %p173 = por %p171, %p172
      %p175 = scmp.ne.s32.totalorder %s160, %s174
      %p176 = scmp.eq.s32.totalorder %s22, 0
      %p177 = por %p175, %p176
      %s178 = ssub.s32 %s23, %s35
      %s179 = ssub.s32 %s24, %s31
      %s180 = sor.u32 %s178, %s179
      %p181 = scmp.eq.s32.totalorder %s180, 0
      %s183 = sadd.s32 %s182, 1
      %s184 = scalar_select %p181, %s182, %s183
      %p187 = pneg %p181
      %p188 = scmp.eq.s32.totalorder %s16, 3
      %p189 = por %p187, %p188
      %p190 = scmp.ne.s32.totalorder %s182, %s185
      %p191 = scmp.eq.s32.totalorder %s16, 0
      %p192 = por %p190, %p191
      %p193 = scmp.ne.s32.totalorder %s182, %s185
      %p194 = scmp.eq.s32.totalorder %s21, 3
      %p195 = por %p193, %p194
      %p196 = scmp.ne.s32.totalorder %s185, %s186
      %p197 = scmp.eq.s32.totalorder %s21, 0
      %p198 = por %p196, %p197
      %p199 = scmp.ne.s32.totalorder %s185, %s186
      %p200 = scmp.eq.s32.totalorder %s22, 3
      %p201 = por %p199, %p200
      %p203 = scmp.ne.s32.totalorder %s186, %s202
      %p204 = scmp.eq.s32.totalorder %s22, 0
      %p205 = por %p203, %p204
      %s206 = ssub.s32 %s23, %s35
      %s207 = ssub.s32 %s24, %s31
      %s208 = sor.u32 %s206, %s207
      %p209 = scmp.eq.s32.totalorder %s208, 0
      %s211 = sadd.s32 %s210, 1
      %s212 = scalar_select %p209, %s210, %s211
      %p215 = pneg %p209
      %p216 = scmp.eq.s32.totalorder %s16, 3
      %p217 = por %p215, %p216
      %p218 = scmp.ne.s32.totalorder %s210, %s213
      %p219 = scmp.eq.s32.totalorder %s16, 0
      %p220 = por %p218, %p219
      %p221 = scmp.ne.s32.totalorder %s210, %s213
      %p222 = scmp.eq.s32.totalorder %s21, 3
      %p223 = por %p221, %p222
      %p224 = scmp.ne.s32.totalorder %s213, %s214
      %p225 = scmp.eq.s32.totalorder %s21, 0
      %p226 = por %p224, %p225
      %p227 = scmp.ne.s32.totalorder %s213, %s214
      %p228 = scmp.eq.s32.totalorder %s22, 3
      %p229 = por %p227, %p228
      %p231 = scmp.ne.s32.totalorder %s214, %s230
      %p232 = scmp.eq.s32.totalorder %s22, 0
      %p233 = por %p231, %p232
      %p234 = scmp.le.s32.totalorder 1, %s16
      %p235 = scmp.lt.s32.totalorder %s16, 5
      %p236 = pnand %p234, %p235
      %p237 = pneg %p236
      // Predicated region
      $region9: #{vgg16_forward.5} parent=5 // pred_check
        _
      $region10: #{vgg16_forward.5} parent=5 // pred_check_branch
        %239 = sbr.rel (%p236) target = $region12
      $region11: #{vgg16_forward.5} parent=5 // pred_region
        %s240 = ssub.s32 %s16, 1
        // Predicated region
        $region13: #{vgg16_forward.5} parent=11 // pred_check
          %p241 = pneg %p149
        $region14: #{vgg16_forward.5} parent=11 // pred_check_branch
          %243 = sbr.rel (%p241) target = $region16
        $region15: #{vgg16_forward.5} parent=11 // pred_region
          _
        $region16: #{vgg16_forward.5} parent=11 // pred_fallthru
          _
        // Predicated region
        $region17: #{vgg16_forward.5} parent=11 // pred_check
          %p244 = pneg %p170
        $region18: #{vgg16_forward.5} parent=11 // pred_check_branch
          %246 = sbr.rel (%p244) target = $region20
        $region19: #{vgg16_forward.5} parent=11 // pred_region
          _
        $region20: #{vgg16_forward.5} parent=11 // pred_fallthru
          _
      $region12: #{vgg16_forward.5} parent=5 // pred_fallthru
        _
      %p247 = scmp.lt.s32.totalorder %s16, 4
      // Predicated region
      $region21: #{vgg16_forward.5} parent=5 // pred_check
        %p248 = pneg %p247
      $region22: #{vgg16_forward.5} parent=5 // pred_check_branch
        %250 = sbr.rel (%p248) target = $region24
      $region23: #{vgg16_forward.5} parent=5 // pred_region
        // Predicated region
        $region25: #{vgg16_forward.5} parent=23 // pred_check
          %p251 = pneg %p50
        $region26: #{vgg16_forward.5} parent=23 // pred_check_branch
          %253 = sbr.rel (%p251) target = $region28
        $region27: #{vgg16_forward.5} parent=23 // pred_region
          %s254 = smul.u32 8, %s24
          %p255 = scmp.lt.s32.totalorder %s23, 1
          %s256 = scalar_select %p255, %s23, 1
          %p257 = scmp.lt.s32.totalorder %s254, 15
          %s258 = scalar_select %p257, %s254, 15
          %s259 = smul.addr %s258, 2
          %s260 = smul.addr %s256, 32
          %s261 = sadd.s32 %s259, %s260
          %s262 = smul.addr %s261, 4
          %s263 = scalar_lea.vmem %s0, %s262
          %s264 = smul.u32 8, %s24
        $region28: #{vgg16_forward.5} parent=23 // pred_fallthru
          _
        // Predicated region
        $region29: #{vgg16_forward.5} parent=23 // pred_check
          %p265 = pneg %p86
        $region30: #{vgg16_forward.5} parent=23 // pred_check_branch
          %267 = sbr.rel (%p265) target = $region32
        $region31: #{vgg16_forward.5} parent=23 // pred_region
          %s268 = smul.u32 %s24, 8
          %s269 = ssub.s32 %s268, 1
          %p270 = scmp.gt.s32.totalorder %s269, 0
          %s271 = scalar_select %p270, %s269, 0
          %p272 = scmp.lt.s32.totalorder %s23, 1
          %s273 = scalar_select %p272, %s23, 1
          %p274 = scmp.lt.s32.totalorder %s271, 15
          %s275 = scalar_select %p274, %s271, 15
          %s276 = smul.addr %s275, 2
          %s277 = smul.addr %s273, 32
          %s278 = sadd.s32 %s276, %s277
          %s279 = smul.addr %s278, 4
          %s280 = scalar_lea.vmem %s1, %s279
          %s281 = smul.u32 %s24, 8
          %s282 = ssub.s32 %s281, 1
          %p283 = scmp.gt.s32.totalorder %s282, 0
          %s284 = scalar_select %p283, %s282, 0
        $region32: #{vgg16_forward.5} parent=23 // pred_fallthru
          _
        // Predicated region
        $region33: #{vgg16_forward.5} parent=23 // pred_check
          %p285 = pneg %p122
        $region34: #{vgg16_forward.5} parent=23 // pred_check_branch
          %287 = sbr.rel (%p285) target = $region36
        $region35: #{vgg16_forward.5} parent=23 // pred_region
          %s288 = smul.u32 %s24, 8
          %s289 = sadd.s32 %s288, 8
          %p290 = scmp.lt.s32.totalorder %s289, 15
          %s291 = scalar_select %p290, %s289, 15
          %p292 = scmp.lt.s32.totalorder %s23, 1
          %s293 = scalar_select %p292, %s23, 1
          %p294 = scmp.lt.s32.totalorder %s291, 15
          %s295 = scalar_select %p294, %s291, 15
          %s296 = smul.addr %s295, 2
          %s297 = smul.addr %s293, 32
          %s298 = sadd.s32 %s296, %s297
          %s299 = smul.addr %s298, 4
          %s300 = scalar_lea.vmem %s2, %s299
          %s301 = smul.u32 %s24, 8
          %s302 = sadd.s32 %s301, 8
          %p303 = scmp.lt.s32.totalorder %s302, 15
          %s304 = scalar_select %p303, %s302, 15
        $region36: #{vgg16_forward.5} parent=23 // pred_fallthru
          _
      $region24: #{vgg16_forward.5} parent=5 // pred_fallthru
        _
      %p305 = scmp.le.s32.totalorder 1, %s16
      %p306 = scmp.lt.s32.totalorder %s16, 5
      %p307 = pnand %p305, %p306
      %p308 = pneg %p307
      // Predicated region
      $region37: #{vgg16_forward.5} parent=5 // pred_check
        _
      $region38: #{vgg16_forward.5} parent=5 // pred_check_branch
        %310 = sbr.rel (%p307) target = $region40
      $region39: #{vgg16_forward.5} parent=5 // pred_region
        %s311 = ssub.s32 %s16, 1
        %s312 = smul.u32 8, %s26
        %p313 = scmp.lt.s32.totalorder %s25, 1
        %s314 = scalar_select %p313, %s25, 1
        %p315 = scmp.lt.s32.totalorder %s312, 15
        %s316 = scalar_select %p315, %s312, 15
        %s317 = smul.addr %s316, 2
        %s318 = smul.addr %s314, 32
        %s319 = sadd.s32 %s317, %s318
        %s320 = smul.addr %s319, 4
        %s321 = scalar_lea.vmem %s0, %s320
        %p322 = pneg %p56
        %p323 = pneg %p53
        %s324 = smul.u32 %s26, 8
        %s325 = ssub.s32 %s324, 1
        %p326 = scmp.gt.s32.totalorder %s325, 0
        %s327 = scalar_select %p326, %s325, 0
        %p328 = scmp.lt.s32.totalorder %s25, 1
        %s329 = scalar_select %p328, %s25, 1
        %p330 = scmp.lt.s32.totalorder %s327, 15
        %s331 = scalar_select %p330, %s327, 15
        %s332 = smul.addr %s331, 2
        %s333 = smul.addr %s329, 32
        %s334 = sadd.s32 %s332, %s333
        %s335 = smul.addr %s334, 4
        %s336 = scalar_lea.vmem %s1, %s335
        %p337 = pneg %p92
        %p338 = pneg %p89
        %s339 = smul.u32 %s26, 8
        %s340 = sadd.s32 %s339, 8
        %p341 = scmp.lt.s32.totalorder %s340, 15
        %s342 = scalar_select %p341, %s340, 15
        %p343 = scmp.lt.s32.totalorder %s25, 1
        %s344 = scalar_select %p343, %s25, 1
        %p345 = scmp.lt.s32.totalorder %s342, 15
        %s346 = scalar_select %p345, %s342, 15
        %s347 = smul.addr %s346, 2
        %s348 = smul.addr %s344, 32
        %s349 = sadd.s32 %s347, %s348
        %s350 = smul.addr %s349, 4
        %s351 = scalar_lea.vmem %s2, %s350
        %p352 = pneg %p128
        %p353 = pneg %p125
        %p354 = pneg %p149
        %p355 = pneg %p146
        %p356 = pneg %p170
        %p357 = pneg %p167
        %p358 = pneg %p198
        %p359 = pneg %p195
        %s360 = sand.u32 %s185, 1
        %s361 = scalar_lea.sflag [#allocation3], %s360
        %s362 = sand.u32 %s185, 1
        %s363 = smul.addr %s362, 128
        %s364 = scalar_lea.vmem [#allocation2], %s363
        %p365 = pneg %p226
        %p366 = pneg %p223
        %s367 = smul.u32 4, %s26
        %p368 = scmp.lt.s32.totalorder %s25, 1
        %s369 = scalar_select %p368, %s25, 1
        %p370 = scmp.lt.s32.totalorder %s367, 7
        %s371 = scalar_select %p370, %s367, 7
        %s372 = smul.addr %s369, 8
        %s373 = sadd.s32 %s371, %s372
        %s374 = smul.addr %s373, 4
        %s375 = scalar_lea.vmem %s6, %s374
        %s376 = smul.u32 8, %s26
        %p377 = scmp.lt.s32.totalorder %s25, 1
        %s378 = scalar_select %p377, %s25, 1
        %p379 = scmp.lt.s32.totalorder %s376, 15
        %s380 = scalar_select %p379, %s376, 15
        %s381 = smul.addr %s380, 2
        %s382 = smul.addr %s378, 32
        %s383 = sadd.s32 %s381, %s382
        %s384 = smul.addr %s383, 4
        %s385 = scalar_lea.vmem %s0, %s384
        %s386 = smul.u32 8, %s26
        %s387 = smul.u32 %s26, 8
        %s388 = ssub.s32 %s387, 1
        %p389 = scmp.gt.s32.totalorder %s388, 0
        %s390 = scalar_select %p389, %s388, 0
        %p391 = scmp.lt.s32.totalorder %s25, 1
        %s392 = scalar_select %p391, %s25, 1
        %p393 = scmp.lt.s32.totalorder %s390, 15
        %s394 = scalar_select %p393, %s390, 15
        %s395 = smul.addr %s394, 2
        %s396 = smul.addr %s392, 32
        %s397 = sadd.s32 %s395, %s396
        %s398 = smul.addr %s397, 4
        %s399 = scalar_lea.vmem %s1, %s398
        %s400 = smul.u32 %s26, 8
        %s401 = ssub.s32 %s400, 1
        %p402 = scmp.gt.s32.totalorder %s401, 0
        %s403 = scalar_select %p402, %s401, 0
        %s404 = smul.u32 %s26, 8
        %s405 = sadd.s32 %s404, 8
        %p406 = scmp.lt.s32.totalorder %s405, 15
        %s407 = scalar_select %p406, %s405, 15
        %p408 = scmp.lt.s32.totalorder %s25, 1
        %s409 = scalar_select %p408, %s25, 1
        %p410 = scmp.lt.s32.totalorder %s407, 15
        %s411 = scalar_select %p410, %s407, 15
        %s412 = smul.addr %s411, 2
        %s413 = smul.addr %s409, 32
        %s414 = sadd.s32 %s412, %s413
        %s415 = smul.addr %s414, 4
        %s416 = scalar_lea.vmem %s2, %s415
        %s417 = smul.u32 %s26, 8
        %s418 = sadd.s32 %s417, 8
        %p419 = scmp.lt.s32.totalorder %s418, 15
        %s420 = scalar_select %p419, %s418, 15
        %s421 = smul.u32 8, %s26
        %s422 = smul.u32 4, %s26
        %p423 = scmp.lt.s32.totalorder %s25, 1
        %s424 = scalar_select %p423, %s25, 1
        %p425 = scmp.lt.s32.totalorder %s422, 7
        %s426 = scalar_select %p425, %s422, 7
        %s427 = smul.addr %s424, 8
        %s428 = sadd.s32 %s426, %s427
        %s429 = smul.addr %s428, 4
        %s430 = scalar_lea.vmem %s6, %s429
        %s431 = smul.u32 4, %s26
        %v433 = vld [vmem:[%s399] sm:$0xf]
        %v434 = vld [vmem:[%s399 + $0x4] sm:$0xf]
        %v435 = vld [vmem:[%s416] sm:$0xf]
        %v436 = vld [vmem:[%s416 + $0x4] sm:$0xf]
        %p437 = scmp.eq.s32.totalorder %s26, 0
        %s438 = scalar_select %p437, 1, 0
        %v439 = vstv %s438
        %vm440 = vcmp.eq.s32.totalorder %v439, 1
        %v441 = vsel %vm440, 0, %v433
        %v442 = vsel %vm440, 0, %v434
        %p443 = scmp.eq.s32.totalorder %s26, 1
        %s444 = scalar_select %p443, 1, 0
        %v445 = vstv %s444
        %vm446 = vcmp.eq.s32.totalorder %v445, 1
        %v447 = vsel %vm446, 0, %v435
        %v448 = vsel %vm446, 0, %v436
        %v449 = vld [vmem:[%s385] sm:$0xf]
        %v450 = vld [vmem:[%s385 + $0x4] sm:$0xf]
        %v451 = vld [vmem:[%s385 + $0x8] sm:$0xf]
        %v452 = vld [vmem:[%s385 + $0xc] sm:$0xf]
        %v453 = vld [vmem:[%s385 + $0x10] sm:$0xf]
        %v454 = vld [vmem:[%s385 + $0x14] sm:$0xf]
        %v455 = vld [vmem:[%s385 + $0x18] sm:$0xf]
        %v456 = vld [vmem:[%s385 + $0x1c] sm:$0xf]
        %v457 = vld [vmem:[%s385 + $0x20] sm:$0xf]
        %v458 = vld [vmem:[%s385 + $0x24] sm:$0xf]
        %v459 = vld [vmem:[%s385 + $0x28] sm:$0xf]
        %v460 = vld [vmem:[%s385 + $0x2c] sm:$0xf]
        %v461 = vld [vmem:[%s385 + $0x30] sm:$0xf]
        %v462 = vld [vmem:[%s385 + $0x34] sm:$0xf]
        %v463 = vld [vmem:[%s385 + $0x38] sm:$0xf]
        %v464 = vld [vmem:[%s385 + $0x3c] sm:$0xf]
        %v485 = vunpack.c.l.b16 %v441
        %v486 = vunpack.c.l.b16 %v442
        %v487 = vunpack.c.l.b16 %v449
        %v488 = vunpack.c.l.b16 %v450
        %v489 = vunpack.c.l.b16 %v451
        %v490 = vunpack.c.l.b16 %v452
        %v491 = vunpack.c.l.b16 %v453
        %v492 = vunpack.c.l.b16 %v454
        %v493 = vunpack.c.l.b16 %v455
        %v494 = vunpack.c.l.b16 %v456
        %v495 = vunpack.c.l.b16 %v457
        %v496 = vunpack.c.l.b16 %v458
        %v497 = vunpack.c.l.b16 %v459
        %v498 = vunpack.c.l.b16 %v460
        %v499 = vunpack.c.l.b16 %v461
        %v500 = vunpack.c.l.b16 %v462
        %v501 = vunpack.c.l.b16 %v463
        %v502 = vunpack.c.l.b16 %v464
        %v503 = vunpack.c.l.b16 %v447
        %v504 = vunpack.c.l.b16 %v448
        %v505 = vpack.c.b16 %v486, %v485
        %v506 = vpack.c.b16 %v488, %v487
        %v507 = vpack.c.b16 %v490, %v489
        %v508 = vpack.c.b16 %v492, %v491
        %v509 = vpack.c.b16 %v494, %v493
        %v510 = vpack.c.b16 %v496, %v495
        %v511 = vpack.c.b16 %v498, %v497
        %v512 = vpack.c.b16 %v500, %v499
        %v513 = vpack.c.b16 %v502, %v501
        %v514 = vpack.c.b16 %v504, %v503
        %v516 = vshrl.u32 %v505, 16
        %v518 = vrot.slane %v516, 7
        %v519 = vshll.u32 %v505, 16
        %v521 = vor.u32 %v518, %v519
        %v523 = vshrl.u32 %v506, 16
        %v525 = vrot.slane %v523, 7
        %v526 = vshll.u32 %v506, 16
        %v528 = vor.u32 %v525, %v526
        %v530 = vshrl.u32 %v507, 16
        %v532 = vrot.slane %v530, 7
        %v533 = vshll.u32 %v507, 16
        %v535 = vor.u32 %v532, %v533
        %v537 = vshrl.u32 %v508, 16
        %v539 = vrot.slane %v537, 7
        %v540 = vshll.u32 %v508, 16
        %v542 = vor.u32 %v539, %v540
        %v544 = vshrl.u32 %v509, 16
        %v546 = vrot.slane %v544, 7
        %v547 = vshll.u32 %v509, 16
        %v549 = vor.u32 %v546, %v547
        %v551 = vshrl.u32 %v510, 16
        %v553 = vrot.slane %v551, 7
        %v554 = vshll.u32 %v510, 16
        %v556 = vor.u32 %v553, %v554
        %v558 = vshrl.u32 %v511, 16
        %v560 = vrot.slane %v558, 7
        %v561 = vshll.u32 %v511, 16
        %v563 = vor.u32 %v560, %v561
        %v565 = vshrl.u32 %v512, 16
        %v567 = vrot.slane %v565, 7
        %v568 = vshll.u32 %v512, 16
        %v570 = vor.u32 %v567, %v568
        %v572 = vshrl.u32 %v513, 16
        %v574 = vrot.slane %v572, 7
        %v575 = vshll.u32 %v513, 16
        %v577 = vor.u32 %v574, %v575
        %v579 = vshrl.u32 %v514, 16
        %v581 = vrot.slane %v579, 7
        %v582 = vshll.u32 %v514, 16
        %v584 = vor.u32 %v581, %v582
        %vm605 = vcmask 1040384
        %vm606 = vsmask.f32 256
        %vm607 = vmand %vm605, %vm606
        %v608 = vsel %vm607, 0, %v521
        %v609 = vsel %vm607, 0, %v528
        %v610 = vsel %vm607, 0, %v535
        %v611 = vsel %vm607, 0, %v542
        %v612 = vsel %vm607, 0, %v549
        %v613 = vsel %vm607, 0, %v556
        %v614 = vsel %vm607, 0, %v563
        %v615 = vsel %vm607, 0, %v570
        %v616 = vsel %vm607, 0, %v577
        %v617 = vsel %vm607, 0, %v584
        %v618 = vsel %vm607, %v518, 0
        %v619 = vsel %vm607, %v525, 0
        %v620 = vsel %vm607, %v532, 0
        %v621 = vsel %vm607, %v539, 0
        %v622 = vsel %vm607, %v546, 0
        %v623 = vsel %vm607, %v553, 0
        %v624 = vsel %vm607, %v560, 0
        %v625 = vsel %vm607, %v567, 0
        %v626 = vsel %vm607, %v574, 0
        %v627 = vsel %vm607, %v581, 0
        %vm628 = vsmask.f32 7424
        %v630 = vshrl.u32 %v608, 16
        %v632 = vshll.u32 %v608, 16
        %v634 = vrot.slane %v632, 1
        %v635 = vor.u32 %v630, %v634
        %v637 = vshll.u32 %v618, 16
        %v639 = vrot.slane %v637, 1
        %v640 = vsel %vm628, %v635, %v639
        %v642 = vshrl.u32 %v609, 16
        %v644 = vshll.u32 %v609, 16
        %v646 = vrot.slane %v644, 1
        %v647 = vor.u32 %v642, %v646
        %v649 = vshll.u32 %v619, 16
        %v651 = vrot.slane %v649, 1
        %v652 = vsel %vm628, %v647, %v651
        %v654 = vshrl.u32 %v610, 16
        %v656 = vshll.u32 %v610, 16
        %v658 = vrot.slane %v656, 1
        %v659 = vor.u32 %v654, %v658
        %v661 = vshll.u32 %v620, 16
        %v663 = vrot.slane %v661, 1
        %v664 = vsel %vm628, %v659, %v663
        %v666 = vshrl.u32 %v611, 16
        %v668 = vshll.u32 %v611, 16
        %v670 = vrot.slane %v668, 1
        %v671 = vor.u32 %v666, %v670
        %v673 = vshll.u32 %v621, 16
        %v675 = vrot.slane %v673, 1
        %v676 = vsel %vm628, %v671, %v675
        %v678 = vshrl.u32 %v612, 16
        %v680 = vshll.u32 %v612, 16
        %v682 = vrot.slane %v680, 1
        %v683 = vor.u32 %v678, %v682
        %v685 = vshll.u32 %v622, 16
        %v687 = vrot.slane %v685, 1
        %v688 = vsel %vm628, %v683, %v687
        %v690 = vshrl.u32 %v613, 16
        %v692 = vshll.u32 %v613, 16
        %v694 = vrot.slane %v692, 1
        %v695 = vor.u32 %v690, %v694
        %v697 = vshll.u32 %v623, 16
        %v699 = vrot.slane %v697, 1
        %v700 = vsel %vm628, %v695, %v699
        %v702 = vshrl.u32 %v614, 16
        %v704 = vshll.u32 %v614, 16
        %v706 = vrot.slane %v704, 1
        %v707 = vor.u32 %v702, %v706
        %v709 = vshll.u32 %v624, 16
        %v711 = vrot.slane %v709, 1
        %v712 = vsel %vm628, %v707, %v711
        %v714 = vshrl.u32 %v615, 16
        %v716 = vshll.u32 %v615, 16
        %v718 = vrot.slane %v716, 1
        %v719 = vor.u32 %v714, %v718
        %v721 = vshll.u32 %v625, 16
        %v723 = vrot.slane %v721, 1
        %v724 = vsel %vm628, %v719, %v723
        %vm741 = vcmask 1046528
        %v742 = vrot.slane %v608, 1
        %v743 = vrot.slane %v618, 1
        %v744 = vsel %vm741, %v742, %v743
        %v745 = vrot.slane %v609, 1
        %v746 = vrot.slane %v619, 1
        %v747 = vsel %vm741, %v745, %v746
        %v748 = vrot.slane %v610, 1
        %v749 = vrot.slane %v620, 1
        %v750 = vsel %vm741, %v748, %v749
        %v751 = vrot.slane %v611, 1
        %v752 = vrot.slane %v621, 1
        %v753 = vsel %vm741, %v751, %v752
        %v754 = vrot.slane %v612, 1
        %v755 = vrot.slane %v622, 1
        %v756 = vsel %vm741, %v754, %v755
        %v757 = vrot.slane %v613, 1
        %v758 = vrot.slane %v623, 1
        %v759 = vsel %vm741, %v757, %v758
        %v760 = vrot.slane %v614, 1
        %v761 = vrot.slane %v624, 1
        %v762 = vsel %vm741, %v760, %v761
        %v763 = vrot.slane %v615, 1
        %v764 = vrot.slane %v625, 1
        %v765 = vsel %vm741, %v763, %v764
        %v767 = vshrl.u32 %v616, 16
        %v769 = vshll.u32 %v616, 16
        %v771 = vrot.slane %v769, 1
        %v772 = vor.u32 %v767, %v771
        %v774 = vshll.u32 %v626, 16
        %v776 = vrot.slane %v774, 1
        %v777 = vsel %vm628, %v772, %v776
        %v780 = vrot.slane %v616, 1
        %v781 = vrot.slane %v626, 1
        %v782 = vsel %vm741, %v780, %v781
        %v784 = vshrl.u32 %v617, 16
        %v786 = vshll.u32 %v617, 16
        %v788 = vrot.slane %v786, 1
        %v789 = vor.u32 %v784, %v788
        %v791 = vshll.u32 %v627, 16
        %v793 = vrot.slane %v791, 1
        %v794 = vsel %vm628, %v789, %v793
        %v797 = vrot.slane %v617, 1
        %v798 = vrot.slane %v627, 1
        %v799 = vsel %vm741, %v797, %v798
        %800 = vrot.lane.b32.xlu0 %v640, 64
        %v801 = vpop.permute.xlu0 %800
        %802 = vrot.lane.b32.xlu0 %v652, 64
        %v803 = vpop.permute.xlu0 %802
        %804 = vrot.lane.b32.xlu0 %v664, 64
        %v805 = vpop.permute.xlu0 %804
        %806 = vrot.lane.b32.xlu0 %v676, 64
        %v807 = vpop.permute.xlu0 %806
        %808 = vrot.lane.b32.xlu0 %v688, 64
        %v809 = vpop.permute.xlu0 %808
        %810 = vrot.lane.b32.xlu0 %v700, 64
        %v811 = vpop.permute.xlu0 %810
        %812 = vrot.lane.b32.xlu0 %v712, 64
        %v813 = vpop.permute.xlu0 %812
        %814 = vrot.lane.b32.xlu0 %v724, 64
        %v815 = vpop.permute.xlu0 %814
        %816 = vrot.lane.b32.xlu0 %v609, 64
        %v817 = vpop.permute.xlu0 %816
        %818 = vrot.lane.b32.xlu0 %v610, 64
        %v819 = vpop.permute.xlu0 %818
        %820 = vrot.lane.b32.xlu0 %v611, 64
        %v821 = vpop.permute.xlu0 %820
        %822 = vrot.lane.b32.xlu0 %v612, 64
        %v823 = vpop.permute.xlu0 %822
        %824 = vrot.lane.b32.xlu0 %v613, 64
        %v825 = vpop.permute.xlu0 %824
        %826 = vrot.lane.b32.xlu0 %v614, 64
        %v827 = vpop.permute.xlu0 %826
        %828 = vrot.lane.b32.xlu0 %v615, 64
        %v829 = vpop.permute.xlu0 %828
        %830 = vrot.lane.b32.xlu0 %v616, 64
        %v831 = vpop.permute.xlu0 %830
        %832 = vrot.lane.b32.xlu0 %v747, 64
        %v833 = vpop.permute.xlu0 %832
        %834 = vrot.lane.b32.xlu0 %v750, 64
        %v835 = vpop.permute.xlu0 %834
        %836 = vrot.lane.b32.xlu0 %v753, 64
        %v837 = vpop.permute.xlu0 %836
        %838 = vrot.lane.b32.xlu0 %v756, 64
        %v839 = vpop.permute.xlu0 %838
        %840 = vrot.lane.b32.xlu0 %v759, 64
        %v841 = vpop.permute.xlu0 %840
        %842 = vrot.lane.b32.xlu0 %v762, 64
        %v843 = vpop.permute.xlu0 %842
        %844 = vrot.lane.b32.xlu0 %v765, 64
        %v845 = vpop.permute.xlu0 %844
        %846 = vrot.lane.b32.xlu0 %v782, 64
        %v847 = vpop.permute.xlu0 %846
        %848 = vrot.lane.b32.xlu0 %v777, 64
        %v849 = vpop.permute.xlu0 %848
        %850 = vrot.lane.b32.xlu0 %v794, 64
        %v851 = vpop.permute.xlu0 %850
        %vm852 = vcmask 523264
        %v854 = vsel %vm852, %v608, %v801
        %v857 = vsel %vm852, %v609, %v803
        %v860 = vsel %vm852, %v610, %v805
        %v863 = vsel %vm852, %v611, %v807
        %v866 = vsel %vm852, %v612, %v809
        %v869 = vsel %vm852, %v613, %v811
        %v872 = vsel %vm852, %v614, %v813
        %v875 = vsel %vm852, %v615, %v815
        %v879 = vsel %vm852, %v744, %v817
        %v883 = vsel %vm852, %v747, %v819
        %v887 = vsel %vm852, %v750, %v821
        %v891 = vsel %vm852, %v753, %v823
        %v895 = vsel %vm852, %v756, %v825
        %v899 = vsel %vm852, %v759, %v827
        %v903 = vsel %vm852, %v762, %v829
        %v907 = vsel %vm852, %v765, %v831
        %v911 = vsel %vm852, %v652, %v833
        %v915 = vsel %vm852, %v664, %v835
        %v919 = vsel %vm852, %v676, %v837
        %v923 = vsel %vm852, %v688, %v839
        %v927 = vsel %vm852, %v700, %v841
        %v931 = vsel %vm852, %v712, %v843
        %v935 = vsel %vm852, %v724, %v845
        %v939 = vsel %vm852, %v777, %v847
        %v942 = vsel %vm852, %v616, %v849
        %v945 = vsel %vm852, %v617, %v851
        %v947 = vld [vmem:[%s3] sm:$0xf]
        %v948 = vld [vmem:[%s3 + $0x4] sm:$0xf]
        %v949 = vld [vmem:[%s3 + $0x8] sm:$0xf]
        %v950 = vld [vmem:[%s3 + $0xc] sm:$0xf]
        %v951 = vld [vmem:[%s3 + $0x10] sm:$0xf]
        %v952 = vld [vmem:[%s3 + $0x14] sm:$0xf]
        %v953 = vld [vmem:[%s3 + $0x18] sm:$0xf]
        %v954 = vld [vmem:[%s3 + $0x1c] sm:$0xf]
        %v955 = vld [vmem:[%s3 + $0x20] sm:$0xf]
        %v956 = vld [vmem:[%s3 + $0x24] sm:$0xf]
        %v957 = vld [vmem:[%s3 + $0x28] sm:$0xf]
        %v958 = vld [vmem:[%s3 + $0x2c] sm:$0xf]
        %v959 = vld [vmem:[%s3 + $0x30] sm:$0xf]
        %v960 = vld [vmem:[%s3 + $0x34] sm:$0xf]
        %v961 = vld [vmem:[%s3 + $0x38] sm:$0xf]
        %v962 = vld [vmem:[%s3 + $0x3c] sm:$0xf]
        %v963 = vld [vmem:[%s3 + $0x40] sm:$0xf]
        %v964 = vld [vmem:[%s3 + $0x44] sm:$0xf]
        %v965 = vld [vmem:[%s3 + $0x48] sm:$0xf]
        %v966 = vld [vmem:[%s3 + $0x4c] sm:$0xf]
        %v967 = vld [vmem:[%s3 + $0x50] sm:$0xf]
        %v968 = vld [vmem:[%s3 + $0x54] sm:$0xf]
        %v969 = vld [vmem:[%s3 + $0x58] sm:$0xf]
        %v970 = vld [vmem:[%s3 + $0x5c] sm:$0xf]
        %v971 = vld [vmem:[%s3 + $0x60] sm:$0xf]
        %v972 = vld [vmem:[%s3 + $0x64] sm:$0xf]
        %v973 = vld [vmem:[%s3 + $0x68] sm:$0xf]
        %v974 = vld [vmem:[%s3 + $0x6c] sm:$0xf]
        %v975 = vld [vmem:[%s3 + $0x70] sm:$0xf]
        %v976 = vld [vmem:[%s3 + $0x74] sm:$0xf]
        %v977 = vld [vmem:[%s3 + $0x78] sm:$0xf]
        %v978 = vld [vmem:[%s3 + $0x7c] sm:$0xf]
        %v979 = vld [vmem:[%s3 + $0x80] sm:$0xf]
        %v980 = vld [vmem:[%s3 + $0x84] sm:$0xf]
        %v981 = vld [vmem:[%s3 + $0x88] sm:$0xf]
        %v982 = vld [vmem:[%s3 + $0x8c] sm:$0xf]
        %v983 = vld [vmem:[%s3 + $0x90] sm:$0xf]
        %v984 = vld [vmem:[%s3 + $0x94] sm:$0xf]
        %v985 = vld [vmem:[%s3 + $0x98] sm:$0xf]
        %v986 = vld [vmem:[%s3 + $0x9c] sm:$0xf]
        %v987 = vld [vmem:[%s3 + $0xa0] sm:$0xf]
        %v988 = vld [vmem:[%s3 + $0xa4] sm:$0xf]
        %v989 = vld [vmem:[%s3 + $0xa8] sm:$0xf]
        %v990 = vld [vmem:[%s3 + $0xac] sm:$0xf]
        %v991 = vld [vmem:[%s3 + $0xb0] sm:$0xf]
        %v992 = vld [vmem:[%s3 + $0xb4] sm:$0xf]
        %v993 = vld [vmem:[%s3 + $0xb8] sm:$0xf]
        %v994 = vld [vmem:[%s3 + $0xbc] sm:$0xf]
        %v995 = vld [vmem:[%s3 + $0xc0] sm:$0xf]
        %v996 = vld [vmem:[%s3 + $0xc4] sm:$0xf]
        %v997 = vld [vmem:[%s3 + $0xc8] sm:$0xf]
        %v998 = vld [vmem:[%s3 + $0xcc] sm:$0xf]
        %v999 = vld [vmem:[%s3 + $0xd0] sm:$0xf]
        %v1000 = vld [vmem:[%s3 + $0xd4] sm:$0xf]
        %v1001 = vld [vmem:[%s3 + $0xd8] sm:$0xf]
        %v1002 = vld [vmem:[%s3 + $0xdc] sm:$0xf]
        %v1003 = vld [vmem:[%s3 + $0xe0] sm:$0xf]
        %v1004 = vld [vmem:[%s3 + $0xe4] sm:$0xf]
        %v1005 = vld [vmem:[%s3 + $0xe8] sm:$0xf]
        %v1006 = vld [vmem:[%s3 + $0xec] sm:$0xf]
        %v1007 = vld [vmem:[%s3 + $0xf0] sm:$0xf]
        %v1008 = vld [vmem:[%s3 + $0xf4] sm:$0xf]
        %v1009 = vld [vmem:[%s3 + $0xf8] sm:$0xf]
        %v1010 = vld [vmem:[%s3 + $0xfc] sm:$0xf]
        %v1011 = vld [vmem:[%s3 + $0x100] sm:$0xf]
        %v1012 = vld [vmem:[%s3 + $0x104] sm:$0xf]
        %v1013 = vld [vmem:[%s3 + $0x108] sm:$0xf]
        %v1014 = vld [vmem:[%s3 + $0x10c] sm:$0xf]
        %v1015 = vld [vmem:[%s3 + $0x110] sm:$0xf]
        %v1016 = vld [vmem:[%s3 + $0x114] sm:$0xf]
        %v1017 = vld [vmem:[%s3 + $0x118] sm:$0xf]
        %v1018 = vld [vmem:[%s3 + $0x11c] sm:$0xf]
        %v1019 = vld [vmem:[%s4] sm:$0x1]
        %v1021 = vperm.slane %v1019, 0
        %v1095 = vunpack.c.l.b16 %v947
        %v1096 = vunpack.c.l.b16 %v948
        %v1097 = vunpack.c.l.b16 %v949
        %v1098 = vunpack.c.l.b16 %v950
        %v1099 = vunpack.c.l.b16 %v951
        %v1100 = vunpack.c.l.b16 %v952
        %v1101 = vunpack.c.l.b16 %v953
        %v1102 = vunpack.c.l.b16 %v954
        %v1103 = vunpack.c.l.b16 %v955
        %v1104 = vunpack.c.l.b16 %v956
        %v1105 = vunpack.c.l.b16 %v957
        %v1106 = vunpack.c.l.b16 %v958
        %v1107 = vunpack.c.l.b16 %v959
        %v1108 = vunpack.c.l.b16 %v960
        %v1109 = vunpack.c.l.b16 %v961
        %v1110 = vunpack.c.l.b16 %v962
        %v1111 = vunpack.c.l.b16 %v963
        %v1112 = vunpack.c.l.b16 %v964
        %v1113 = vunpack.c.l.b16 %v965
        %v1114 = vunpack.c.l.b16 %v966
        %v1115 = vunpack.c.l.b16 %v967
        %v1116 = vunpack.c.l.b16 %v968
        %v1117 = vunpack.c.l.b16 %v969
        %v1118 = vunpack.c.l.b16 %v970
        %v1119 = vunpack.c.l.b16 %v971
        %v1120 = vunpack.c.l.b16 %v972
        %v1121 = vunpack.c.l.b16 %v973
        %v1122 = vunpack.c.l.b16 %v974
        %v1123 = vunpack.c.l.b16 %v975
        %v1124 = vunpack.c.l.b16 %v976
        %v1125 = vunpack.c.l.b16 %v977
        %v1126 = vunpack.c.l.b16 %v978
        %v1127 = vunpack.c.l.b16 %v979
        %v1128 = vunpack.c.l.b16 %v980
        %v1129 = vunpack.c.l.b16 %v981
        %v1130 = vunpack.c.l.b16 %v982
        %v1131 = vunpack.c.l.b16 %v983
        %v1132 = vunpack.c.l.b16 %v984
        %v1133 = vunpack.c.l.b16 %v985
        %v1134 = vunpack.c.l.b16 %v986
        %v1135 = vunpack.c.l.b16 %v987
        %v1136 = vunpack.c.l.b16 %v988
        %v1137 = vunpack.c.l.b16 %v989
        %v1138 = vunpack.c.l.b16 %v990
        %v1139 = vunpack.c.l.b16 %v991
        %v1140 = vunpack.c.l.b16 %v992
        %v1141 = vunpack.c.l.b16 %v993
        %v1142 = vunpack.c.l.b16 %v994
        %v1143 = vunpack.c.l.b16 %v995
        %v1144 = vunpack.c.l.b16 %v996
        %v1145 = vunpack.c.l.b16 %v997
        %v1146 = vunpack.c.l.b16 %v998
        %v1147 = vunpack.c.l.b16 %v999
        %v1148 = vunpack.c.l.b16 %v1000
        %v1149 = vunpack.c.l.b16 %v1001
        %v1150 = vunpack.c.l.b16 %v1002
        %v1151 = vunpack.c.l.b16 %v1003
        %v1152 = vunpack.c.l.b16 %v1004
        %v1153 = vunpack.c.l.b16 %v1005
        %v1154 = vunpack.c.l.b16 %v1006
        %v1155 = vunpack.c.l.b16 %v1007
        %v1156 = vunpack.c.l.b16 %v1008
        %v1157 = vunpack.c.l.b16 %v1009
        %v1158 = vunpack.c.l.b16 %v1010
        %v1159 = vunpack.c.l.b16 %v1011
        %v1160 = vunpack.c.l.b16 %v1012
        %v1161 = vunpack.c.l.b16 %v1013
        %v1162 = vunpack.c.l.b16 %v1014
        %v1163 = vunpack.c.l.b16 %v1015
        %v1164 = vunpack.c.l.b16 %v1016
        %v1165 = vunpack.c.l.b16 %v1017
        %v1166 = vunpack.c.l.b16 %v1018
        %v1167 = vpack.c.b16 %v1096, %v1095
        %v1168 = vpack.c.b16 %v1098, %v1097
        %v1169 = vpack.c.b16 %v1100, %v1099
        %v1170 = vpack.c.b16 %v1102, %v1101
        %v1171 = vpack.c.b16 %v1104, %v1103
        %v1172 = vpack.c.b16 %v1106, %v1105
        %v1173 = vpack.c.b16 %v1108, %v1107
        %v1174 = vpack.c.b16 %v1110, %v1109
        %v1175 = vpack.c.b16 %v1112, %v1111
        %v1176 = vpack.c.b16 %v1114, %v1113
        %v1177 = vpack.c.b16 %v1116, %v1115
        %v1178 = vpack.c.b16 %v1118, %v1117
        %v1179 = vpack.c.b16 %v1120, %v1119
        %v1180 = vpack.c.b16 %v1122, %v1121
        %v1181 = vpack.c.b16 %v1124, %v1123
        %v1182 = vpack.c.b16 %v1126, %v1125
        %v1183 = vpack.c.b16 %v1128, %v1127
        %v1184 = vpack.c.b16 %v1130, %v1129
        %v1185 = vpack.c.b16 %v1132, %v1131
        %v1186 = vpack.c.b16 %v1134, %v1133
        %v1187 = vpack.c.b16 %v1136, %v1135
        %v1188 = vpack.c.b16 %v1138, %v1137
        %v1189 = vpack.c.b16 %v1140, %v1139
        %v1190 = vpack.c.b16 %v1142, %v1141
        %v1191 = vpack.c.b16 %v1144, %v1143
        %v1192 = vpack.c.b16 %v1146, %v1145
        %v1193 = vpack.c.b16 %v1148, %v1147
        %v1194 = vpack.c.b16 %v1150, %v1149
        %v1195 = vpack.c.b16 %v1152, %v1151
        %v1196 = vpack.c.b16 %v1154, %v1153
        %v1197 = vpack.c.b16 %v1156, %v1155
        %v1198 = vpack.c.b16 %v1158, %v1157
        %v1199 = vpack.c.b16 %v1160, %v1159
        %v1200 = vpack.c.b16 %v1162, %v1161
        %v1201 = vpack.c.b16 %v1164, %v1163
        %v1202 = vpack.c.b16 %v1166, %v1165
        %v1239 = vsel %vm852, %v750, 0
        %v1241 = vsel %vm852, %v753, 0
        %v1243 = vsel %vm852, %v756, 0
        %v1245 = vsel %vm852, %v759, 0
        %v1247 = vsel %vm852, %v762, 0
        %v1249 = vsel %vm852, %v765, 0
        %v1252 = vsel %vm852, %v782, 0
        %v1255 = vsel %vm852, %v799, 0
        %1257 = vmatpush.bf16.msra.mxu0 %v1174
        %1258 = vmatpush.bf16.msra.mxu0 %v1173
        %1259 = vmatpush.bf16.msra.mxu0 %v1172
        %1260 = vmatpush.bf16.msra.mxu0 %v1171
        %1261 = vmatpush.bf16.msra.mxu0 %v1170
        %1262 = vmatpush.bf16.msra.mxu0 %v1169
        %1263 = vmatpush.bf16.msra.mxu0 %v1168
        %1264 = vmatpush.bf16.msra.mxu0 %v1167
        %1265 = vmatmul.bf16.gmra.mxu0 %v854
        %v1266 = vpop.f32.mrf.mxu0
        %v1267 = vadd.f32 %v1021, %v1266
        %v1268 = vpop.f32.mrf.mxu0
        %v1269 = vadd.f32 %v1021, %v1268
        %1270 = vmatmul.bf16.gmra.mxu0 %v857
        %v1271 = vpop.f32.mrf.mxu0
        %v1272 = vadd.f32 %v1021, %v1271
        %v1273 = vpop.f32.mrf.mxu0
        %v1274 = vadd.f32 %v1021, %v1273
        %1275 = vmatmul.bf16.gmra.mxu0 %v860
        %v1276 = vpop.f32.mrf.mxu0
        %v1277 = vadd.f32 %v1021, %v1276
        %v1278 = vpop.f32.mrf.mxu0
        %v1279 = vadd.f32 %v1021, %v1278
        %1280 = vmatmul.bf16.gmra.mxu0 %v863
        %v1281 = vpop.f32.mrf.mxu0
        %v1282 = vadd.f32 %v1021, %v1281
        %v1283 = vpop.f32.mrf.mxu0
        %v1284 = vadd.f32 %v1021, %v1283
        %1285 = vmatmul.bf16.gmra.mxu0 %v866
        %v1286 = vpop.f32.mrf.mxu0
        %v1287 = vadd.f32 %v1021, %v1286
        %v1288 = vpop.f32.mrf.mxu0
        %v1289 = vadd.f32 %v1021, %v1288
        %1290 = vmatmul.bf16.gmra.mxu0 %v869
        %v1291 = vpop.f32.mrf.mxu0
        %v1292 = vadd.f32 %v1021, %v1291
        %v1293 = vpop.f32.mrf.mxu0
        %v1294 = vadd.f32 %v1021, %v1293
        %1295 = vmatmul.bf16.gmra.mxu0 %v872
        %v1296 = vpop.f32.mrf.mxu0
        %v1297 = vadd.f32 %v1021, %v1296
        %v1298 = vpop.f32.mrf.mxu0
        %v1299 = vadd.f32 %v1021, %v1298
        %1300 = vmatmul.bf16.gmra.mxu0 %v875
        %v1301 = vpop.f32.mrf.mxu0
        %v1302 = vadd.f32 %v1021, %v1301
        %v1303 = vpop.f32.mrf.mxu0
        %v1304 = vadd.f32 %v1021, %v1303
        %1305 = vdwg.mxu0
        %1306 = vmatpush.bf16.msra.mxu0 %v1182
        %1307 = vmatpush.bf16.msra.mxu0 %v1181
        %1308 = vmatpush.bf16.msra.mxu0 %v1180
        %1309 = vmatpush.bf16.msra.mxu0 %v1179
        %1310 = vmatpush.bf16.msra.mxu0 %v1178
        %1311 = vmatpush.bf16.msra.mxu0 %v1177
        %1312 = vmatpush.bf16.msra.mxu0 %v1176
        %1313 = vmatpush.bf16.msra.mxu0 %v1175
        %1314 = vmatmul.bf16.gmra.mxu0 %v879
        %v1315 = vpop.f32.mrf.mxu0
        %v1316 = vadd.f32 %v1267, %v1315
        %v1317 = vpop.f32.mrf.mxu0
        %v1318 = vadd.f32 %v1269, %v1317
        %1319 = vmatmul.bf16.gmra.mxu0 %v883
        %v1320 = vpop.f32.mrf.mxu0
        %v1321 = vadd.f32 %v1272, %v1320
        %v1322 = vpop.f32.mrf.mxu0
        %v1323 = vadd.f32 %v1274, %v1322
        %1324 = vmatmul.bf16.gmra.mxu0 %v887
        %v1325 = vpop.f32.mrf.mxu0
        %v1326 = vadd.f32 %v1277, %v1325
        %v1327 = vpop.f32.mrf.mxu0
        %v1328 = vadd.f32 %v1279, %v1327
        %1329 = vmatmul.bf16.gmra.mxu0 %v891
        %v1330 = vpop.f32.mrf.mxu0
        %v1331 = vadd.f32 %v1282, %v1330
        %v1332 = vpop.f32.mrf.mxu0
        %v1333 = vadd.f32 %v1284, %v1332
        %1334 = vmatmul.bf16.gmra.mxu0 %v895
        %v1335 = vpop.f32.mrf.mxu0
        %v1336 = vadd.f32 %v1287, %v1335
        %v1337 = vpop.f32.mrf.mxu0
        %v1338 = vadd.f32 %v1289, %v1337
        %1339 = vmatmul.bf16.gmra.mxu0 %v899
        %v1340 = vpop.f32.mrf.mxu0
        %v1341 = vadd.f32 %v1292, %v1340
        %v1342 = vpop.f32.mrf.mxu0
        %v1343 = vadd.f32 %v1294, %v1342
        %1344 = vmatmul.bf16.gmra.mxu0 %v903
        %v1345 = vpop.f32.mrf.mxu0
        %v1346 = vadd.f32 %v1297, %v1345
        %v1347 = vpop.f32.mrf.mxu0
        %v1348 = vadd.f32 %v1299, %v1347
        %1349 = vmatmul.bf16.gmra.mxu0 %v907
        %v1350 = vpop.f32.mrf.mxu0
        %v1351 = vadd.f32 %v1302, %v1350
        %v1352 = vpop.f32.mrf.mxu0
        %v1353 = vadd.f32 %v1304, %v1352
        %1354 = vdwg.mxu0
        %1355 = vmatpush.bf16.msra.mxu0 %v1190
        %1356 = vmatpush.bf16.msra.mxu0 %v1189
        %1357 = vmatpush.bf16.msra.mxu0 %v1188
        %1358 = vmatpush.bf16.msra.mxu0 %v1187
        %1359 = vmatpush.bf16.msra.mxu0 %v1186
        %1360 = vmatpush.bf16.msra.mxu0 %v1185
        %1361 = vmatpush.bf16.msra.mxu0 %v1184
        %1362 = vmatpush.bf16.msra.mxu0 %v1183
        %1363 = vmatmul.bf16.gmra.mxu0 %v911
        %v1364 = vpop.f32.mrf.mxu0
        %v1365 = vadd.f32 %v1316, %v1364
        %v1366 = vpop.f32.mrf.mxu0
        %v1367 = vadd.f32 %v1318, %v1366
        %1368 = vmatmul.bf16.gmra.mxu0 %v915
        %v1369 = vpop.f32.mrf.mxu0
        %v1370 = vadd.f32 %v1321, %v1369
        %v1371 = vpop.f32.mrf.mxu0
        %v1372 = vadd.f32 %v1323, %v1371
        %1373 = vmatmul.bf16.gmra.mxu0 %v919
        %v1374 = vpop.f32.mrf.mxu0
        %v1375 = vadd.f32 %v1326, %v1374
        %v1376 = vpop.f32.mrf.mxu0
        %v1377 = vadd.f32 %v1328, %v1376
        %1378 = vmatmul.bf16.gmra.mxu0 %v923
        %v1379 = vpop.f32.mrf.mxu0
        %v1380 = vadd.f32 %v1331, %v1379
        %v1381 = vpop.f32.mrf.mxu0
        %v1382 = vadd.f32 %v1333, %v1381
        %1383 = vmatmul.bf16.gmra.mxu0 %v927
        %v1384 = vpop.f32.mrf.mxu0
        %v1385 = vadd.f32 %v1336, %v1384
        %v1386 = vpop.f32.mrf.mxu0
        %v1387 = vadd.f32 %v1338, %v1386
        %1388 = vmatmul.bf16.gmra.mxu0 %v931
        %v1389 = vpop.f32.mrf.mxu0
        %v1390 = vadd.f32 %v1341, %v1389
        %v1391 = vpop.f32.mrf.mxu0
        %v1392 = vadd.f32 %v1343, %v1391
        %1393 = vmatmul.bf16.gmra.mxu0 %v935
        %v1394 = vpop.f32.mrf.mxu0
        %v1395 = vadd.f32 %v1346, %v1394
        %v1396 = vpop.f32.mrf.mxu0
        %v1397 = vadd.f32 %v1348, %v1396
        %1398 = vmatmul.bf16.gmra.mxu0 %v939
        %v1399 = vpop.f32.mrf.mxu0
        %v1400 = vadd.f32 %v1351, %v1399
        %v1401 = vpop.f32.mrf.mxu0
        %v1402 = vadd.f32 %v1353, %v1401
        %1403 = vdwg.mxu0
        %1404 = vmatpush.bf16.msra.mxu0 %v1198
        %1405 = vmatpush.bf16.msra.mxu0 %v1197
        %1406 = vmatpush.bf16.msra.mxu0 %v1196
        %1407 = vmatpush.bf16.msra.mxu0 %v1195
        %1408 = vmatpush.bf16.msra.mxu0 %v1194
        %1409 = vmatpush.bf16.msra.mxu0 %v1193
        %1410 = vmatpush.bf16.msra.mxu0 %v1192
        %1411 = vmatpush.bf16.msra.mxu0 %v1191
        %1412 = vmatmul.bf16.gmra.mxu0 %v860
        %v1413 = vpop.f32.mrf.mxu0
        %v1414 = vadd.f32 %v1365, %v1413
        %v1415 = vpop.f32.mrf.mxu0
        %v1416 = vadd.f32 %v1367, %v1415
        %1417 = vmatmul.bf16.gmra.mxu0 %v863
        %v1418 = vpop.f32.mrf.mxu0
        %v1419 = vadd.f32 %v1370, %v1418
        %v1420 = vpop.f32.mrf.mxu0
        %v1421 = vadd.f32 %v1372, %v1420
        %1422 = vmatmul.bf16.gmra.mxu0 %v866
        %v1423 = vpop.f32.mrf.mxu0
        %v1424 = vadd.f32 %v1375, %v1423
        %v1425 = vpop.f32.mrf.mxu0
        %v1426 = vadd.f32 %v1377, %v1425
        %1427 = vmatmul.bf16.gmra.mxu0 %v869
        %v1428 = vpop.f32.mrf.mxu0
        %v1429 = vadd.f32 %v1380, %v1428
        %v1430 = vpop.f32.mrf.mxu0
        %v1431 = vadd.f32 %v1382, %v1430
        %1432 = vmatmul.bf16.gmra.mxu0 %v872
        %v1433 = vpop.f32.mrf.mxu0
        %v1434 = vadd.f32 %v1385, %v1433
        %v1435 = vpop.f32.mrf.mxu0
        %v1436 = vadd.f32 %v1387, %v1435
        %1437 = vmatmul.bf16.gmra.mxu0 %v875
        %v1438 = vpop.f32.mrf.mxu0
        %v1439 = vadd.f32 %v1390, %v1438
        %v1440 = vpop.f32.mrf.mxu0
        %v1441 = vadd.f32 %v1392, %v1440
        %1442 = vmatmul.bf16.gmra.mxu0 %v942
        %v1443 = vpop.f32.mrf.mxu0
        %v1444 = vadd.f32 %v1395, %v1443
        %v1445 = vpop.f32.mrf.mxu0
        %v1446 = vadd.f32 %v1397, %v1445
        %1447 = vmatmul.bf16.gmra.mxu0 %v945
        %v1448 = vpop.f32.mrf.mxu0
        %v1449 = vadd.f32 %v1400, %v1448
        %v1450 = vpop.f32.mrf.mxu0
        %v1451 = vadd.f32 %v1402, %v1450
        %1452 = vdwg.mxu0
        %1453 = vmatpush.bf16.msra.mxu0 0
        %1454 = vmatpush.bf16.msra.mxu0 0
        %1455 = vmatpush.bf16.msra.mxu0 0
        %1456 = vmatpush.bf16.msra.mxu0 0
        %1457 = vmatpush.bf16.msra.mxu0 %v1202
        %1458 = vmatpush.bf16.msra.mxu0 %v1201
        %1459 = vmatpush.bf16.msra.mxu0 %v1200
        %1460 = vmatpush.bf16.msra.mxu0 %v1199
        %1461 = vmatmul.bf16.gmra.mxu0 %v1239
        %v1462 = vpop.f32.mrf.mxu0
        %v1463 = vadd.f32 %v1414, %v1462
        %v1464 = vpop.f32.mrf.mxu0
        %v1465 = vadd.f32 %v1416, %v1464
        %1466 = vmatmul.bf16.gmra.mxu0 %v1241
        %v1467 = vpop.f32.mrf.mxu0
        %v1468 = vadd.f32 %v1419, %v1467
        %v1469 = vpop.f32.mrf.mxu0
        %v1470 = vadd.f32 %v1421, %v1469
        %1471 = vmatmul.bf16.gmra.mxu0 %v1243
        %v1472 = vpop.f32.mrf.mxu0
        %v1473 = vadd.f32 %v1424, %v1472
        %v1474 = vpop.f32.mrf.mxu0
        %v1475 = vadd.f32 %v1426, %v1474
        %1476 = vmatmul.bf16.gmra.mxu0 %v1245
        %v1477 = vpop.f32.mrf.mxu0
        %v1478 = vadd.f32 %v1429, %v1477
        %v1479 = vpop.f32.mrf.mxu0
        %v1480 = vadd.f32 %v1431, %v1479
        %1481 = vmatmul.bf16.gmra.mxu0 %v1247
        %v1482 = vpop.f32.mrf.mxu0
        %v1483 = vadd.f32 %v1434, %v1482
        %v1484 = vpop.f32.mrf.mxu0
        %v1485 = vadd.f32 %v1436, %v1484
        %1486 = vmatmul.bf16.gmra.mxu0 %v1249
        %v1487 = vpop.f32.mrf.mxu0
        %v1488 = vadd.f32 %v1439, %v1487
        %v1489 = vpop.f32.mrf.mxu0
        %v1490 = vadd.f32 %v1441, %v1489
        %1491 = vmatmul.bf16.gmra.mxu0 %v1252
        %v1492 = vpop.f32.mrf.mxu0
        %v1493 = vadd.f32 %v1444, %v1492
        %v1494 = vpop.f32.mrf.mxu0
        %v1495 = vadd.f32 %v1446, %v1494
        %1496 = vmatmul.bf16.gmra.mxu0 %v1255
        %v1497 = vpop.f32.mrf.mxu0
        %v1498 = vadd.f32 %v1449, %v1497
        %v1499 = vpop.f32.mrf.mxu0
        %v1500 = vadd.f32 %v1451, %v1499
        %1501 = vdwg.mxu0
        %v1502 = vmax.f32 %v1463, 0.0
        %v1503 = vmax.f32 %v1465, 0.0
        %v1504 = vmax.f32 %v1468, 0.0
        %v1505 = vmax.f32 %v1470, 0.0
        %v1506 = vmax.f32 %v1473, 0.0
        %v1507 = vmax.f32 %v1475, 0.0
        %v1508 = vmax.f32 %v1478, 0.0
        %v1509 = vmax.f32 %v1480, 0.0
        %v1510 = vmax.f32 %v1483, 0.0
        %v1511 = vmax.f32 %v1485, 0.0
        %v1512 = vmax.f32 %v1488, 0.0
        %v1513 = vmax.f32 %v1490, 0.0
        %v1514 = vmax.f32 %v1493, 0.0
        %v1515 = vmax.f32 %v1495, 0.0
        %v1516 = vmax.f32 %v1498, 0.0
        %v1517 = vmax.f32 %v1500, 0.0
        %1518 = vst.msk [vmem:[%s364] sm:$0xff] %vm852, %v1502
        %1519 = vst.msk [vmem:[%s364 + $0x8] sm:$0xff] %vm852, %v1503
        %1520 = vst.msk [vmem:[%s364 + $0x10] sm:$0xff] %vm852, %v1504
        %1521 = vst.msk [vmem:[%s364 + $0x18] sm:$0xff] %vm852, %v1505
        %1522 = vst.msk [vmem:[%s364 + $0x20] sm:$0xff] %vm852, %v1506
        %1523 = vst.msk [vmem:[%s364 + $0x28] sm:$0xff] %vm852, %v1507
        %1524 = vst.msk [vmem:[%s364 + $0x30] sm:$0xff] %vm852, %v1508
        %1525 = vst.msk [vmem:[%s364 + $0x38] sm:$0xff] %vm852, %v1509
        %1526 = vst.msk [vmem:[%s364 + $0x40] sm:$0xff] %vm852, %v1510
        %1527 = vst.msk [vmem:[%s364 + $0x48] sm:$0xff] %vm852, %v1511
        %1528 = vst.msk [vmem:[%s364 + $0x50] sm:$0xff] %vm852, %v1512
        %1529 = vst.msk [vmem:[%s364 + $0x58] sm:$0xff] %vm852, %v1513
        %1530 = vst.msk [vmem:[%s364 + $0x60] sm:$0xff] %vm852, %v1514
        %1531 = vst.msk [vmem:[%s364 + $0x68] sm:$0xff] %vm852, %v1515
        %1532 = vst.msk [vmem:[%s364 + $0x70] sm:$0xff] %vm852, %v1516
        %1533 = vst.msk [vmem:[%s364 + $0x78] sm:$0xff] %vm852, %v1517
        %v1534 = vmax.f32 %v1502, %v1504
        %v1535 = vmax.f32 %v1503, %v1505
        %v1536 = vmax.f32 %v1506, %v1508
        %v1537 = vmax.f32 %v1507, %v1509
        %v1538 = vmax.f32 %v1510, %v1512
        %v1539 = vmax.f32 %v1511, %v1513
        %v1540 = vmax.f32 %v1514, %v1516
        %v1541 = vmax.f32 %v1515, %v1517
        %v1550 = vrot.slane %v1534, 2
        %v1551 = vrot.slane %v1534, 4
        %v1552 = vrot.slane %v1534, 6
        %v1553 = vrot.slane %v1535, 2
        %v1554 = vrot.slane %v1535, 4
        %v1555 = vrot.slane %v1535, 6
        %v1556 = vrot.slane %v1536, 2
        %v1557 = vrot.slane %v1536, 4
        %v1558 = vrot.slane %v1536, 6
        %v1559 = vrot.slane %v1537, 2
        %v1560 = vrot.slane %v1537, 4
        %v1561 = vrot.slane %v1537, 6
        %v1562 = vrot.slane %v1538, 2
        %v1563 = vrot.slane %v1538, 4
        %v1564 = vrot.slane %v1538, 6
        %v1565 = vrot.slane %v1539, 2
        %v1566 = vrot.slane %v1539, 4
        %v1567 = vrot.slane %v1539, 6
        %v1568 = vrot.slane %v1540, 2
        %v1569 = vrot.slane %v1540, 4
        %v1570 = vrot.slane %v1540, 6
        %v1571 = vrot.slane %v1541, 2
        %v1572 = vrot.slane %v1541, 4
        %v1573 = vrot.slane %v1541, 6
        %v1598 = vrot.slane %v1534, 7
        %v1599 = vrot.slane %v1598, 2
        %v1600 = vrot.slane %v1550, 7
        %v1601 = vrot.slane %v1600, 2
        %v1602 = vrot.slane %v1551, 7
        %v1603 = vrot.slane %v1602, 2
        %v1604 = vrot.slane %v1552, 7
        %v1605 = vrot.slane %v1604, 2
        %v1606 = vrot.slane %v1535, 7
        %v1607 = vrot.slane %v1606, 2
        %v1608 = vrot.slane %v1553, 7
        %v1609 = vrot.slane %v1608, 2
        %v1610 = vrot.slane %v1554, 7
        %v1611 = vrot.slane %v1610, 2
        %v1612 = vrot.slane %v1555, 7
        %v1613 = vrot.slane %v1612, 2
        %v1614 = vrot.slane %v1536, 7
        %v1615 = vrot.slane %v1614, 2
        %v1616 = vrot.slane %v1556, 7
        %v1617 = vrot.slane %v1616, 2
        %v1618 = vrot.slane %v1557, 7
        %v1619 = vrot.slane %v1618, 2
        %v1620 = vrot.slane %v1558, 7
        %v1621 = vrot.slane %v1620, 2
        %v1622 = vrot.slane %v1537, 7
        %v1623 = vrot.slane %v1622, 2
        %v1624 = vrot.slane %v1559, 7
        %v1625 = vrot.slane %v1624, 2
        %v1626 = vrot.slane %v1560, 7
        %v1627 = vrot.slane %v1626, 2
        %v1628 = vrot.slane %v1561, 7
        %v1629 = vrot.slane %v1628, 2
        %v1630 = vrot.slane %v1538, 7
        %v1631 = vrot.slane %v1630, 2
        %v1632 = vrot.slane %v1562, 7
        %v1633 = vrot.slane %v1632, 2
        %v1634 = vrot.slane %v1563, 7
        %v1635 = vrot.slane %v1634, 2
        %v1636 = vrot.slane %v1564, 7
        %v1637 = vrot.slane %v1636, 2
        %v1638 = vrot.slane %v1539, 7
        %v1639 = vrot.slane %v1638, 2
        %v1640 = vrot.slane %v1565, 7
        %v1641 = vrot.slane %v1640, 2
        %v1642 = vrot.slane %v1566, 7
        %v1643 = vrot.slane %v1642, 2
        %v1644 = vrot.slane %v1567, 7
        %v1645 = vrot.slane %v1644, 2
        %v1646 = vrot.slane %v1540, 7
        %v1647 = vrot.slane %v1646, 2
        %v1648 = vrot.slane %v1568, 7
        %v1649 = vrot.slane %v1648, 2
        %v1650 = vrot.slane %v1569, 7
        %v1651 = vrot.slane %v1650, 2
        %v1652 = vrot.slane %v1570, 7
        %v1653 = vrot.slane %v1652, 2
        %v1654 = vrot.slane %v1541, 7
        %v1655 = vrot.slane %v1654, 2
        %v1656 = vrot.slane %v1571, 7
        %v1657 = vrot.slane %v1656, 2
        %v1658 = vrot.slane %v1572, 7
        %v1659 = vrot.slane %v1658, 2
        %v1660 = vrot.slane %v1573, 7
        %v1661 = vrot.slane %v1660, 2
        %v1694 = vmax.f32 %v1534, %v1599
        %v1695 = vmax.f32 %v1550, %v1601
        %v1696 = vmax.f32 %v1551, %v1603
        %v1697 = vmax.f32 %v1552, %v1605
        %v1698 = vmax.f32 %v1535, %v1607
        %v1699 = vmax.f32 %v1553, %v1609
        %v1700 = vmax.f32 %v1554, %v1611
        %v1701 = vmax.f32 %v1555, %v1613
        %v1702 = vmax.f32 %v1536, %v1615
        %v1703 = vmax.f32 %v1556, %v1617
        %v1704 = vmax.f32 %v1557, %v1619
        %v1705 = vmax.f32 %v1558, %v1621
        %v1706 = vmax.f32 %v1537, %v1623
        %v1707 = vmax.f32 %v1559, %v1625
        %v1708 = vmax.f32 %v1560, %v1627
        %v1709 = vmax.f32 %v1561, %v1629
        %v1710 = vmax.f32 %v1538, %v1631
        %v1711 = vmax.f32 %v1562, %v1633
        %v1712 = vmax.f32 %v1563, %v1635
        %v1713 = vmax.f32 %v1564, %v1637
        %v1714 = vmax.f32 %v1539, %v1639
        %v1715 = vmax.f32 %v1565, %v1641
        %v1716 = vmax.f32 %v1566, %v1643
        %v1717 = vmax.f32 %v1567, %v1645
        %v1718 = vmax.f32 %v1540, %v1647
        %v1719 = vmax.f32 %v1568, %v1649
        %v1720 = vmax.f32 %v1569, %v1651
        %v1721 = vmax.f32 %v1570, %v1653
        %v1722 = vmax.f32 %v1541, %v1655
        %v1723 = vmax.f32 %v1571, %v1657
        %v1724 = vmax.f32 %v1572, %v1659
        %v1725 = vmax.f32 %v1573, %v1661
        %v1726 = vpack.c.bf16 %v1694, %v1694
        %v1727 = vpack.c.bf16 %v1695, %v1695
        %v1728 = vpack.c.bf16 %v1696, %v1696
        %v1729 = vpack.c.bf16 %v1697, %v1697
        %v1730 = vpack.c.bf16 %v1698, %v1698
        %v1731 = vpack.c.bf16 %v1699, %v1699
        %v1732 = vpack.c.bf16 %v1700, %v1700
        %v1733 = vpack.c.bf16 %v1701, %v1701
        %v1734 = vpack.c.bf16 %v1702, %v1702
        %v1735 = vpack.c.bf16 %v1703, %v1703
        %v1736 = vpack.c.bf16 %v1704, %v1704
        %v1737 = vpack.c.bf16 %v1705, %v1705
        %v1738 = vpack.c.bf16 %v1706, %v1706
        %v1739 = vpack.c.bf16 %v1707, %v1707
        %v1740 = vpack.c.bf16 %v1708, %v1708
        %v1741 = vpack.c.bf16 %v1709, %v1709
        %v1742 = vpack.c.bf16 %v1710, %v1710
        %v1743 = vpack.c.bf16 %v1711, %v1711
        %v1744 = vpack.c.bf16 %v1712, %v1712
        %v1745 = vpack.c.bf16 %v1713, %v1713
        %v1746 = vpack.c.bf16 %v1714, %v1714
        %v1747 = vpack.c.bf16 %v1715, %v1715
        %v1748 = vpack.c.bf16 %v1716, %v1716
        %v1749 = vpack.c.bf16 %v1717, %v1717
        %v1750 = vpack.c.bf16 %v1718, %v1718
        %v1751 = vpack.c.bf16 %v1719, %v1719
        %v1752 = vpack.c.bf16 %v1720, %v1720
        %v1753 = vpack.c.bf16 %v1721, %v1721
        %v1754 = vpack.c.bf16 %v1722, %v1722
        %v1755 = vpack.c.bf16 %v1723, %v1723
        %v1756 = vpack.c.bf16 %v1724, %v1724
        %v1757 = vpack.c.bf16 %v1725, %v1725
        %v1790 = vunpack.c.l.b16 %v1726
        %v1791 = vunpack.c.l.b16 %v1727
        %v1792 = vunpack.c.l.b16 %v1728
        %v1793 = vunpack.c.l.b16 %v1729
        %v1794 = vunpack.c.l.b16 %v1730
        %v1795 = vunpack.c.l.b16 %v1731
        %v1796 = vunpack.c.l.b16 %v1732
        %v1797 = vunpack.c.l.b16 %v1733
        %v1798 = vunpack.c.l.b16 %v1734
        %v1799 = vunpack.c.l.b16 %v1735
        %v1800 = vunpack.c.l.b16 %v1736
        %v1801 = vunpack.c.l.b16 %v1737
        %v1802 = vunpack.c.l.b16 %v1738
        %v1803 = vunpack.c.l.b16 %v1739
        %v1804 = vunpack.c.l.b16 %v1740
        %v1805 = vunpack.c.l.b16 %v1741
        %v1806 = vunpack.c.l.b16 %v1742
        %v1807 = vunpack.c.l.b16 %v1743
        %v1808 = vunpack.c.l.b16 %v1744
        %v1809 = vunpack.c.l.b16 %v1745
        %v1810 = vunpack.c.l.b16 %v1746
        %v1811 = vunpack.c.l.b16 %v1747
        %v1812 = vunpack.c.l.b16 %v1748
        %v1813 = vunpack.c.l.b16 %v1749
        %v1814 = vunpack.c.l.b16 %v1750
        %v1815 = vunpack.c.l.b16 %v1751
        %v1816 = vunpack.c.l.b16 %v1752
        %v1817 = vunpack.c.l.b16 %v1753
        %v1818 = vunpack.c.l.b16 %v1754
        %v1819 = vunpack.c.l.b16 %v1755
        %v1820 = vunpack.c.l.b16 %v1756
        %v1821 = vunpack.c.l.b16 %v1757
        %v1822 = vrot.slane %v1791, 7
        %vm1823 = vcmask 1041409
        %v1824 = vsel %vm1823, %v1822, %v1790
        %v1825 = vrot.slane %v1792, 6
        %vm1826 = vcmask 1042434
        %v1827 = vsel %vm1826, %v1825, %v1824
        %v1828 = vrot.slane %v1793, 5
        %vm1829 = vcmask 1043459
        %v1830 = vsel %vm1829, %v1828, %v1827
        %v1831 = vrot.slane %v1794, 4
        %vm1832 = vcmask 1044484
        %v1833 = vsel %vm1832, %v1831, %v1830
        %v1834 = vrot.slane %v1795, 3
        %vm1835 = vcmask 1045509
        %v1836 = vsel %vm1835, %v1834, %v1833
        %v1837 = vrot.slane %v1796, 2
        %vm1838 = vcmask 1046534
        %v1839 = vsel %vm1838, %v1837, %v1836
        %v1840 = vrot.slane %v1797, 1
        %vm1841 = vcmask 1047559
        %v1842 = vsel %vm1841, %v1840, %v1839
        %v1843 = vrot.slane %v1799, 7
        %v1844 = vsel %vm1823, %v1843, %v1798
        %v1845 = vrot.slane %v1800, 6
        %v1846 = vsel %vm1826, %v1845, %v1844
        %v1847 = vrot.slane %v1801, 5
        %v1848 = vsel %vm1829, %v1847, %v1846
        %v1849 = vrot.slane %v1802, 4
        %v1850 = vsel %vm1832, %v1849, %v1848
        %v1851 = vrot.slane %v1803, 3
        %v1852 = vsel %vm1835, %v1851, %v1850
        %v1853 = vrot.slane %v1804, 2
        %v1854 = vsel %vm1838, %v1853, %v1852
        %v1855 = vrot.slane %v1805, 1
        %v1856 = vsel %vm1841, %v1855, %v1854
        %v1857 = vrot.slane %v1807, 7
        %v1858 = vsel %vm1823, %v1857, %v1806
        %v1859 = vrot.slane %v1808, 6
        %v1860 = vsel %vm1826, %v1859, %v1858
        %v1861 = vrot.slane %v1809, 5
        %v1862 = vsel %vm1829, %v1861, %v1860
        %v1863 = vrot.slane %v1810, 4
        %v1864 = vsel %vm1832, %v1863, %v1862
        %v1865 = vrot.slane %v1811, 3
        %v1866 = vsel %vm1835, %v1865, %v1864
        %v1867 = vrot.slane %v1812, 2
        %v1868 = vsel %vm1838, %v1867, %v1866
        %v1869 = vrot.slane %v1813, 1
        %v1870 = vsel %vm1841, %v1869, %v1868
        %v1871 = vrot.slane %v1815, 7
        %v1872 = vsel %vm1823, %v1871, %v1814
        %v1873 = vrot.slane %v1816, 6
        %v1874 = vsel %vm1826, %v1873, %v1872
        %v1875 = vrot.slane %v1817, 5
        %v1876 = vsel %vm1829, %v1875, %v1874
        %v1877 = vrot.slane %v1818, 4
        %v1878 = vsel %vm1832, %v1877, %v1876
        %v1879 = vrot.slane %v1819, 3
        %v1880 = vsel %vm1835, %v1879, %v1878
        %v1881 = vrot.slane %v1820, 2
        %v1882 = vsel %vm1838, %v1881, %v1880
        %v1883 = vrot.slane %v1821, 1
        %v1884 = vsel %vm1841, %v1883, %v1882
        %v1885 = vpack.c.b16 %v1842, %v1842
        %v1886 = vpack.c.b16 %v1856, %v1856
        %v1887 = vpack.c.b16 %v1870, %v1870
        %v1888 = vpack.c.b16 %v1884, %v1884
        %vm1893 = vcmask 519168
        %1894 = vst.msk [vmem:[%s430] sm:$0xf] %vm1893, %v1885
        %1895 = vst.msk [vmem:[%s430 + $0x4] sm:$0xf] %vm1893, %v1886
        %1896 = vst.msk [vmem:[%s430 + $0x8] sm:$0xf] %vm1893, %v1887
        %1897 = vst.msk [vmem:[%s430 + $0xc] sm:$0xf] %vm1893, %v1888
        %s1898 = sand.u32 %s185, 1
        %s1899 = scalar_lea.sflag [#allocation3], %s1898
        %s1900 = sand.u32 %s185, 1
        %s1901 = smul.addr %s1900, 128
        %s1902 = scalar_lea.vmem [#allocation2], %s1901
        %s1903 = smul.u32 4, %s26
        %p1904 = scmp.lt.s32.totalorder %s25, 1
        %s1905 = scalar_select %p1904, %s25, 1
        %p1906 = scmp.lt.s32.totalorder %s1903, 7
        %s1907 = scalar_select %p1906, %s1903, 7
        %s1908 = smul.addr %s1905, 8
        %s1909 = sadd.s32 %s1907, %s1908
        %s1910 = smul.addr %s1909, 4
        %s1911 = scalar_lea.vmem %s6, %s1910
        // Predicated region
        $region41: #{vgg16_forward.5} parent=39 // pred_check
          %p1912 = pneg %p195
        $region42: #{vgg16_forward.5} parent=39 // pred_check_branch
          %1914 = sbr.rel (%p1912) target = $region44
        $region43: #{vgg16_forward.5} parent=39 // pred_region
          %s1915 = smul.u32 8, %s26
          %1917 = vsyncadd %s1899, 0
          %s1918 = smul.addr %s1915, 2
          %s1919 = smul.addr %s25, 32
          %s1920 = sadd.s32 %s1918, %s1919
          %s1921 = smul.addr %s1920, 8
          %s1922 = scalar_lea.hbm %s5, %s1921
          %s1923 = sshll.u32 %s1902, 4
          %s1924 = int_to_ptr.vmem [resolvable:$true] %s1923
          %s1925 = sshll.u32 %s1922, 4
          %s1926 = int_to_ptr.hbm [resolvable:$true] %s1925
          %1931 = dma.vmem_to_hbm [thread:$0]  %s1924, 2048, %s1926, %s1899, 128, 128, 8
        $region44: #{vgg16_forward.5} parent=39 // pred_fallthru
          _
        // Predicated region
        $region45: #{vgg16_forward.5} parent=39 // pred_check
          %p1932 = pneg %p223
        $region46: #{vgg16_forward.5} parent=39 // pred_check_branch
          %1934 = sbr.rel (%p1932) target = $region48
        $region47: #{vgg16_forward.5} parent=39 // pred_region
          %s1935 = smul.u32 4, %s26
        $region48: #{vgg16_forward.5} parent=39 // pred_fallthru
          _
      $region40: #{vgg16_forward.5} parent=5 // pred_fallthru
        _
      %p1936 = scmp.le.s32.totalorder 2, %s16
      // Predicated region
      $region49: #{vgg16_forward.5} parent=5 // pred_check
        %p1937 = pneg %p1936
      $region50: #{vgg16_forward.5} parent=5 // pred_check_branch
        %1939 = sbr.rel (%p1937) target = $region52
      $region51: #{vgg16_forward.5} parent=5 // pred_region
        %s1940 = ssub.s32 %s16, 2
        // Predicated region
        $region53: #{vgg16_forward.5} parent=51 // pred_check
          %p1941 = pneg %p201
        $region54: #{vgg16_forward.5} parent=51 // pred_check_branch
          %1943 = sbr.rel (%p1941) target = $region56
        $region55: #{vgg16_forward.5} parent=51 // pred_region
          %s1944 = sand.u32 %s186, 1
          %s1945 = scalar_lea.sflag [#allocation3], %s1944
          %s1946 = sand.u32 %s186, 1
          %s1947 = smul.addr %s1946, 128
          %s1948 = scalar_lea.vmem [#allocation2], %s1947
          %1950 = dma.done %s1945, 2048
        $region56: #{vgg16_forward.5} parent=51 // pred_fallthru
          _
        // Predicated region
        $region57: #{vgg16_forward.5} parent=51 // pred_check
          %p1951 = pneg %p229
        $region58: #{vgg16_forward.5} parent=51 // pred_check_branch
          %1953 = sbr.rel (%p1951) target = $region60
        $region59: #{vgg16_forward.5} parent=51 // pred_region
          %s1954 = smul.u32 4, %s28
          %p1955 = scmp.lt.s32.totalorder %s27, 1
          %s1956 = scalar_select %p1955, %s27, 1
          %p1957 = scmp.lt.s32.totalorder %s1954, 7
          %s1958 = scalar_select %p1957, %s1954, 7
          %s1959 = smul.addr %s1956, 8
          %s1960 = sadd.s32 %s1958, %s1959
          %s1961 = smul.addr %s1960, 4
          %s1962 = scalar_lea.vmem %s6, %s1961
        $region60: #{vgg16_forward.5} parent=51 // pred_fallthru
          _
      $region52: #{vgg16_forward.5} parent=5 // pred_fallthru
        _
    $region6: #{vgg16_forward.5} parent=1 // loop_footer
      %s20 = sadd.s32 1, %s16
    $region7: #{vgg16_forward.5} parent=1 // loop_footer_branch
      %15 = sbr.rel target = $region3
    $region8: #{vgg16_forward.5} parent=1 // loop_exit
      _
    %1963 = vsyncpa [#allocation3], 1
    %s1964 = scalar_lea.sflag [#allocation3], 1
    %1965 = vsyncpa %s1964, 1

// kernel: vgg16_forward.7
$region0: #{vgg16_forward.7}
  #allocation0 [shape = 'u32[]', space=smem, size = 0x4, offset = 0x4, fixed_abs, tag = 'smem constant byte address 0x4 - core index']
  #allocation1 [shape = 'u32[72,128]{1,0:T(1,128)}', space=vmem, size = 0x9000, scoped, tag = 'internal scratch']
  %s0 = inlined_call_operand.vmem [shape: bf16[2,8,8,128], index: 0, kind: input, shape index: {}, may-alias: {0,1,2}]
  %s1 = inlined_call_operand.vmem [shape: bf16[2,8,8,128], index: 1, kind: input, shape index: {}, may-alias: {0,1,2}]
  %s2 = inlined_call_operand.vmem [shape: bf16[2,8,8,128], index: 2, kind: input, shape index: {}, may-alias: {0,1,2}]
  %s3 = inlined_call_operand.vmem [shape: bf16[1152,128], index: 3, kind: input, shape index: {}]
  %s4 = inlined_call_operand.vmem [shape: f32[1,128], index: 4, kind: input, shape index: {}]
  %s5 = inlined_call_operand.hbm [shape: f32[2,8,8,128], index: 5, kind: output, shape index: {}]
  %s6 = sld [smem:[#allocation0]]
  $region53: #{vgg16_forward.7} parent=0
    _
  %s8 = ssub.s32 1, %s6
  %s9 = scalar_select 0, %s8, %s6
  $region1: #{vgg16_forward.7} parent=0
    #allocation2 [shape = 'u8[32768]{0}', space=vmem, size = 0x8000, scoped, tag = 'output window, operand 0']
    #allocation3 [shape = 's32[2]{0}', space=sflag, size = 0x8, scoped, tag = 'scoped memory for vgg16_forward.7']
    %10 = vsyncpa [#allocation3], 0
    %s11 = scalar_lea.sflag [#allocation3], 1
    %12 = vsyncpa %s11, 0
    loop: start=0, step=1, limit=6
    $region2: #{vgg16_forward.7} parent=1 // loop_pre_header
      _
    $region3: #{vgg16_forward.7} parent=1 // loop_header
      %s14 = sphi 0, %s18
      %p15 = scmp.ge.s32.totalorder %s14, 6
      %s21 = sphi 0, %s33
      %s22 = sphi 0, %s29
      %s23 = sphi 0, %s21
      %s24 = sphi 0, %s22
      %s25 = sphi 0, %s23
      %s26 = sphi 0, %s24
      %s38 = sphi 0, %s40
      %s41 = sphi 0, %s38
      %s42 = sphi 0, %s41
      %s58 = sphi 0, %s42
      %s74 = sphi 0, %s76
      %s77 = sphi 0, %s74
      %s78 = sphi 0, %s77
      %s94 = sphi 0, %s78
      %s110 = sphi 0, %s112
      %s113 = sphi 0, %s110
      %s114 = sphi 0, %s113
      %s130 = sphi 0, %s114
      %s134 = sphi 0, %s134
      %s136 = sphi 0, %s134
      %s137 = sphi 0, %s136
      %s151 = sphi 0, %s137
      %s155 = sphi 0, %s155
      %s157 = sphi 0, %s155
      %s158 = sphi 0, %s157
      %s172 = sphi 0, %s158
      %s180 = sphi 0, %s182
      %s183 = sphi 0, %s180
      %s184 = sphi 0, %s183
      %s200 = sphi 0, %s184
    $region4: #{vgg16_forward.7} parent=1 // loop_header_branch
      %17 = sbr.rel (%p15) target = $region8
    $region5: #{vgg16_forward.7} parent=1 // loop_body
      %s19 = ssub.s32 %s14, 1
      %s20 = ssub.s32 %s14, 2
      %s27 = sadd.s32 1, %s22
      %p28 = scmp.ge.s32.totalorder %s27, 2
      %s29 = scalar_select %p28, 0, %s27
      %s30 = sadd.s32 1, %s21
      %s31 = scalar_select %p28, %s30, %s21
      %p32 = scmp.ge.s32.totalorder %s31, 2
      %s33 = scalar_select %p32, 0, %s31
      %s34 = ssub.s32 %s21, %s33
      %s35 = ssub.s32 %s22, %s29
      %s36 = sor.u32 %s34, %s35
      %p37 = scmp.eq.s32.totalorder %s36, 0
      %s39 = sadd.s32 %s38, 1
      %s40 = scalar_select %p37, %s38, %s39
      %p43 = pneg %p37
      %p44 = scmp.eq.s32.totalorder %s14, 3
      %p45 = por %p43, %p44
      %p46 = scmp.ne.s32.totalorder %s38, %s41
      %p47 = scmp.eq.s32.totalorder %s14, 0
      %p48 = por %p46, %p47
      %p49 = scmp.ne.s32.totalorder %s38, %s41
      %p50 = scmp.eq.s32.totalorder %s19, 3
      %p51 = por %p49, %p50
      %p52 = scmp.ne.s32.totalorder %s41, %s42
      %p53 = scmp.eq.s32.totalorder %s19, 0
      %p54 = por %p52, %p53
      %p55 = scmp.ne.s32.totalorder %s41, %s42
      %p56 = scmp.eq.s32.totalorder %s20, 3
      %p57 = por %p55, %p56
      %p59 = scmp.ne.s32.totalorder %s42, %s58
      %p60 = scmp.eq.s32.totalorder %s20, 0
      %p61 = por %p59, %p60
      %s62 = smul.u32 %s22, 4
      %s63 = ssub.s32 %s62, 1
      %p64 = scmp.gt.s32.totalorder %s63, 0
      %s65 = scalar_select %p64, %s63, 0
      %s66 = smul.u32 %s29, 4
      %s67 = ssub.s32 %s66, 1
      %p68 = scmp.gt.s32.totalorder %s67, 0
      %s69 = scalar_select %p68, %s67, 0
      %s70 = ssub.s32 %s21, %s33
      %s71 = ssub.s32 %s65, %s69
      %s72 = sor.u32 %s70, %s71
      %p73 = scmp.eq.s32.totalorder %s72, 0
      %s75 = sadd.s32 %s74, 1
      %s76 = scalar_select %p73, %s74, %s75
      %p79 = pneg %p73
      %p80 = scmp.eq.s32.totalorder %s14, 3
      %p81 = por %p79, %p80
      %p82 = scmp.ne.s32.totalorder %s74, %s77
      %p83 = scmp.eq.s32.totalorder %s14, 0
      %p84 = por %p82, %p83
      %p85 = scmp.ne.s32.totalorder %s74, %s77
      %p86 = scmp.eq.s32.totalorder %s19, 3
      %p87 = por %p85, %p86
      %p88 = scmp.ne.s32.totalorder %s77, %s78
      %p89 = scmp.eq.s32.totalorder %s19, 0
      %p90 = por %p88, %p89
      %p91 = scmp.ne.s32.totalorder %s77, %s78
      %p92 = scmp.eq.s32.totalorder %s20, 3
      %p93 = por %p91, %p92
      %p95 = scmp.ne.s32.totalorder %s78, %s94
      %p96 = scmp.eq.s32.totalorder %s20, 0
      %p97 = por %p95, %p96
      %s98 = smul.u32 %s22, 4
      %s99 = sadd.s32 %s98, 4
      %p100 = scmp.lt.s32.totalorder %s99, 7
      %s101 = scalar_select %p100, %s99, 7
      %s102 = smul.u32 %s29, 4
      %s103 = sadd.s32 %s102, 4
      %p104 = scmp.lt.s32.totalorder %s103, 7
      %s105 = scalar_select %p104, %s103, 7
      %s106 = ssub.s32 %s21, %s33
      %s107 = ssub.s32 %s101, %s105
      %s108 = sor.u32 %s106, %s107
      %p109 = scmp.eq.s32.totalorder %s108, 0
      %s111 = sadd.s32 %s110, 1
      %s112 = scalar_select %p109, %s110, %s111
      %p115 = pneg %p109
      %p116 = scmp.eq.s32.totalorder %s14, 3
      %p117 = por %p115, %p116
      %p118 = scmp.ne.s32.totalorder %s110, %s113
      %p119 = scmp.eq.s32.totalorder %s14, 0
      %p120 = por %p118, %p119
      %p121 = scmp.ne.s32.totalorder %s110, %s113
      %p122 = scmp.eq.s32.totalorder %s19, 3
      %p123 = por %p121, %p122
      %p124 = scmp.ne.s32.totalorder %s113, %s114
      %p125 = scmp.eq.s32.totalorder %s19, 0
      %p126 = por %p124, %p125
      %p127 = scmp.ne.s32.totalorder %s113, %s114
      %p128 = scmp.eq.s32.totalorder %s20, 3
      %p129 = por %p127, %p128
      %p131 = scmp.ne.s32.totalorder %s114, %s130
      %p132 = scmp.eq.s32.totalorder %s20, 0
      %p133 = por %p131, %p132
      %s135 = sadd.s32 %s134, 1
      %p138 = scmp.eq.s32.totalorder %s14, 3
      %p139 = scmp.ne.s32.totalorder %s134, %s136
      %p140 = scmp.eq.s32.totalorder %s14, 0
      %p141 = por %p139, %p140
      %p142 = scmp.ne.s32.totalorder %s134, %s136
      %p143 = scmp.eq.s32.totalorder %s19, 3
      %p144 = por %p142, %p143
      %p145 = scmp.ne.s32.totalorder %s136, %s137
      %p146 = scmp.eq.s32.totalorder %s19, 0
      %p147 = por %p145, %p146
      %p148 = scmp.ne.s32.totalorder %s136, %s137
      %p149 = scmp.eq.s32.totalorder %s20, 3
      %p150 = por %p148, %p149
      %p152 = scmp.ne.s32.totalorder %s137, %s151
      %p153 = scmp.eq.s32.totalorder %s20, 0
      %p154 = por %p152, %p153
      %s156 = sadd.s32 %s155, 1
      %p159 = scmp.eq.s32.totalorder %s14, 3
      %p160 = scmp.ne.s32.totalorder %s155, %s157
      %p161 = scmp.eq.s32.totalorder %s14, 0
      %p162 = por %p160, %p161
      %p163 = scmp.ne.s32.totalorder %s155, %s157
      %p164 = scmp.eq.s32.totalorder %s19, 3
      %p165 = por %p163, %p164
      %p166 = scmp.ne.s32.totalorder %s157, %s158
      %p167 = scmp.eq.s32.totalorder %s19, 0
      %p168 = por %p166, %p167
      %p169 = scmp.ne.s32.totalorder %s157, %s158
      %p170 = scmp.eq.s32.totalorder %s20, 3
      %p171 = por %p169, %p170
      %p173 = scmp.ne.s32.totalorder %s158, %s172
      %p174 = scmp.eq.s32.totalorder %s20, 0
      %p175 = por %p173, %p174
      %s176 = ssub.s32 %s21, %s33
      %s177 = ssub.s32 %s22, %s29
      %s178 = sor.u32 %s176, %s177
      %p179 = scmp.eq.s32.totalorder %s178, 0
      %s181 = sadd.s32 %s180, 1
      %s182 = scalar_select %p179, %s180, %s181
      %p185 = pneg %p179
      %p186 = scmp.eq.s32.totalorder %s14, 3
      %p187 = por %p185, %p186
      %p188 = scmp.ne.s32.totalorder %s180, %s183
      %p189 = scmp.eq.s32.totalorder %s14, 0
      %p190 = por %p188, %p189
      %p191 = scmp.ne.s32.totalorder %s180, %s183
      %p192 = scmp.eq.s32.totalorder %s19, 3
      %p193 = por %p191, %p192
      %p194 = scmp.ne.s32.totalorder %s183, %s184
      %p195 = scmp.eq.s32.totalorder %s19, 0
      %p196 = por %p194, %p195
      %p197 = scmp.ne.s32.totalorder %s183, %s184
      %p198 = scmp.eq.s32.totalorder %s20, 3
      %p199 = por %p197, %p198
      %p201 = scmp.ne.s32.totalorder %s184, %s200
      %p202 = scmp.eq.s32.totalorder %s20, 0
      %p203 = por %p201, %p202
      %p204 = scmp.le.s32.totalorder 1, %s14
      %p205 = scmp.lt.s32.totalorder %s14, 5
      %p206 = pnand %p204, %p205
      %p207 = pneg %p206
      // Predicated region
      $region9: #{vgg16_forward.7} parent=5 // pred_check
        _
      $region10: #{vgg16_forward.7} parent=5 // pred_check_branch
        %209 = sbr.rel (%p206) target = $region12
      $region11: #{vgg16_forward.7} parent=5 // pred_region
        %s210 = ssub.s32 %s14, 1
        // Predicated region
        $region13: #{vgg16_forward.7} parent=11 // pred_check
          %p211 = pneg %p147
        $region14: #{vgg16_forward.7} parent=11 // pred_check_branch
          %213 = sbr.rel (%p211) target = $region16
        $region15: #{vgg16_forward.7} parent=11 // pred_region
          _
        $region16: #{vgg16_forward.7} parent=11 // pred_fallthru
          _
        // Predicated region
        $region17: #{vgg16_forward.7} parent=11 // pred_check
          %p214 = pneg %p168
        $region18: #{vgg16_forward.7} parent=11 // pred_check_branch
          %216 = sbr.rel (%p214) target = $region20
        $region19: #{vgg16_forward.7} parent=11 // pred_region
          _
        $region20: #{vgg16_forward.7} parent=11 // pred_fallthru
          _
      $region12: #{vgg16_forward.7} parent=5 // pred_fallthru
        _
      %p217 = scmp.lt.s32.totalorder %s14, 4
      // Predicated region
      $region21: #{vgg16_forward.7} parent=5 // pred_check
        %p218 = pneg %p217
      $region22: #{vgg16_forward.7} parent=5 // pred_check_branch
        %220 = sbr.rel (%p218) target = $region24
      $region23: #{vgg16_forward.7} parent=5 // pred_region
        // Predicated region
        $region25: #{vgg16_forward.7} parent=23 // pred_check
          %p221 = pneg %p48
        $region26: #{vgg16_forward.7} parent=23 // pred_check_branch
          %223 = sbr.rel (%p221) target = $region28
        $region27: #{vgg16_forward.7} parent=23 // pred_region
          %s224 = smul.u32 4, %s22
          %p225 = scmp.lt.s32.totalorder %s21, 1
          %s226 = scalar_select %p225, %s21, 1
          %p227 = scmp.lt.s32.totalorder %s224, 7
          %s228 = scalar_select %p227, %s224, 7
          %s229 = smul.addr %s226, 8
          %s230 = sadd.s32 %s228, %s229
          %s231 = smul.addr %s230, 4
          %s232 = scalar_lea.vmem %s0, %s231
          %s233 = smul.u32 4, %s22
        $region28: #{vgg16_forward.7} parent=23 // pred_fallthru
          _
        // Predicated region
        $region29: #{vgg16_forward.7} parent=23 // pred_check
          %p234 = pneg %p84
        $region30: #{vgg16_forward.7} parent=23 // pred_check_branch
          %236 = sbr.rel (%p234) target = $region32
        $region31: #{vgg16_forward.7} parent=23 // pred_region
          %s237 = smul.u32 %s22, 4
          %s238 = ssub.s32 %s237, 1
          %p239 = scmp.gt.s32.totalorder %s238, 0
          %s240 = scalar_select %p239, %s238, 0
          %p241 = scmp.lt.s32.totalorder %s21, 1
          %s242 = scalar_select %p241, %s21, 1
          %p243 = scmp.lt.s32.totalorder %s240, 7
          %s244 = scalar_select %p243, %s240, 7
          %s245 = smul.addr %s242, 8
          %s246 = sadd.s32 %s244, %s245
          %s247 = smul.addr %s246, 4
          %s248 = scalar_lea.vmem %s1, %s247
          %s249 = smul.u32 %s22, 4
          %s250 = ssub.s32 %s249, 1
          %p251 = scmp.gt.s32.totalorder %s250, 0
          %s252 = scalar_select %p251, %s250, 0
        $region32: #{vgg16_forward.7} parent=23 // pred_fallthru
          _
        // Predicated region
        $region33: #{vgg16_forward.7} parent=23 // pred_check
          %p253 = pneg %p120
        $region34: #{vgg16_forward.7} parent=23 // pred_check_branch
          %255 = sbr.rel (%p253) target = $region36
        $region35: #{vgg16_forward.7} parent=23 // pred_region
          %s256 = smul.u32 %s22, 4
          %s257 = sadd.s32 %s256, 4
          %p258 = scmp.lt.s32.totalorder %s257, 7
          %s259 = scalar_select %p258, %s257, 7
          %p260 = scmp.lt.s32.totalorder %s21, 1
          %s261 = scalar_select %p260, %s21, 1
          %p262 = scmp.lt.s32.totalorder %s259, 7
          %s263 = scalar_select %p262, %s259, 7
          %s264 = smul.addr %s261, 8
          %s265 = sadd.s32 %s263, %s264
          %s266 = smul.addr %s265, 4
          %s267 = scalar_lea.vmem %s2, %s266
          %s268 = smul.u32 %s22, 4
          %s269 = sadd.s32 %s268, 4
          %p270 = scmp.lt.s32.totalorder %s269, 7
          %s271 = scalar_select %p270, %s269, 7
        $region36: #{vgg16_forward.7} parent=23 // pred_fallthru
          _
      $region24: #{vgg16_forward.7} parent=5 // pred_fallthru
        _
      %p272 = scmp.le.s32.totalorder 1, %s14
      %p273 = scmp.lt.s32.totalorder %s14, 5
      %p274 = pnand %p272, %p273
      %p275 = pneg %p274
      // Predicated region
      $region37: #{vgg16_forward.7} parent=5 // pred_check
        _
      $region38: #{vgg16_forward.7} parent=5 // pred_check_branch
        %277 = sbr.rel (%p274) target = $region40
      $region39: #{vgg16_forward.7} parent=5 // pred_region
        %s278 = ssub.s32 %s14, 1
        %s279 = smul.u32 4, %s24
        %p280 = scmp.lt.s32.totalorder %s23, 1
        %s281 = scalar_select %p280, %s23, 1
        %p282 = scmp.lt.s32.totalorder %s279, 7
        %s283 = scalar_select %p282, %s279, 7
        %s284 = smul.addr %s281, 8
        %s285 = sadd.s32 %s283, %s284
        %s286 = smul.addr %s285, 4
        %s287 = scalar_lea.vmem %s0, %s286
        %p288 = pneg %p54
        %p289 = pneg %p51
        %s290 = smul.u32 %s24, 4
        %s291 = ssub.s32 %s290, 1
        %p292 = scmp.gt.s32.totalorder %s291, 0
        %s293 = scalar_select %p292, %s291, 0
        %p294 = scmp.lt.s32.totalorder %s23, 1
        %s295 = scalar_select %p294, %s23, 1
        %p296 = scmp.lt.s32.totalorder %s293, 7
        %s297 = scalar_select %p296, %s293, 7
        %s298 = smul.addr %s295, 8
        %s299 = sadd.s32 %s297, %s298
        %s300 = smul.addr %s299, 4
        %s301 = scalar_lea.vmem %s1, %s300
        %p302 = pneg %p90
        %p303 = pneg %p87
        %s304 = smul.u32 %s24, 4
        %s305 = sadd.s32 %s304, 4
        %p306 = scmp.lt.s32.totalorder %s305, 7
        %s307 = scalar_select %p306, %s305, 7
        %p308 = scmp.lt.s32.totalorder %s23, 1
        %s309 = scalar_select %p308, %s23, 1
        %p310 = scmp.lt.s32.totalorder %s307, 7
        %s311 = scalar_select %p310, %s307, 7
        %s312 = smul.addr %s309, 8
        %s313 = sadd.s32 %s311, %s312
        %s314 = smul.addr %s313, 4
        %s315 = scalar_lea.vmem %s2, %s314
        %p316 = pneg %p126
        %p317 = pneg %p123
        %p318 = pneg %p147
        %p319 = pneg %p144
        %p320 = pneg %p168
        %p321 = pneg %p165
        %p322 = pneg %p196
        %p323 = pneg %p193
        %s324 = sand.u32 %s183, 1
        %s325 = scalar_lea.sflag [#allocation3], %s324
        %s326 = sand.u32 %s183, 1
        %s327 = smul.addr %s326, 32
        %s328 = scalar_lea.vmem [#allocation2], %s327
        %s329 = smul.u32 4, %s24
        %p330 = scmp.lt.s32.totalorder %s23, 1
        %s331 = scalar_select %p330, %s23, 1
        %p332 = scmp.lt.s32.totalorder %s329, 7
        %s333 = scalar_select %p332, %s329, 7
        %s334 = smul.addr %s331, 8
        %s335 = sadd.s32 %s333, %s334
        %s336 = smul.addr %s335, 4
        %s337 = scalar_lea.vmem %s0, %s336
        %s338 = smul.u32 4, %s24
        %s339 = smul.u32 %s24, 4
        %s340 = ssub.s32 %s339, 1
        %p341 = scmp.gt.s32.totalorder %s340, 0
        %s342 = scalar_select %p341, %s340, 0
        %p343 = scmp.lt.s32.totalorder %s23, 1
        %s344 = scalar_select %p343, %s23, 1
        %p345 = scmp.lt.s32.totalorder %s342, 7
        %s346 = scalar_select %p345, %s342, 7
        %s347 = smul.addr %s344, 8
        %s348 = sadd.s32 %s346, %s347
        %s349 = smul.addr %s348, 4
        %s350 = scalar_lea.vmem %s1, %s349
        %s351 = smul.u32 %s24, 4
        %s352 = ssub.s32 %s351, 1
        %p353 = scmp.gt.s32.totalorder %s352, 0
        %s354 = scalar_select %p353, %s352, 0
        %s355 = smul.u32 %s24, 4
        %s356 = sadd.s32 %s355, 4
        %p357 = scmp.lt.s32.totalorder %s356, 7
        %s358 = scalar_select %p357, %s356, 7
        %p359 = scmp.lt.s32.totalorder %s23, 1
        %s360 = scalar_select %p359, %s23, 1
        %p361 = scmp.lt.s32.totalorder %s358, 7
        %s362 = scalar_select %p361, %s358, 7
        %s363 = smul.addr %s360, 8
        %s364 = sadd.s32 %s362, %s363
        %s365 = smul.addr %s364, 4
        %s366 = scalar_lea.vmem %s2, %s365
        %s367 = smul.u32 %s24, 4
        %s368 = sadd.s32 %s367, 4
        %p369 = scmp.lt.s32.totalorder %s368, 7
        %s370 = scalar_select %p369, %s368, 7
        %s371 = smul.u32 4, %s24
        %v373 = vld [vmem:[%s350] sm:$0xf]
        %v374 = vld [vmem:[%s366] sm:$0xf]
        %p375 = scmp.eq.s32.totalorder %s24, 0
        %s376 = scalar_select %p375, 1, 0
        %v377 = vstv %s376
        %vm378 = vcmp.eq.s32.totalorder %v377, 1
        %v379 = vsel %vm378, 0, %v373
        %p380 = scmp.eq.s32.totalorder %s24, 1
        %s381 = scalar_select %p380, 1, 0
        %v382 = vstv %s381
        %vm383 = vcmp.eq.s32.totalorder %v382, 1
        %v384 = vsel %vm383, 0, %v374
        %v385 = vld [vmem:[%s337] sm:$0xf]
        %v386 = vld [vmem:[%s337 + $0x4] sm:$0xf]
        %v387 = vld [vmem:[%s337 + $0x8] sm:$0xf]
        %v388 = vld [vmem:[%s337 + $0xc] sm:$0xf]
        %v395 = vunpack.c.l.b16 %v379
        %v396 = vunpack.c.l.b16 %v385
        %v397 = vunpack.c.l.b16 %v386
        %v398 = vunpack.c.l.b16 %v387
        %v399 = vunpack.c.l.b16 %v388
        %v400 = vunpack.c.l.b16 %v384
        %v401 = vpack.c.b16 %v395, %v395
        %v402 = vpack.c.b16 %v396, %v396
        %v403 = vpack.c.b16 %v397, %v397
        %v404 = vpack.c.b16 %v398, %v398
        %v405 = vpack.c.b16 %v399, %v399
        %v406 = vpack.c.b16 %v400, %v400
        %v408 = vshrl.u32 %v401, 16
        %v410 = vrot.slane %v408, 7
        %v411 = vshll.u32 %v401, 16
        %v413 = vor.u32 %v410, %v411
        %v415 = vshrl.u32 %v402, 16
        %v417 = vrot.slane %v415, 7
        %v418 = vshll.u32 %v402, 16
        %v420 = vor.u32 %v417, %v418
        %v422 = vshrl.u32 %v403, 16
        %v424 = vrot.slane %v422, 7
        %v425 = vshll.u32 %v403, 16
        %v427 = vor.u32 %v424, %v425
        %v429 = vshrl.u32 %v404, 16
        %v431 = vrot.slane %v429, 7
        %v432 = vshll.u32 %v404, 16
        %v434 = vor.u32 %v431, %v432
        %v436 = vshrl.u32 %v405, 16
        %v438 = vrot.slane %v436, 7
        %v439 = vshll.u32 %v405, 16
        %v441 = vor.u32 %v438, %v439
        %v443 = vshrl.u32 %v406, 16
        %v445 = vrot.slane %v443, 7
        %v446 = vshll.u32 %v406, 16
        %v448 = vor.u32 %v445, %v446
        %vm455 = vcmask 1040384
        %vm456 = vsmask.f32 256
        %vm457 = vmand %vm455, %vm456
        %v458 = vsel %vm457, 0, %v413
        %v459 = vsel %vm457, 0, %v420
        %v460 = vsel %vm457, 0, %v427
        %v461 = vsel %vm457, 0, %v434
        %v462 = vsel %vm457, 0, %v441
        %v463 = vsel %vm457, 0, %v448
        %vm464 = vcmask 1044480
        %vm465 = vsmask.f32 4352
        %vm466 = vmand %vm464, %vm465
        %v467 = vsel %vm466, %v458, 0
        %v468 = vsel %vm466, %v459, 0
        %v469 = vsel %vm466, %v460, 0
        %v470 = vsel %vm466, %v461, 0
        %v471 = vsel %vm466, %v462, 0
        %v472 = vsel %vm466, %v463, 0
        %v477 = vunpack.c.l.b16 %v467
        %v478 = vunpack.c.h.b16 %v467
        %v479 = vunpack.c.l.b16 %v468
        %v480 = vunpack.c.h.b16 %v468
        %v481 = vunpack.c.l.b16 %v469
        %v482 = vunpack.c.h.b16 %v469
        %v483 = vunpack.c.l.b16 %v470
        %v484 = vunpack.c.h.b16 %v470
        %v485 = vpack.c.b16 %v477, %v477
        %v486 = vpack.c.b16 %v478, %v478
        %v487 = vpack.c.b16 %v479, %v479
        %v488 = vpack.c.b16 %v480, %v480
        %v489 = vpack.c.b16 %v481, %v481
        %v490 = vpack.c.b16 %v482, %v482
        %v491 = vpack.c.b16 %v483, %v483
        %v492 = vpack.c.b16 %v484, %v484
        %vm493 = vsmask.f32 3328
        %vm494 = vsmask.f32 7440
        %vm495 = vmor %vm493, %vm494
        %v497 = vshrl.u32 %v485, 16
        %v499 = vrot.slane %v497, 4
        %v500 = vshll.u32 %v485, 16
        %v502 = vrot.slane %v500, 5
        %v503 = vor.u32 %v499, %v502
        %v504 = vrot.slane %v503, 4
        %v506 = vshll.u32 %v486, 16
        %v508 = vrot.slane %v506, 5
        %v509 = vsel %vm495, %v504, %v508
        %v511 = vshrl.u32 %v487, 16
        %v513 = vrot.slane %v511, 4
        %v514 = vshll.u32 %v487, 16
        %v516 = vrot.slane %v514, 5
        %v517 = vor.u32 %v513, %v516
        %v518 = vrot.slane %v517, 4
        %v520 = vshll.u32 %v488, 16
        %v522 = vrot.slane %v520, 5
        %v523 = vsel %vm495, %v518, %v522
        %v525 = vshrl.u32 %v489, 16
        %v527 = vrot.slane %v525, 4
        %v528 = vshll.u32 %v489, 16
        %v530 = vrot.slane %v528, 5
        %v531 = vor.u32 %v527, %v530
        %v532 = vrot.slane %v531, 4
        %v534 = vshll.u32 %v490, 16
        %v536 = vrot.slane %v534, 5
        %v537 = vsel %vm495, %v532, %v536
        %v539 = vshrl.u32 %v491, 16
        %v541 = vrot.slane %v539, 4
        %v542 = vshll.u32 %v491, 16
        %v544 = vrot.slane %v542, 5
        %v545 = vor.u32 %v541, %v544
        %v546 = vrot.slane %v545, 4
        %v548 = vshll.u32 %v492, 16
        %v550 = vrot.slane %v548, 5
        %v551 = vsel %vm495, %v546, %v550
        %vm552 = vcmask 1042432
        %vm553 = vcmask 1046532
        %vm554 = vmor %vm552, %vm553
        %v555 = vrot.slane %v485, 5
        %v556 = vrot.slane %v555, 4
        %v557 = vrot.slane %v486, 5
        %v558 = vsel %vm554, %v556, %v557
        %v559 = vrot.slane %v487, 5
        %v560 = vrot.slane %v559, 4
        %v561 = vrot.slane %v488, 5
        %v562 = vsel %vm554, %v560, %v561
        %v563 = vrot.slane %v489, 5
        %v564 = vrot.slane %v563, 4
        %v565 = vrot.slane %v490, 5
        %v566 = vsel %vm554, %v564, %v565
        %v567 = vrot.slane %v491, 5
        %v568 = vrot.slane %v567, 4
        %v569 = vrot.slane %v492, 5
        %v570 = vsel %vm554, %v568, %v569
        %v572 = vunpack.c.l.b16 %v471
        %v573 = vunpack.c.h.b16 %v471
        %v574 = vpack.c.b16 %v572, %v572
        %v575 = vpack.c.b16 %v573, %v573
        %v577 = vshrl.u32 %v574, 16
        %v579 = vrot.slane %v577, 4
        %v580 = vshll.u32 %v574, 16
        %v582 = vrot.slane %v580, 5
        %v583 = vor.u32 %v579, %v582
        %v584 = vrot.slane %v583, 4
        %v586 = vshll.u32 %v575, 16
        %v588 = vrot.slane %v586, 5
        %v589 = vsel %vm495, %v584, %v588
        %v590 = vrot.slane %v574, 5
        %v591 = vrot.slane %v590, 4
        %v592 = vrot.slane %v575, 5
        %v593 = vsel %vm554, %v591, %v592
        %v595 = vunpack.c.l.b16 %v472
        %v596 = vunpack.c.h.b16 %v472
        %v597 = vpack.c.b16 %v595, %v595
        %v598 = vpack.c.b16 %v596, %v596
        %v600 = vshrl.u32 %v597, 16
        %v602 = vrot.slane %v600, 4
        %v603 = vshll.u32 %v597, 16
        %v605 = vrot.slane %v603, 5
        %v606 = vor.u32 %v602, %v605
        %v607 = vrot.slane %v606, 4
        %v609 = vshll.u32 %v598, 16
        %v611 = vrot.slane %v609, 5
        %v612 = vsel %vm495, %v607, %v611
        %v613 = vrot.slane %v597, 5
        %v614 = vrot.slane %v613, 4
        %v615 = vrot.slane %v598, 5
        %v616 = vsel %vm554, %v614, %v615
        %v617 = vpack.c.b16 %v479, %v477
        %v618 = vpack.c.b16 %v483, %v481
        %v621 = vunpack.c.l.b16 %v509
        %v622 = vunpack.c.l.b16 %v523
        %v623 = vunpack.c.l.b16 %v537
        %v624 = vunpack.c.l.b16 %v551
        %v625 = vpack.c.b16 %v622, %v621
        %v626 = vpack.c.b16 %v624, %v623
        %v629 = vunpack.c.l.b16 %v558
        %v630 = vunpack.c.l.b16 %v562
        %v631 = vunpack.c.l.b16 %v566
        %v632 = vunpack.c.l.b16 %v570
        %v633 = vpack.c.b16 %v630, %v629
        %v634 = vpack.c.b16 %v632, %v631
        %v637 = vpack.c.b16 %v481, %v479
        %v638 = vpack.c.b16 %v572, %v483
        %v641 = vunpack.c.l.b16 %v589
        %v642 = vpack.c.b16 %v623, %v622
        %v643 = vpack.c.b16 %v641, %v624
        %v646 = vunpack.c.l.b16 %v593
        %v647 = vpack.c.b16 %v631, %v630
        %v648 = vpack.c.b16 %v646, %v632
        %v651 = vpack.c.b16 %v595, %v572
        %v653 = vunpack.c.l.b16 %v612
        %v654 = vpack.c.b16 %v653, %v641
        %v656 = vunpack.c.l.b16 %v616
        %v657 = vpack.c.b16 %v656, %v646
        %v659 = vld [vmem:[%s3] sm:$0xf]
        %v660 = vld [vmem:[%s3 + $0x4] sm:$0xf]
        %v661 = vld [vmem:[%s3 + $0x8] sm:$0xf]
        %v662 = vld [vmem:[%s3 + $0xc] sm:$0xf]
        %v663 = vld [vmem:[%s3 + $0x10] sm:$0xf]
        %v664 = vld [vmem:[%s3 + $0x14] sm:$0xf]
        %v665 = vld [vmem:[%s3 + $0x18] sm:$0xf]
        %v666 = vld [vmem:[%s3 + $0x1c] sm:$0xf]
        %v667 = vld [vmem:[%s3 + $0x20] sm:$0xf]
        %v668 = vld [vmem:[%s3 + $0x24] sm:$0xf]
        %v669 = vld [vmem:[%s3 + $0x28] sm:$0xf]
        %v670 = vld [vmem:[%s3 + $0x2c] sm:$0xf]
        %v671 = vld [vmem:[%s3 + $0x30] sm:$0xf]
        %v672 = vld [vmem:[%s3 + $0x34] sm:$0xf]
        %v673 = vld [vmem:[%s3 + $0x38] sm:$0xf]
        %v674 = vld [vmem:[%s3 + $0x3c] sm:$0xf]
        %v675 = vld [vmem:[%s3 + $0x40] sm:$0xf]
        %v676 = vld [vmem:[%s3 + $0x44] sm:$0xf]
        %v677 = vld [vmem:[%s3 + $0x48] sm:$0xf]
        %v678 = vld [vmem:[%s3 + $0x4c] sm:$0xf]
        %v679 = vld [vmem:[%s3 + $0x50] sm:$0xf]
        %v680 = vld [vmem:[%s3 + $0x54] sm:$0xf]
        %v681 = vld [vmem:[%s3 + $0x58] sm:$0xf]
        %v682 = vld [vmem:[%s3 + $0x5c] sm:$0xf]
        %v683 = vld [vmem:[%s3 + $0x60] sm:$0xf]
        %v684 = vld [vmem:[%s3 + $0x64] sm:$0xf]
        %v685 = vld [vmem:[%s3 + $0x68] sm:$0xf]
        %v686 = vld [vmem:[%s3 + $0x6c] sm:$0xf]
        %v687 = vld [vmem:[%s3 + $0x70] sm:$0xf]
        %v688 = vld [vmem:[%s3 + $0x74] sm:$0xf]
        %v689 = vld [vmem:[%s3 + $0x78] sm:$0xf]
        %v690 = vld [vmem:[%s3 + $0x7c] sm:$0xf]
        %v691 = vld [vmem:[%s3 + $0x80] sm:$0xf]
        %v692 = vld [vmem:[%s3 + $0x84] sm:$0xf]
        %v693 = vld [vmem:[%s3 + $0x88] sm:$0xf]
        %v694 = vld [vmem:[%s3 + $0x8c] sm:$0xf]
        %v695 = vld [vmem:[%s3 + $0x90] sm:$0xf]
        %v696 = vld [vmem:[%s3 + $0x94] sm:$0xf]
        %v697 = vld [vmem:[%s3 + $0x98] sm:$0xf]
        %v698 = vld [vmem:[%s3 + $0x9c] sm:$0xf]
        %v699 = vld [vmem:[%s3 + $0xa0] sm:$0xf]
        %v700 = vld [vmem:[%s3 + $0xa4] sm:$0xf]
        %v701 = vld [vmem:[%s3 + $0xa8] sm:$0xf]
        %v702 = vld [vmem:[%s3 + $0xac] sm:$0xf]
        %v703 = vld [vmem:[%s3 + $0xb0] sm:$0xf]
        %v704 = vld [vmem:[%s3 + $0xb4] sm:$0xf]
        %v705 = vld [vmem:[%s3 + $0xb8] sm:$0xf]
        %v706 = vld [vmem:[%s3 + $0xbc] sm:$0xf]
        %v707 = vld [vmem:[%s3 + $0xc0] sm:$0xf]
        %v708 = vld [vmem:[%s3 + $0xc4] sm:$0xf]
        %v709 = vld [vmem:[%s3 + $0xc8] sm:$0xf]
        %v710 = vld [vmem:[%s3 + $0xcc] sm:$0xf]
        %v711 = vld [vmem:[%s3 + $0xd0] sm:$0xf]
        %v712 = vld [vmem:[%s3 + $0xd4] sm:$0xf]
        %v713 = vld [vmem:[%s3 + $0xd8] sm:$0xf]
        %v714 = vld [vmem:[%s3 + $0xdc] sm:$0xf]
        %v715 = vld [vmem:[%s3 + $0xe0] sm:$0xf]
        %v716 = vld [vmem:[%s3 + $0xe4] sm:$0xf]
        %v717 = vld [vmem:[%s3 + $0xe8] sm:$0xf]
        %v718 = vld [vmem:[%s3 + $0xec] sm:$0xf]
        %v719 = vld [vmem:[%s3 + $0xf0] sm:$0xf]
        %v720 = vld [vmem:[%s3 + $0xf4] sm:$0xf]
        %v721 = vld [vmem:[%s3 + $0xf8] sm:$0xf]
        %v722 = vld [vmem:[%s3 + $0xfc] sm:$0xf]
        %v723 = vld [vmem:[%s3 + $0x100] sm:$0xf]
        %v724 = vld [vmem:[%s3 + $0x104] sm:$0xf]
        %v725 = vld [vmem:[%s3 + $0x108] sm:$0xf]
        %v726 = vld [vmem:[%s3 + $0x10c] sm:$0xf]
        %v727 = vld [vmem:[%s3 + $0x110] sm:$0xf]
        %v728 = vld [vmem:[%s3 + $0x114] sm:$0xf]
        %v729 = vld [vmem:[%s3 + $0x118] sm:$0xf]
        %v730 = vld [vmem:[%s3 + $0x11c] sm:$0xf]
        %v731 = vld [vmem:[%s3 + $0x120] sm:$0xf]
        %v732 = vld [vmem:[%s3 + $0x124] sm:$0xf]
        %v733 = vld [vmem:[%s3 + $0x128] sm:$0xf]
        %v734 = vld [vmem:[%s3 + $0x12c] sm:$0xf]
        %v735 = vld [vmem:[%s3 + $0x130] sm:$0xf]
        %v736 = vld [vmem:[%s3 + $0x134] sm:$0xf]
        %v737 = vld [vmem:[%s3 + $0x138] sm:$0xf]
        %v738 = vld [vmem:[%s3 + $0x13c] sm:$0xf]
        %v739 = vld [vmem:[%s3 + $0x140] sm:$0xf]
        %v740 = vld [vmem:[%s3 + $0x144] sm:$0xf]
        %v741 = vld [vmem:[%s3 + $0x148] sm:$0xf]
        %v742 = vld [vmem:[%s3 + $0x14c] sm:$0xf]
        %v743 = vld [vmem:[%s3 + $0x150] sm:$0xf]
        %v744 = vld [vmem:[%s3 + $0x154] sm:$0xf]
        %v745 = vld [vmem:[%s3 + $0x158] sm:$0xf]
        %v746 = vld [vmem:[%s3 + $0x15c] sm:$0xf]
        %v747 = vld [vmem:[%s3 + $0x160] sm:$0xf]
        %v748 = vld [vmem:[%s3 + $0x164] sm:$0xf]
        %v749 = vld [vmem:[%s3 + $0x168] sm:$0xf]
        %v750 = vld [vmem:[%s3 + $0x16c] sm:$0xf]
        %v751 = vld [vmem:[%s3 + $0x170] sm:$0xf]
        %v752 = vld [vmem:[%s3 + $0x174] sm:$0xf]
        %v753 = vld [vmem:[%s3 + $0x178] sm:$0xf]
        %v754 = vld [vmem:[%s3 + $0x17c] sm:$0xf]
        %v755 = vld [vmem:[%s3 + $0x180] sm:$0xf]
        %v756 = vld [vmem:[%s3 + $0x184] sm:$0xf]
        %v757 = vld [vmem:[%s3 + $0x188] sm:$0xf]
        %v758 = vld [vmem:[%s3 + $0x18c] sm:$0xf]
        %v759 = vld [vmem:[%s3 + $0x190] sm:$0xf]
        %v760 = vld [vmem:[%s3 + $0x194] sm:$0xf]
        %v761 = vld [vmem:[%s3 + $0x198] sm:$0xf]
        %v762 = vld [vmem:[%s3 + $0x19c] sm:$0xf]
        %v763 = vld [vmem:[%s3 + $0x1a0] sm:$0xf]
        %v764 = vld [vmem:[%s3 + $0x1a4] sm:$0xf]
        %v765 = vld [vmem:[%s3 + $0x1a8] sm:$0xf]
        %v766 = vld [vmem:[%s3 + $0x1ac] sm:$0xf]
        %v767 = vld [vmem:[%s3 + $0x1b0] sm:$0xf]
        %v768 = vld [vmem:[%s3 + $0x1b4] sm:$0xf]
        %v769 = vld [vmem:[%s3 + $0x1b8] sm:$0xf]
        %v770 = vld [vmem:[%s3 + $0x1bc] sm:$0xf]
        %v771 = vld [vmem:[%s3 + $0x1c0] sm:$0xf]
        %v772 = vld [vmem:[%s3 + $0x1c4] sm:$0xf]
        %v773 = vld [vmem:[%s3 + $0x1c8] sm:$0xf]
        %v774 = vld [vmem:[%s3 + $0x1cc] sm:$0xf]
        %v775 = vld [vmem:[%s3 + $0x1d0] sm:$0xf]
        %v776 = vld [vmem:[%s3 + $0x1d4] sm:$0xf]
        %v777 = vld [vmem:[%s3 + $0x1d8] sm:$0xf]
        %v778 = vld [vmem:[%s3 + $0x1dc] sm:$0xf]
        %v779 = vld [vmem:[%s3 + $0x1e0] sm:$0xf]
        %v780 = vld [vmem:[%s3 + $0x1e4] sm:$0xf]
        %v781 = vld [vmem:[%s3 + $0x1e8] sm:$0xf]
        %v782 = vld [vmem:[%s3 + $0x1ec] sm:$0xf]
        %v783 = vld [vmem:[%s3 + $0x1f0] sm:$0xf]
        %v784 = vld [vmem:[%s3 + $0x1f4] sm:$0xf]
        %v785 = vld [vmem:[%s3 + $0x1f8] sm:$0xf]
        %v786 = vld [vmem:[%s3 + $0x1fc] sm:$0xf]
        %v787 = vld [vmem:[%s3 + $0x200] sm:$0xf]
        %v788 = vld [vmem:[%s3 + $0x204] sm:$0xf]
        %v789 = vld [vmem:[%s3 + $0x208] sm:$0xf]
        %v790 = vld [vmem:[%s3 + $0x20c] sm:$0xf]
        %v791 = vld [vmem:[%s3 + $0x210] sm:$0xf]
        %v792 = vld [vmem:[%s3 + $0x214] sm:$0xf]
        %v793 = vld [vmem:[%s3 + $0x218] sm:$0xf]
        %v794 = vld [vmem:[%s3 + $0x21c] sm:$0xf]
        %v795 = vld [vmem:[%s3 + $0x220] sm:$0xf]
        %v796 = vld [vmem:[%s3 + $0x224] sm:$0xf]
        %v797 = vld [vmem:[%s3 + $0x228] sm:$0xf]
        %v798 = vld [vmem:[%s3 + $0x22c] sm:$0xf]
        %v799 = vld [vmem:[%s3 + $0x230] sm:$0xf]
        %v800 = vld [vmem:[%s3 + $0x234] sm:$0xf]
        %v801 = vld [vmem:[%s3 + $0x238] sm:$0xf]
        %v802 = vld [vmem:[%s3 + $0x23c] sm:$0xf]
        %v803 = vld [vmem:[%s4] sm:$0x1]
        %v805 = vperm.slane %v803, 0
        %v951 = vunpack.c.l.b16 %v659
        %v952 = vunpack.c.l.b16 %v660
        %v953 = vunpack.c.l.b16 %v661
        %v954 = vunpack.c.l.b16 %v662
        %v955 = vunpack.c.l.b16 %v663
        %v956 = vunpack.c.l.b16 %v664
        %v957 = vunpack.c.l.b16 %v665
        %v958 = vunpack.c.l.b16 %v666
        %v959 = vunpack.c.l.b16 %v667
        %v960 = vunpack.c.l.b16 %v668
        %v961 = vunpack.c.l.b16 %v669
        %v962 = vunpack.c.l.b16 %v670
        %v963 = vunpack.c.l.b16 %v671
        %v964 = vunpack.c.l.b16 %v672
        %v965 = vunpack.c.l.b16 %v673
        %v966 = vunpack.c.l.b16 %v674
        %v967 = vunpack.c.l.b16 %v675
        %v968 = vunpack.c.l.b16 %v676
        %v969 = vunpack.c.l.b16 %v677
        %v970 = vunpack.c.l.b16 %v678
        %v971 = vunpack.c.l.b16 %v679
        %v972 = vunpack.c.l.b16 %v680
        %v973 = vunpack.c.l.b16 %v681
        %v974 = vunpack.c.l.b16 %v682
        %v975 = vunpack.c.l.b16 %v683
        %v976 = vunpack.c.l.b16 %v684
        %v977 = vunpack.c.l.b16 %v685
        %v978 = vunpack.c.l.b16 %v686
        %v979 = vunpack.c.l.b16 %v687
        %v980 = vunpack.c.l.b16 %v688
        %v981 = vunpack.c.l.b16 %v689
        %v982 = vunpack.c.l.b16 %v690
        %v983 = vunpack.c.l.b16 %v691
        %v984 = vunpack.c.l.b16 %v692
        %v985 = vunpack.c.l.b16 %v693
        %v986 = vunpack.c.l.b16 %v694
        %v987 = vunpack.c.l.b16 %v695
        %v988 = vunpack.c.l.b16 %v696
        %v989 = vunpack.c.l.b16 %v697
        %v990 = vunpack.c.l.b16 %v698
        %v991 = vunpack.c.l.b16 %v699
        %v992 = vunpack.c.l.b16 %v700
        %v993 = vunpack.c.l.b16 %v701
        %v994 = vunpack.c.l.b16 %v702
        %v995 = vunpack.c.l.b16 %v703
        %v996 = vunpack.c.l.b16 %v704
        %v997 = vunpack.c.l.b16 %v705
        %v998 = vunpack.c.l.b16 %v706
        %v999 = vunpack.c.l.b16 %v707
        %v1000 = vunpack.c.l.b16 %v708
        %v1001 = vunpack.c.l.b16 %v709
        %v1002 = vunpack.c.l.b16 %v710
        %v1003 = vunpack.c.l.b16 %v711
        %v1004 = vunpack.c.l.b16 %v712
        %v1005 = vunpack.c.l.b16 %v713
        %v1006 = vunpack.c.l.b16 %v714
        %v1007 = vunpack.c.l.b16 %v715
        %v1008 = vunpack.c.l.b16 %v716
        %v1009 = vunpack.c.l.b16 %v717
        %v1010 = vunpack.c.l.b16 %v718
        %v1011 = vunpack.c.l.b16 %v719
        %v1012 = vunpack.c.l.b16 %v720
        %v1013 = vunpack.c.l.b16 %v721
        %v1014 = vunpack.c.l.b16 %v722
        %v1015 = vunpack.c.l.b16 %v723
        %v1016 = vunpack.c.l.b16 %v724
        %v1017 = vunpack.c.l.b16 %v725
        %v1018 = vunpack.c.l.b16 %v726
        %v1019 = vunpack.c.l.b16 %v727
        %v1020 = vunpack.c.l.b16 %v728
        %v1021 = vunpack.c.l.b16 %v729
        %v1022 = vunpack.c.l.b16 %v730
        %v1023 = vunpack.c.l.b16 %v731
        %v1024 = vunpack.c.l.b16 %v732
        %v1025 = vunpack.c.l.b16 %v733
        %v1026 = vunpack.c.l.b16 %v734
        %v1027 = vunpack.c.l.b16 %v735
        %v1028 = vunpack.c.l.b16 %v736
        %v1029 = vunpack.c.l.b16 %v737
        %v1030 = vunpack.c.l.b16 %v738
        %v1031 = vunpack.c.l.b16 %v739
        %v1032 = vunpack.c.l.b16 %v740
        %v1033 = vunpack.c.l.b16 %v741
        %v1034 = vunpack.c.l.b16 %v742
        %v1035 = vunpack.c.l.b16 %v743
        %v1036 = vunpack.c.l.b16 %v744
        %v1037 = vunpack.c.l.b16 %v745
        %v1038 = vunpack.c.l.b16 %v746
        %v1039 = vunpack.c.l.b16 %v747
        %v1040 = vunpack.c.l.b16 %v748
        %v1041 = vunpack.c.l.b16 %v749
        %v1042 = vunpack.c.l.b16 %v750
        %v1043 = vunpack.c.l.b16 %v751
        %v1044 = vunpack.c.l.b16 %v752
        %v1045 = vunpack.c.l.b16 %v753
        %v1046 = vunpack.c.l.b16 %v754
        %v1047 = vunpack.c.l.b16 %v755
        %v1048 = vunpack.c.l.b16 %v756
        %v1049 = vunpack.c.l.b16 %v757
        %v1050 = vunpack.c.l.b16 %v758
        %v1051 = vunpack.c.l.b16 %v759
        %v1052 = vunpack.c.l.b16 %v760
        %v1053 = vunpack.c.l.b16 %v761
        %v1054 = vunpack.c.l.b16 %v762
        %v1055 = vunpack.c.l.b16 %v763
        %v1056 = vunpack.c.l.b16 %v764
        %v1057 = vunpack.c.l.b16 %v765
        %v1058 = vunpack.c.l.b16 %v766
        %v1059 = vunpack.c.l.b16 %v767
        %v1060 = vunpack.c.l.b16 %v768
        %v1061 = vunpack.c.l.b16 %v769
        %v1062 = vunpack.c.l.b16 %v770
        %v1063 = vunpack.c.l.b16 %v771
        %v1064 = vunpack.c.l.b16 %v772
        %v1065 = vunpack.c.l.b16 %v773
        %v1066 = vunpack.c.l.b16 %v774
        %v1067 = vunpack.c.l.b16 %v775
        %v1068 = vunpack.c.l.b16 %v776
        %v1069 = vunpack.c.l.b16 %v777
        %v1070 = vunpack.c.l.b16 %v778
        %v1071 = vunpack.c.l.b16 %v779
        %v1072 = vunpack.c.l.b16 %v780
        %v1073 = vunpack.c.l.b16 %v781
        %v1074 = vunpack.c.l.b16 %v782
        %v1075 = vunpack.c.l.b16 %v783
        %v1076 = vunpack.c.l.b16 %v784
        %v1077 = vunpack.c.l.b16 %v785
        %v1078 = vunpack.c.l.b16 %v786
        %v1079 = vunpack.c.l.b16 %v787
        %v1080 = vunpack.c.l.b16 %v788
        %v1081 = vunpack.c.l.b16 %v789
        %v1082 = vunpack.c.l.b16 %v790
        %v1083 = vunpack.c.l.b16 %v791
        %v1084 = vunpack.c.l.b16 %v792
        %v1085 = vunpack.c.l.b16 %v793
        %v1086 = vunpack.c.l.b16 %v794
        %v1087 = vunpack.c.l.b16 %v795
        %v1088 = vunpack.c.l.b16 %v796
        %v1089 = vunpack.c.l.b16 %v797
        %v1090 = vunpack.c.l.b16 %v798
        %v1091 = vunpack.c.l.b16 %v799
        %v1092 = vunpack.c.l.b16 %v800
        %v1093 = vunpack.c.l.b16 %v801
        %v1094 = vunpack.c.l.b16 %v802
        %v1095 = vpack.c.b16 %v952, %v951
        %v1096 = vpack.c.b16 %v954, %v953
        %v1097 = vpack.c.b16 %v956, %v955
        %v1098 = vpack.c.b16 %v958, %v957
        %v1099 = vpack.c.b16 %v960, %v959
        %v1100 = vpack.c.b16 %v962, %v961
        %v1101 = vpack.c.b16 %v964, %v963
        %v1102 = vpack.c.b16 %v966, %v965
        %v1103 = vpack.c.b16 %v968, %v967
        %v1104 = vpack.c.b16 %v970, %v969
        %v1105 = vpack.c.b16 %v972, %v971
        %v1106 = vpack.c.b16 %v974, %v973
        %v1107 = vpack.c.b16 %v976, %v975
        %v1108 = vpack.c.b16 %v978, %v977
        %v1109 = vpack.c.b16 %v980, %v979
        %v1110 = vpack.c.b16 %v982, %v981
        %v1111 = vpack.c.b16 %v984, %v983
        %v1112 = vpack.c.b16 %v986, %v985
        %v1113 = vpack.c.b16 %v988, %v987
        %v1114 = vpack.c.b16 %v990, %v989
        %v1115 = vpack.c.b16 %v992, %v991
        %v1116 = vpack.c.b16 %v994, %v993
        %v1117 = vpack.c.b16 %v996, %v995
        %v1118 = vpack.c.b16 %v998, %v997
        %v1119 = vpack.c.b16 %v1000, %v999
        %v1120 = vpack.c.b16 %v1002, %v1001
        %v1121 = vpack.c.b16 %v1004, %v1003
        %v1122 = vpack.c.b16 %v1006, %v1005
        %v1123 = vpack.c.b16 %v1008, %v1007
        %v1124 = vpack.c.b16 %v1010, %v1009
        %v1125 = vpack.c.b16 %v1012, %v1011
        %v1126 = vpack.c.b16 %v1014, %v1013
        %v1127 = vpack.c.b16 %v1016, %v1015
        %v1128 = vpack.c.b16 %v1018, %v1017
        %v1129 = vpack.c.b16 %v1020, %v1019
        %v1130 = vpack.c.b16 %v1022, %v1021
        %v1131 = vpack.c.b16 %v1024, %v1023
        %v1132 = vpack.c.b16 %v1026, %v1025
        %v1133 = vpack.c.b16 %v1028, %v1027
        %v1134 = vpack.c.b16 %v1030, %v1029
        %v1135 = vpack.c.b16 %v1032, %v1031
        %v1136 = vpack.c.b16 %v1034, %v1033
        %v1137 = vpack.c.b16 %v1036, %v1035
        %v1138 = vpack.c.b16 %v1038, %v1037
        %v1139 = vpack.c.b16 %v1040, %v1039
        %v1140 = vpack.c.b16 %v1042, %v1041
        %v1141 = vpack.c.b16 %v1044, %v1043
        %v1142 = vpack.c.b16 %v1046, %v1045
        %v1143 = vpack.c.b16 %v1048, %v1047
        %v1144 = vpack.c.b16 %v1050, %v1049
        %v1145 = vpack.c.b16 %v1052, %v1051
        %v1146 = vpack.c.b16 %v1054, %v1053
        %v1147 = vpack.c.b16 %v1056, %v1055
        %v1148 = vpack.c.b16 %v1058, %v1057
        %v1149 = vpack.c.b16 %v1060, %v1059
        %v1150 = vpack.c.b16 %v1062, %v1061
        %v1151 = vpack.c.b16 %v1064, %v1063
        %v1152 = vpack.c.b16 %v1066, %v1065
        %v1153 = vpack.c.b16 %v1068, %v1067
        %v1154 = vpack.c.b16 %v1070, %v1069
        %v1155 = vpack.c.b16 %v1072, %v1071
        %v1156 = vpack.c.b16 %v1074, %v1073
        %v1157 = vpack.c.b16 %v1076, %v1075
        %v1158 = vpack.c.b16 %v1078, %v1077
        %v1159 = vpack.c.b16 %v1080, %v1079
        %v1160 = vpack.c.b16 %v1082, %v1081
        %v1161 = vpack.c.b16 %v1084, %v1083
        %v1162 = vpack.c.b16 %v1086, %v1085
        %v1163 = vpack.c.b16 %v1088, %v1087
        %v1164 = vpack.c.b16 %v1090, %v1089
        %v1165 = vpack.c.b16 %v1092, %v1091
        %v1166 = vpack.c.b16 %v1094, %v1093
        %1239 = vmatpush.bf16.msra.mxu0 %v1102
        %1240 = vmatpush.bf16.msra.mxu0 %v1101
        %1241 = vmatpush.bf16.msra.mxu0 %v1100
        %1242 = vmatpush.bf16.msra.mxu0 %v1099
        %1243 = vmatpush.bf16.msra.mxu0 %v1098
        %1244 = vmatpush.bf16.msra.mxu0 %v1097
        %1245 = vmatpush.bf16.msra.mxu0 %v1096
        %1246 = vmatpush.bf16.msra.mxu0 %v1095
        %1247 = vmatmul.bf16.gmra.mxu0 %v617
        %v1248 = vpop.f32.mrf.mxu0
        %v1249 = vadd.f32 %v805, %v1248
        %v1250 = vpop.f32.mrf.mxu0
        %v1251 = vadd.f32 %v805, %v1250
        %1252 = vmatmul.bf16.gmra.mxu0 %v618
        %v1253 = vpop.f32.mrf.mxu0
        %v1254 = vadd.f32 %v805, %v1253
        %v1255 = vpop.f32.mrf.mxu0
        %v1256 = vadd.f32 %v805, %v1255
        %1257 = vdwg.mxu0
        %1258 = vmatpush.bf16.msra.mxu0 %v1110
        %1259 = vmatpush.bf16.msra.mxu0 %v1109
        %1260 = vmatpush.bf16.msra.mxu0 %v1108
        %1261 = vmatpush.bf16.msra.mxu0 %v1107
        %1262 = vmatpush.bf16.msra.mxu0 %v1106
        %1263 = vmatpush.bf16.msra.mxu0 %v1105
        %1264 = vmatpush.bf16.msra.mxu0 %v1104
        %1265 = vmatpush.bf16.msra.mxu0 %v1103
        %1266 = vmatmul.bf16.gmra.mxu0 %v625
        %v1267 = vpop.f32.mrf.mxu0
        %v1268 = vadd.f32 %v1249, %v1267
        %v1269 = vpop.f32.mrf.mxu0
        %v1270 = vadd.f32 %v1251, %v1269
        %1271 = vmatmul.bf16.gmra.mxu0 %v626
        %v1272 = vpop.f32.mrf.mxu0
        %v1273 = vadd.f32 %v1254, %v1272
        %v1274 = vpop.f32.mrf.mxu0
        %v1275 = vadd.f32 %v1256, %v1274
        %1276 = vdwg.mxu0
        %1277 = vmatpush.bf16.msra.mxu0 %v1118
        %1278 = vmatpush.bf16.msra.mxu0 %v1117
        %1279 = vmatpush.bf16.msra.mxu0 %v1116
        %1280 = vmatpush.bf16.msra.mxu0 %v1115
        %1281 = vmatpush.bf16.msra.mxu0 %v1114
        %1282 = vmatpush.bf16.msra.mxu0 %v1113
        %1283 = vmatpush.bf16.msra.mxu0 %v1112
        %1284 = vmatpush.bf16.msra.mxu0 %v1111
        %1285 = vmatmul.bf16.gmra.mxu0 %v633
        %v1286 = vpop.f32.mrf.mxu0
        %v1287 = vadd.f32 %v1268, %v1286
        %v1288 = vpop.f32.mrf.mxu0
        %v1289 = vadd.f32 %v1270, %v1288
        %1290 = vmatmul.bf16.gmra.mxu0 %v634
        %v1291 = vpop.f32.mrf.mxu0
        %v1292 = vadd.f32 %v1273, %v1291
        %v1293 = vpop.f32.mrf.mxu0
        %v1294 = vadd.f32 %v1275, %v1293
        %1295 = vdwg.mxu0
        %1296 = vmatpush.bf16.msra.mxu0 %v1126
        %1297 = vmatpush.bf16.msra.mxu0 %v1125
        %1298 = vmatpush.bf16.msra.mxu0 %v1124
        %1299 = vmatpush.bf16.msra.mxu0 %v1123
        %1300 = vmatpush.bf16.msra.mxu0 %v1122
        %1301 = vmatpush.bf16.msra.mxu0 %v1121
        %1302 = vmatpush.bf16.msra.mxu0 %v1120
        %1303 = vmatpush.bf16.msra.mxu0 %v1119
        %1304 = vmatmul.bf16.gmra.mxu0 %v637
        %v1305 = vpop.f32.mrf.mxu0
        %v1306 = vadd.f32 %v1287, %v1305
        %v1307 = vpop.f32.mrf.mxu0
        %v1308 = vadd.f32 %v1289, %v1307
        %1309 = vmatmul.bf16.gmra.mxu0 %v638
        %v1310 = vpop.f32.mrf.mxu0
        %v1311 = vadd.f32 %v1292, %v1310
        %v1312 = vpop.f32.mrf.mxu0
        %v1313 = vadd.f32 %v1294, %v1312
        %1314 = vdwg.mxu0
        %1315 = vmatpush.bf16.msra.mxu0 %v1134
        %1316 = vmatpush.bf16.msra.mxu0 %v1133
        %1317 = vmatpush.bf16.msra.mxu0 %v1132
        %1318 = vmatpush.bf16.msra.mxu0 %v1131
        %1319 = vmatpush.bf16.msra.mxu0 %v1130
        %1320 = vmatpush.bf16.msra.mxu0 %v1129
        %1321 = vmatpush.bf16.msra.mxu0 %v1128
        %1322 = vmatpush.bf16.msra.mxu0 %v1127
        %1323 = vmatmul.bf16.gmra.mxu0 %v642
        %v1324 = vpop.f32.mrf.mxu0
        %v1325 = vadd.f32 %v1306, %v1324
        %v1326 = vpop.f32.mrf.mxu0
        %v1327 = vadd.f32 %v1308, %v1326
        %1328 = vmatmul.bf16.gmra.mxu0 %v643
        %v1329 = vpop.f32.mrf.mxu0
        %v1330 = vadd.f32 %v1311, %v1329
        %v1331 = vpop.f32.mrf.mxu0
        %v1332 = vadd.f32 %v1313, %v1331
        %1333 = vdwg.mxu0
        %1334 = vmatpush.bf16.msra.mxu0 %v1142
        %1335 = vmatpush.bf16.msra.mxu0 %v1141
        %1336 = vmatpush.bf16.msra.mxu0 %v1140
        %1337 = vmatpush.bf16.msra.mxu0 %v1139
        %1338 = vmatpush.bf16.msra.mxu0 %v1138
        %1339 = vmatpush.bf16.msra.mxu0 %v1137
        %1340 = vmatpush.bf16.msra.mxu0 %v1136
        %1341 = vmatpush.bf16.msra.mxu0 %v1135
        %1342 = vmatmul.bf16.gmra.mxu0 %v647
        %v1343 = vpop.f32.mrf.mxu0
        %v1344 = vadd.f32 %v1325, %v1343
        %v1345 = vpop.f32.mrf.mxu0
        %v1346 = vadd.f32 %v1327, %v1345
        %1347 = vmatmul.bf16.gmra.mxu0 %v648
        %v1348 = vpop.f32.mrf.mxu0
        %v1349 = vadd.f32 %v1330, %v1348
        %v1350 = vpop.f32.mrf.mxu0
        %v1351 = vadd.f32 %v1332, %v1350
        %1352 = vdwg.mxu0
        %1353 = vmatpush.bf16.msra.mxu0 %v1150
        %1354 = vmatpush.bf16.msra.mxu0 %v1149
        %1355 = vmatpush.bf16.msra.mxu0 %v1148
        %1356 = vmatpush.bf16.msra.mxu0 %v1147
        %1357 = vmatpush.bf16.msra.mxu0 %v1146
        %1358 = vmatpush.bf16.msra.mxu0 %v1145
        %1359 = vmatpush.bf16.msra.mxu0 %v1144
        %1360 = vmatpush.bf16.msra.mxu0 %v1143
        %1361 = vmatmul.bf16.gmra.mxu0 %v618
        %v1362 = vpop.f32.mrf.mxu0
        %v1363 = vadd.f32 %v1344, %v1362
        %v1364 = vpop.f32.mrf.mxu0
        %v1365 = vadd.f32 %v1346, %v1364
        %1366 = vmatmul.bf16.gmra.mxu0 %v651
        %v1367 = vpop.f32.mrf.mxu0
        %v1368 = vadd.f32 %v1349, %v1367
        %v1369 = vpop.f32.mrf.mxu0
        %v1370 = vadd.f32 %v1351, %v1369
        %1371 = vdwg.mxu0
        %1372 = vmatpush.bf16.msra.mxu0 %v1158
        %1373 = vmatpush.bf16.msra.mxu0 %v1157
        %1374 = vmatpush.bf16.msra.mxu0 %v1156
        %1375 = vmatpush.bf16.msra.mxu0 %v1155
        %1376 = vmatpush.bf16.msra.mxu0 %v1154
        %1377 = vmatpush.bf16.msra.mxu0 %v1153
        %1378 = vmatpush.bf16.msra.mxu0 %v1152
        %1379 = vmatpush.bf16.msra.mxu0 %v1151
        %1380 = vmatmul.bf16.gmra.mxu0 %v626
        %v1381 = vpop.f32.mrf.mxu0
        %v1382 = vadd.f32 %v1363, %v1381
        %v1383 = vpop.f32.mrf.mxu0
        %v1384 = vadd.f32 %v1365, %v1383
        %1385 = vmatmul.bf16.gmra.mxu0 %v654
        %v1386 = vpop.f32.mrf.mxu0
        %v1387 = vadd.f32 %v1368, %v1386
        %v1388 = vpop.f32.mrf.mxu0
        %v1389 = vadd.f32 %v1370, %v1388
        %1390 = vdwg.mxu0
        %1391 = vmatpush.bf16.msra.mxu0 %v1166
        %1392 = vmatpush.bf16.msra.mxu0 %v1165
        %1393 = vmatpush.bf16.msra.mxu0 %v1164
        %1394 = vmatpush.bf16.msra.mxu0 %v1163
        %1395 = vmatpush.bf16.msra.mxu0 %v1162
        %1396 = vmatpush.bf16.msra.mxu0 %v1161
        %1397 = vmatpush.bf16.msra.mxu0 %v1160
        %1398 = vmatpush.bf16.msra.mxu0 %v1159
        %1399 = vmatmul.bf16.gmra.mxu0 %v634
        %v1400 = vpop.f32.mrf.mxu0
        %v1401 = vadd.f32 %v1382, %v1400
        %v1402 = vpop.f32.mrf.mxu0
        %v1403 = vadd.f32 %v1384, %v1402
        %1404 = vmatmul.bf16.gmra.mxu0 %v657
        %v1405 = vpop.f32.mrf.mxu0
        %v1406 = vadd.f32 %v1387, %v1405
        %v1407 = vpop.f32.mrf.mxu0
        %v1408 = vadd.f32 %v1389, %v1407
        %1409 = vdwg.mxu0
        %v1410 = vmax.f32 %v1401, 0.0
        %v1411 = vmax.f32 %v1403, 0.0
        %v1412 = vmax.f32 %v1406, 0.0
        %v1413 = vmax.f32 %v1408, 0.0
        %1414 = vst [vmem:[%s328] sm:$0xff] %v1410
        %1415 = vst [vmem:[%s328 + $0x8] sm:$0xff] %v1411
        %1416 = vst [vmem:[%s328 + $0x10] sm:$0xff] %v1412
        %1417 = vst [vmem:[%s328 + $0x18] sm:$0xff] %v1413
        %s1418 = sand.u32 %s183, 1
        %s1419 = scalar_lea.sflag [#allocation3], %s1418
        %s1420 = sand.u32 %s183, 1
        %s1421 = smul.addr %s1420, 32
        %s1422 = scalar_lea.vmem [#allocation2], %s1421
        // Predicated region
        $region41: #{vgg16_forward.7} parent=39 // pred_check
          %p1423 = pneg %p193
        $region42: #{vgg16_forward.7} parent=39 // pred_check_branch
          %1425 = sbr.rel (%p1423) target = $region44
        $region43: #{vgg16_forward.7} parent=39 // pred_region
          %s1426 = smul.u32 4, %s24
          %1428 = vsyncadd %s1419, 0
          %s1429 = smul.addr %s23, 8
          %s1430 = sadd.s32 %s1426, %s1429
          %s1431 = smul.addr %s1430, 8
          %s1432 = scalar_lea.hbm %s5, %s1431
          %s1433 = sshll.u32 %s1422, 4
          %s1434 = int_to_ptr.vmem [resolvable:$true] %s1433
          %s1435 = sshll.u32 %s1432, 4
          %s1436 = int_to_ptr.hbm [resolvable:$true] %s1435
          %1441 = dma.vmem_to_hbm [thread:$0]  %s1434, 512, %s1436, %s1419, 128, 128, 8
        $region44: #{vgg16_forward.7} parent=39 // pred_fallthru
          _
      $region40: #{vgg16_forward.7} parent=5 // pred_fallthru
        _
      %p1442 = scmp.le.s32.totalorder 2, %s14
      // Predicated region
      $region45: #{vgg16_forward.7} parent=5 // pred_check
        %p1443 = pneg %p1442
      $region46: #{vgg16_forward.7} parent=5 // pred_check_branch
        %1445 = sbr.rel (%p1443) target = $region48
      $region47: #{vgg16_forward.7} parent=5 // pred_region
        %s1446 = ssub.s32 %s14, 2
        // Predicated region
        $region49: #{vgg16_forward.7} parent=47 // pred_check
          %p1447 = pneg %p199
        $region50: #{vgg16_forward.7} parent=47 // pred_check_branch
          %1449 = sbr.rel (%p1447) target = $region52
        $region51: #{vgg16_forward.7} parent=47 // pred_region
          %s1450 = sand.u32 %s184, 1
          %s1451 = scalar_lea.sflag [#allocation3], %s1450
          %s1452 = sand.u32 %s184, 1
          %s1453 = smul.addr %s1452, 32
          %s1454 = scalar_lea.vmem [#allocation2], %s1453
          %1456 = dma.done %s1451, 512
        $region52: #{vgg16_forward.7} parent=47 // pred_fallthru
          _
      $region48: #{vgg16_forward.7} parent=5 // pred_fallthru
        _
    $region6: #{vgg16_forward.7} parent=1 // loop_footer
      %s18 = sadd.s32 1, %s14
    $region7: #{vgg16_forward.7} parent=1 // loop_footer_branch
      %13 = sbr.rel target = $region3
    $region8: #{vgg16_forward.7} parent=1 // loop_exit
      _
    %1457 = vsyncpa [#allocation3], 1
    %s1458 = scalar_lea.sflag [#allocation3], 1
    %1459 = vsyncpa %s1458, 1

</llo_original>
